<compile_context>
chip_gen: v7x
topology: tpu7x:2x2x1
jax: 0.10.0
libtpu: 0.0.40
codegen_flags: <defaults>
</compile_context>

<pallas_src>
import numpy as np
import jax
import jax.numpy as jnp
from jax import lax
from jax.experimental import pallas as pl
from jax.experimental.pallas import tpu as pltpu

WINDOW_SIZE = 11
SIGMA = 1.5
CHANNEL = 3
ENHANCE_FACTOR = 0.5
C1 = 0.01 ** 2
C2 = 0.03 ** 2


def _gaussian_1d(window_size, sigma):
    x = np.arange(window_size, dtype=np.float64)
    g = np.exp(-((x - window_size // 2) ** 2) / (2.0 * sigma ** 2))
    g = g / g.sum()
    return tuple(float(v) for v in g)


def _resize_bilinear_align_corners(img, out_h, out_w):
    """F.interpolate(mode='bilinear', align_corners=True) for (N, C, h, w)."""
    n, c, in_h, in_w = img.shape
    if (in_h, in_w) == (out_h, out_w):
        return img

    def coords(out_n, in_n):
        if out_n == 1 or in_n == 1:
            return jnp.zeros((out_n,), jnp.float32)
        return jnp.arange(out_n, dtype=jnp.float32) * ((in_n - 1) / (out_n - 1))

    ys = coords(out_h, in_h)
    xs = coords(out_w, in_w)
    y0 = jnp.floor(ys).astype(jnp.int32)
    x0 = jnp.floor(xs).astype(jnp.int32)
    y1 = jnp.minimum(y0 + 1, in_h - 1)
    x1 = jnp.minimum(x0 + 1, in_w - 1)
    wy = (ys - y0.astype(jnp.float32))[None, None, :, None]
    wx = (xs - x0.astype(jnp.float32))[None, None, None, :]

    a = img[:, :, y0, :][:, :, :, x0]
    b = img[:, :, y0, :][:, :, :, x1]
    cc = img[:, :, y1, :][:, :, :, x0]
    d = img[:, :, y1, :][:, :, :, x1]
    return a * (1 - wy) * (1 - wx) + b * (1 - wy) * wx + cc * wy * (1 - wx) + d * wy * wx


def _band_matrix(W, window_size, w1d):
    """Banded Gaussian matrix B s.t. (row @ B)[j] == zero-padded 1D conv at j."""
    pad = window_size // 2
    i = np.arange(W)[:, None]
    j = np.arange(W)[None, :]
    d = i - j
    taps = np.take(np.asarray(w1d, dtype=np.float64),
                   np.clip(d + pad, 0, window_size - 1))
    B = np.where(np.abs(d) <= pad, taps, 0.0).astype(np.float32)
    return jnp.asarray(B)


def _choose_tile_h(H, max_tile=256):
    """Largest divisor of H that fits a VMEM-friendly tile (v7x has 64 MiB VMEM)."""
    if H <= max_tile:
        return H
    best = 1
    for d in range(8, max_tile + 1, 8):
        if H % d == 0:
            best = d
    if best >= 32:
        return best
    # TODO(synk): pad H / masked tail tile for awkward heights instead of whole-plane fallback.
    return H


def _build_halo(img_f32, tile_h, pad):
    """(N,C,T,2*pad,W): for tile t the pad rows above and below it (zeros at image edges)."""
    N, C, H, W = img_f32.shape
    T = H // tile_h
    t_idx = jnp.arange(T)[:, None]
    top = t_idx * tile_h - pad + jnp.arange(pad)[None, :]       # (T, pad)
    bot = (t_idx + 1) * tile_h + jnp.arange(pad)[None, :]       # (T, pad)
    rows = jnp.concatenate([top, bot], axis=1)                  # (T, 2*pad)
    valid = (rows >= 0) & (rows < H)
    rows_c = jnp.clip(rows, 0, H - 1).reshape(-1)
    halo = img_f32[:, :, rows_c, :].reshape(N, C, T, 2 * pad, W)
    return jnp.where(valid[None, None, :, :, None], halo, 0.0)


def _make_kernel(tile_h, W, window_size, w1d):
    pad = window_size // 2

    def vblur(slab_ref):
        # Vertical Gaussian pass: every tap is a Ref slice at a (static) sublane
        # offset -> plain vector loads, no XLU rotates.
        acc = w1d[0] * slab_ref[0:tile_h, :]
        for u in range(1, window_size):
            acc = acc + w1d[u] * slab_ref[u:u + tile_h, :]
        return acc

    def kernel(x_ref, y_ref, xh_ref, yh_ref, w_ref, b_ref, out_ref,
               sx, sy, sxx, syy, sxy):
        # Assemble vertically-haloed slabs (tile_h + 2*pad rows) in VMEM scratch.
        sx[0:pad, :] = xh_ref[0:pad, :]
        sx[pad:pad + tile_h, :] = x_ref[...].astype(jnp.float32)
        sx[pad + tile_h:pad + tile_h + pad, :] = xh_ref[pad:2 * pad, :]

        sy[0:pad, :] = yh_ref[0:pad, :]
        sy[pad:pad + tile_h, :] = y_ref[...].astype(jnp.float32)
        sy[pad + tile_h:pad + tile_h + pad, :] = yh_ref[pad:2 * pad, :]

        vx = sx[...]
        vy = sy[...]
        sxx[...] = vx * vx
        syy[...] = vy * vy
        sxy[...] = vx * vy

        band = b_ref[...]

        def blur(slab_ref):
            # Horizontal Gaussian pass on the MXU via the banded matrix; the band's
            # zeros implement the +/-pad zero edge padding for free.
            # TODO(synk): for very large W (>~512) chunk the band into ~256-lane blocks
            # instead of a full (W, W) matmul.
            return jnp.dot(vblur(slab_ref), band,
                           preferred_element_type=jnp.float32,
                           precision=jax.lax.Precision.HIGHEST)

        mu1 = blur(sx)
        mu2 = blur(sy)
        e_xx = blur(sxx)
        e_yy = blur(syy)
        e_xy = blur(sxy)

        mu1_sq = mu1 * mu1
        mu2_sq = mu2 * mu2
        mu1_mu2 = mu1 * mu2
        sigma1_sq = e_xx - mu1_sq
        sigma2_sq = e_yy - mu2_sq
        sigma12 = e_xy - mu1_mu2

        num_m = (2.0 * mu1_mu2 + C1) * (2.0 * sigma12 + C2)
        den_m = (mu1_sq + mu2_sq + C1) * (sigma1_sq + sigma2_sq + C2)
        ssim_map = num_m * pl.reciprocal(den_m, approx=True)   # EUP, not VALU divide

        # Per-step partial: sum(ssim_c * weight) over this (n, c, h-tile).
        partial = jnp.sum(ssim_map * w_ref[...])
        out_ref[...] = partial * jnp.ones((1, 128), jnp.float32)  # lane-dense store

    return kernel


def enhance_ssim_loss(x, y, ext_weight, *, window_size=WINDOW_SIZE,
                      channel=CHANNEL, enhance_factor=ENHANCE_FACTOR):
    assert x.shape == y.shape, "Two tensor must have the same shape."
    N, C, H, W = x.shape
    assert C == channel, "Input and gaussian window must have the same channels."
    assert W % ext_weight.shape[-1] == 0, "The size of input and mask must be divisible."

    # glue: optional resize + weight construction (plain JAX, outside the kernel)
    if ext_weight.shape[-2:] != (H, W):
        ext_weight = _resize_bilinear_align_corners(ext_weight, H, W)
    weight2d = (1.0 + enhance_factor * ext_weight)[:, 0, :, :].astype(jnp.float32)  # (N,H,W)

    pad = window_size // 2
    tile_h = _choose_tile_h(H)
    T = H // tile_h

    xf = x.astype(jnp.float32)
    yf = y.astype(jnp.float32)
    xhalo = _build_halo(xf, tile_h, pad)   # (N,C,T,2*pad,W) — only halo rows copied
    yhalo = _build_halo(yf, tile_h, pad)

    w1d = _gaussian_1d(window_size, SIGMA)
    band = _band_matrix(W, window_size, w1d)
    kernel = _make_kernel(tile_h, W, window_size, w1d)

    partials = pl.pallas_call(
        kernel,
        out_shape=jax.ShapeDtypeStruct((N, C, T, 1, 128), jnp.float32),
        grid_spec=pltpu.PrefetchScalarGridSpec(
            num_scalar_prefetch=0,
            # c innermost so the (c-independent) weight tile stays resident across channels.
            grid=(N, T, C),
            in_specs=[
                pl.BlockSpec((None, None, tile_h, W), lambda n, t, c: (n, c, t, 0)),
                pl.BlockSpec((None, None, tile_h, W), lambda n, t, c: (n, c, t, 0)),
                pl.BlockSpec((None, None, None, 2 * pad, W),
                             lambda n, t, c: (n, c, t, 0, 0)),
                pl.BlockSpec((None, None, None, 2 * pad, W),
                             lambda n, t, c: (n, c, t, 0, 0)),
                pl.BlockSpec((None, tile_h, W), lambda n, t, c: (n, t, 0)),
                pl.BlockSpec((W, W), lambda n, t, c: (0, 0)),
            ],
            out_specs=pl.BlockSpec((None, None, None, 1, 128),
                                   lambda n, t, c: (n, c, t, 0, 0)),
            scratch_shapes=[pltpu.VMEM((tile_h + 2 * pad, W), jnp.float32)] * 5,
        ),
        compiler_params=pltpu.CompilerParams(
            dimension_semantics=("parallel", "arbitrary", "arbitrary"),
            vmem_limit_bytes=48 * 1024 * 1024),
    )(xf, yf, xhalo, yhalo, weight2d, band)

    # Final scalar reduction in plain JAX (parallel-safe, better precision).
    ssim_w_sum = jnp.sum(partials[:, :, :, 0, 0])
    w_total = jnp.sum(weight2d)
    num = w_total - ssim_w_sum / C          # = sum((1 - mean_c ssim_c) * weight)
    return num / w_total


def _reference(x, y, ext_weight, window_size=WINDOW_SIZE, channel=CHANNEL,
               factor=ENHANCE_FACTOR):
    """Pure-JAX reference of the PyTorch forward (grouped 2D conv)."""
    g = jnp.asarray(_gaussian_1d(window_size, SIGMA), jnp.float32)
    window = jnp.broadcast_to(jnp.outer(g, g), (channel, 1, window_size, window_size))
    pad = window_size // 2

    def conv(img):
        return lax.conv_general_dilated(
            img, window, window_strides=(1, 1),
            padding=[(pad, pad), (pad, pad)],
            dimension_numbers=("NCHW", "OIHW", "NCHW"),
            feature_group_count=channel,
            precision=lax.Precision.HIGHEST)

    mu1 = conv(x)
    mu2 = conv(y)
    mu1_sq, mu2_sq, mu1_mu2 = mu1 * mu1, mu2 * mu2, mu1 * mu2
    sigma1_sq = conv(x * x) - mu1_sq
    sigma2_sq = conv(y * y) - mu2_sq
    sigma12 = conv(x * y) - mu1_mu2
    ssim_map = ((2 * mu1_mu2 + C1) * (2 * sigma12 + C2)) / (
        (mu1_sq + mu2_sq + C1) * (sigma1_sq + sigma2_sq + C2))
    ssim = jnp.mean(ssim_map, axis=1, keepdims=True)      # size_average=False -> (N,1,H,W)

    if ext_weight.shape[-2:] != x.shape[-2:]:
        ext_weight = _resize_bilinear_align_corners(ext_weight, x.shape[-2], x.shape[-1])
    weight = 1.0 + factor * ext_weight
    loss = 1.0 - ssim
    return jnp.sum(loss * weight) / jnp.sum(weight)


if __name__ == "__main__":
    key = jax.random.PRNGKey(0)
    kx, ky, kw = jax.random.split(key, 3)
    N, C, H, W = 2, 3, 16, 16
    x = jax.random.uniform(kx, (N, C, H, W), jnp.float32)
    y = jax.random.uniform(ky, (N, C, H, W), jnp.float32)
    ext_weight = jax.random.uniform(kw, (N, 1, H // 2, W // 2), jnp.float32)

    out = enhance_ssim_loss(x, y, ext_weight)
    out = jax.block_until_ready(out)

    ref = _reference(x, y, ext_weight)
    np.testing.assert_allclose(np.asarray(out), np.asarray(ref), rtol=2e-3, atol=2e-3)
    print("KERNEL_OK")
</pallas_src>

<mosaic_0001>
module attributes {stable_mosaic.version = 11 : i64} {
  func.func @kernel(%arg0: i32, %arg1: i32, %arg2: i32, %arg3: memref<1x1x16x16xf32, #tpu.memory_space<vmem>>, %arg4: memref<1x1x16x16xf32, #tpu.memory_space<vmem>>, %arg5: memref<1x1x1x10x16xf32, #tpu.memory_space<vmem>>, %arg6: memref<1x1x1x10x16xf32, #tpu.memory_space<vmem>>, %arg7: memref<1x16x16xf32, #tpu.memory_space<vmem>>, %arg8: memref<16x16xf32, #tpu.memory_space<vmem>>, %arg9: memref<1x1x1x1x128xf32, #tpu.memory_space<vmem>>, %arg10: memref<26x16xf32, #tpu.memory_space<vmem>>, %arg11: memref<26x16xf32, #tpu.memory_space<vmem>>, %arg12: memref<26x16xf32, #tpu.memory_space<vmem>>, %arg13: memref<26x16xf32, #tpu.memory_space<vmem>>, %arg14: memref<26x16xf32, #tpu.memory_space<vmem>>) attributes {dimension_semantics = [#tpu.dimension_semantics<parallel>, #tpu.dimension_semantics<arbitrary>, #tpu.dimension_semantics<arbitrary>], iteration_bounds = array<i64: 2, 1, 3>, scalar_prefetch = 0 : i64, scratch_operands = 5 : i64, tpu.core_type = #tpu.core_type<tc>, window_params = [{transform_indices = @transform_0, window_bounds = array<i64: 1, 1, 16, 16>}, {transform_indices = @transform_1, window_bounds = array<i64: 1, 1, 16, 16>}, {transform_indices = @transform_2, window_bounds = array<i64: 1, 1, 1, 10, 16>}, {transform_indices = @transform_3, window_bounds = array<i64: 1, 1, 1, 10, 16>}, {transform_indices = @transform_4, window_bounds = array<i64: 1, 16, 16>}, {pipeline_mode = #tpu.pipeline_mode<synchronous>, transform_indices = @transform_5, window_bounds = array<i64: 16, 16>}, {transform_indices = @transform_6, window_bounds = array<i64: 1, 1, 1, 1, 128>}]} {
    %c0 = arith.constant 0 : index
    %c0_0 = arith.constant 0 : index
    %c0_1 = arith.constant 0 : index
    %c0_2 = arith.constant 0 : index
    %c0_3 = arith.constant 0 : index
    %0 = vector.load %arg5[%c0, %c0_0, %c0_1, %c0_2, %c0_3] : memref<1x1x1x10x16xf32, #tpu.memory_space<vmem>>, vector<1x1x1x5x16xf32>
    %1 = vector.shape_cast %0 : vector<1x1x1x5x16xf32> to vector<5x16xf32>
    %c0_4 = arith.constant 0 : index
    %c0_5 = arith.constant 0 : index
    %2 = vector.load %arg10[%c0_4, %c0_5] : memref<26x16xf32, #tpu.memory_space<vmem>>, vector<5x16xf32>
    tpu.vector_store %arg10[%c0_4, %c0_5], %1 {strides = array<i32>} : memref<26x16xf32, #tpu.memory_space<vmem>>, vector<5x16xf32>,
    %c0_6 = arith.constant 0 : index
    %c0_7 = arith.constant 0 : index
    %c0_8 = arith.constant 0 : index
    %c0_9 = arith.constant 0 : index
    %3 = vector.load %arg3[%c0_6, %c0_7, %c0_8, %c0_9] : memref<1x1x16x16xf32, #tpu.memory_space<vmem>>, vector<1x1x16x16xf32>
    %4 = vector.shape_cast %3 : vector<1x1x16x16xf32> to vector<16x16xf32>
    %c5 = arith.constant 5 : index
    %c0_10 = arith.constant 0 : index
    %5 = vector.load %arg10[%c5, %c0_10] : memref<26x16xf32, #tpu.memory_space<vmem>>, vector<16x16xf32>
    tpu.vector_store %arg10[%c5, %c0_10], %4 {strides = array<i32>} : memref<26x16xf32, #tpu.memory_space<vmem>>, vector<16x16xf32>,
    %c0_11 = arith.constant 0 : index
    %c0_12 = arith.constant 0 : index
    %c0_13 = arith.constant 0 : index
    %c5_14 = arith.constant 5 : index
    %c0_15 = arith.constant 0 : index
    %6 = vector.load %arg5[%c0_11, %c0_12, %c0_13, %c5_14, %c0_15] : memref<1x1x1x10x16xf32, #tpu.memory_space<vmem>>, vector<1x1x1x5x16xf32>
    %7 = vector.shape_cast %6 : vector<1x1x1x5x16xf32> to vector<5x16xf32>
    %c21 = arith.constant 21 : index
    %c0_16 = arith.constant 0 : index
    %8 = vector.load %arg10[%c21, %c0_16] : memref<26x16xf32, #tpu.memory_space<vmem>>, vector<5x16xf32>
    tpu.vector_store %arg10[%c21, %c0_16], %7 {strides = array<i32>} : memref<26x16xf32, #tpu.memory_space<vmem>>, vector<5x16xf32>,
    %c0_17 = arith.constant 0 : index
    %c0_18 = arith.constant 0 : index
    %c0_19 = arith.constant 0 : index
    %c0_20 = arith.constant 0 : index
    %c0_21 = arith.constant 0 : index
    %9 = vector.load %arg6[%c0_17, %c0_18, %c0_19, %c0_20, %c0_21] : memref<1x1x1x10x16xf32, #tpu.memory_space<vmem>>, vector<1x1x1x5x16xf32>
    %10 = vector.shape_cast %9 : vector<1x1x1x5x16xf32> to vector<5x16xf32>
    %c0_22 = arith.constant 0 : index
    %c0_23 = arith.constant 0 : index
    %11 = vector.load %arg11[%c0_22, %c0_23] : memref<26x16xf32, #tpu.memory_space<vmem>>, vector<5x16xf32>
    tpu.vector_store %arg11[%c0_22, %c0_23], %10 {strides = array<i32>} : memref<26x16xf32, #tpu.memory_space<vmem>>, vector<5x16xf32>,
    %c0_24 = arith.constant 0 : index
    %c0_25 = arith.constant 0 : index
    %c0_26 = arith.constant 0 : index
    %c0_27 = arith.constant 0 : index
    %12 = vector.load %arg4[%c0_24, %c0_25, %c0_26, %c0_27] : memref<1x1x16x16xf32, #tpu.memory_space<vmem>>, vector<1x1x16x16xf32>
    %13 = vector.shape_cast %12 : vector<1x1x16x16xf32> to vector<16x16xf32>
    %c5_28 = arith.constant 5 : index
    %c0_29 = arith.constant 0 : index
    %14 = vector.load %arg11[%c5_28, %c0_29] : memref<26x16xf32, #tpu.memory_space<vmem>>, vector<16x16xf32>
    tpu.vector_store %arg11[%c5_28, %c0_29], %13 {strides = array<i32>} : memref<26x16xf32, #tpu.memory_space<vmem>>, vector<16x16xf32>,
    %c0_30 = arith.constant 0 : index
    %c0_31 = arith.constant 0 : index
    %c0_32 = arith.constant 0 : index
    %c5_33 = arith.constant 5 : index
    %c0_34 = arith.constant 0 : index
    %15 = vector.load %arg6[%c0_30, %c0_31, %c0_32, %c5_33, %c0_34] : memref<1x1x1x10x16xf32, #tpu.memory_space<vmem>>, vector<1x1x1x5x16xf32>
    %16 = vector.shape_cast %15 : vector<1x1x1x5x16xf32> to vector<5x16xf32>
    %c21_35 = arith.constant 21 : index
    %c0_36 = arith.constant 0 : index
    %17 = vector.load %arg11[%c21_35, %c0_36] : memref<26x16xf32, #tpu.memory_space<vmem>>, vector<5x16xf32>
    tpu.vector_store %arg11[%c21_35, %c0_36], %16 {strides = array<i32>} : memref<26x16xf32, #tpu.memory_space<vmem>>, vector<5x16xf32>,
    %c0_37 = arith.constant 0 : index
    %c0_38 = arith.constant 0 : index
    %18 = vector.load %arg10[%c0_37, %c0_38] : memref<26x16xf32, #tpu.memory_space<vmem>>, vector<26x16xf32>
    %c0_39 = arith.constant 0 : index
    %c0_40 = arith.constant 0 : index
    %19 = vector.load %arg11[%c0_39, %c0_40] : memref<26x16xf32, #tpu.memory_space<vmem>>, vector<26x16xf32>
    %20 = arith.mulf %18, %18 : vector<26x16xf32>
    %c0_41 = arith.constant 0 : index
    %c0_42 = arith.constant 0 : index
    %21 = vector.load %arg12[%c0_41, %c0_42] : memref<26x16xf32, #tpu.memory_space<vmem>>, vector<26x16xf32>
    tpu.vector_store %arg12[%c0_41, %c0_42], %20 {strides = array<i32>} : memref<26x16xf32, #tpu.memory_space<vmem>>, vector<26x16xf32>,
    %22 = arith.mulf %19, %19 : vector<26x16xf32>
    %c0_43 = arith.constant 0 : index
    %c0_44 = arith.constant 0 : index
    %23 = vector.load %arg13[%c0_43, %c0_44] : memref<26x16xf32, #tpu.memory_space<vmem>>, vector<26x16xf32>
    tpu.vector_store %arg13[%c0_43, %c0_44], %22 {strides = array<i32>} : memref<26x16xf32, #tpu.memory_space<vmem>>, vector<26x16xf32>,
    %24 = arith.mulf %18, %19 : vector<26x16xf32>
    %c0_45 = arith.constant 0 : index
    %c0_46 = arith.constant 0 : index
    %25 = vector.load %arg14[%c0_45, %c0_46] : memref<26x16xf32, #tpu.memory_space<vmem>>, vector<26x16xf32>
    tpu.vector_store %arg14[%c0_45, %c0_46], %24 {strides = array<i32>} : memref<26x16xf32, #tpu.memory_space<vmem>>, vector<26x16xf32>,
    %c0_47 = arith.constant 0 : index
    %c0_48 = arith.constant 0 : index
    %26 = vector.load %arg8[%c0_47, %c0_48] : memref<16x16xf32, #tpu.memory_space<vmem>>, vector<16x16xf32>
    %c0_49 = arith.constant 0 : index
    %c0_50 = arith.constant 0 : index
    %27 = vector.load %arg10[%c0_49, %c0_50] : memref<26x16xf32, #tpu.memory_space<vmem>>, vector<16x16xf32>
    %cst = arith.constant 0.00102838012 : f32
    %28 = vector.broadcast %cst : f32 to vector<16x16xf32>
    %29 = arith.mulf %28, %27 : vector<16x16xf32>
    %c1 = arith.constant 1 : index
    %c0_51 = arith.constant 0 : index
    %30 = vector.load %arg10[%c1, %c0_51] : memref<26x16xf32, #tpu.memory_space<vmem>>, vector<16x16xf32>
    %cst_52 = arith.constant 0.00759875821 : f32
    %31 = vector.broadcast %cst_52 : f32 to vector<16x16xf32>
    %32 = arith.mulf %31, %30 : vector<16x16xf32>
    %33 = arith.addf %29, %32 : vector<16x16xf32>
    %c2 = arith.constant 2 : index
    %c0_53 = arith.constant 0 : index
    %34 = vector.load %arg10[%c2, %c0_53] : memref<26x16xf32, #tpu.memory_space<vmem>>, vector<16x16xf32>
    %cst_54 = arith.constant 0.0360007733 : f32
    %35 = vector.broadcast %cst_54 : f32 to vector<16x16xf32>
    %36 = arith.mulf %35, %34 : vector<16x16xf32>
    %37 = arith.addf %33, %36 : vector<16x16xf32>
    %c3 = arith.constant 3 : index
    %c0_55 = arith.constant 0 : index
    %38 = vector.load %arg10[%c3, %c0_55] : memref<26x16xf32, #tpu.memory_space<vmem>>, vector<16x16xf32>
    %cst_56 = arith.constant 0.109360687 : f32
    %39 = vector.broadcast %cst_56 : f32 to vector<16x16xf32>
    %40 = arith.mulf %39, %38 : vector<16x16xf32>
    %41 = arith.addf %37, %40 : vector<16x16xf32>
    %c4 = arith.constant 4 : index
    %c0_57 = arith.constant 0 : index
    %42 = vector.load %arg10[%c4, %c0_57] : memref<26x16xf32, #tpu.memory_space<vmem>>, vector<16x16xf32>
    %cst_58 = arith.constant 0.213005543 : f32
    %43 = vector.broadcast %cst_58 : f32 to vector<16x16xf32>
    %44 = arith.mulf %43, %42 : vector<16x16xf32>
    %45 = arith.addf %41, %44 : vector<16x16xf32>
    %c5_59 = arith.constant 5 : index
    %c0_60 = arith.constant 0 : index
    %46 = vector.load %arg10[%c5_59, %c0_60] : memref<26x16xf32, #tpu.memory_space<vmem>>, vector<16x16xf32>
    %cst_61 = arith.constant 0.266011715 : f32
    %47 = vector.broadcast %cst_61 : f32 to vector<16x16xf32>
    %48 = arith.mulf %47, %46 : vector<16x16xf32>
    %49 = arith.addf %45, %48 : vector<16x16xf32>
    %c6 = arith.constant 6 : index
    %c0_62 = arith.constant 0 : index
    %50 = vector.load %arg10[%c6, %c0_62] : memref<26x16xf32, #tpu.memory_space<vmem>>, vector<16x16xf32>
    %cst_63 = arith.constant 0.213005543 : f32
    %51 = vector.broadcast %cst_63 : f32 to vector<16x16xf32>
    %52 = arith.mulf %51, %50 : vector<16x16xf32>
    %53 = arith.addf %49, %52 : vector<16x16xf32>
    %c7 = arith.constant 7 : index
    %c0_64 = arith.constant 0 : index
    %54 = vector.load %arg10[%c7, %c0_64] : memref<26x16xf32, #tpu.memory_space<vmem>>, vector<16x16xf32>
    %cst_65 = arith.constant 0.109360687 : f32
    %55 = vector.broadcast %cst_65 : f32 to vector<16x16xf32>
    %56 = arith.mulf %55, %54 : vector<16x16xf32>
    %57 = arith.addf %53, %56 : vector<16x16xf32>
    %c8 = arith.constant 8 : index
    %c0_66 = arith.constant 0 : index
    %58 = vector.load %arg10[%c8, %c0_66] : memref<26x16xf32, #tpu.memory_space<vmem>>, vector<16x16xf32>
    %cst_67 = arith.constant 0.0360007733 : f32
    %59 = vector.broadcast %cst_67 : f32 to vector<16x16xf32>
    %60 = arith.mulf %59, %58 : vector<16x16xf32>
    %61 = arith.addf %57, %60 : vector<16x16xf32>
    %c9 = arith.constant 9 : index
    %c0_68 = arith.constant 0 : index
    %62 = vector.load %arg10[%c9, %c0_68] : memref<26x16xf32, #tpu.memory_space<vmem>>, vector<16x16xf32>
    %cst_69 = arith.constant 0.00759875821 : f32
    %63 = vector.broadcast %cst_69 : f32 to vector<16x16xf32>
    %64 = arith.mulf %63, %62 : vector<16x16xf32>
    %65 = arith.addf %61, %64 : vector<16x16xf32>
    %c10 = arith.constant 10 : index
    %c0_70 = arith.constant 0 : index
    %66 = vector.load %arg10[%c10, %c0_70] : memref<26x16xf32, #tpu.memory_space<vmem>>, vector<16x16xf32>
    %cst_71 = arith.constant 0.00102838012 : f32
    %67 = vector.broadcast %cst_71 : f32 to vector<16x16xf32>
    %68 = arith.mulf %67, %66 : vector<16x16xf32>
    %69 = arith.addf %65, %68 : vector<16x16xf32>
    %cst_72 = arith.constant dense<0.000000e+00> : vector<16x16xf32>
    %70 = tpu.matmul %69, %26, %cst_72 {dimension_numbers = #tpu.dot_dimension_numbers<[1], [0], [0], [1], [0, 0, 1, 1], [], []>, precision = #tpu.contract_precision<fp32>} : vector<16x16xf32>, vector<16x16xf32>, vector<16x16xf32> -> vector<16x16xf32>
    %c0_73 = arith.constant 0 : index
    %c0_74 = arith.constant 0 : index
    %71 = vector.load %arg11[%c0_73, %c0_74] : memref<26x16xf32, #tpu.memory_space<vmem>>, vector<16x16xf32>
    %cst_75 = arith.constant 0.00102838012 : f32
    %72 = vector.broadcast %cst_75 : f32 to vector<16x16xf32>
    %73 = arith.mulf %72, %71 : vector<16x16xf32>
    %c1_76 = arith.constant 1 : index
    %c0_77 = arith.constant 0 : index
    %74 = vector.load %arg11[%c1_76, %c0_77] : memref<26x16xf32, #tpu.memory_space<vmem>>, vector<16x16xf32>
    %cst_78 = arith.constant 0.00759875821 : f32
    %75 = vector.broadcast %cst_78 : f32 to vector<16x16xf32>
    %76 = arith.mulf %75, %74 : vector<16x16xf32>
    %77 = arith.addf %73, %76 : vector<16x16xf32>
    %c2_79 = arith.constant 2 : index
    %c0_80 = arith.constant 0 : index
    %78 = vector.load %arg11[%c2_79, %c0_80] : memref<26x16xf32, #tpu.memory_space<vmem>>, vector<16x16xf32>
    %cst_81 = arith.constant 0.0360007733 : f32
    %79 = vector.broadcast %cst_81 : f32 to vector<16x16xf32>
    %80 = arith.mulf %79, %78 : vector<16x16xf32>
    %81 = arith.addf %77, %80 : vector<16x16xf32>
    %c3_82 = arith.constant 3 : index
    %c0_83 = arith.constant 0 : index
    %82 = vector.load %arg11[%c3_82, %c0_83] : memref<26x16xf32, #tpu.memory_space<vmem>>, vector<16x16xf32>
    %cst_84 = arith.constant 0.109360687 : f32
    %83 = vector.broadcast %cst_84 : f32 to vector<16x16xf32>
    %84 = arith.mulf %83, %82 : vector<16x16xf32>
    %85 = arith.addf %81, %84 : vector<16x16xf32>
    %c4_85 = arith.constant 4 : index
    %c0_86 = arith.constant 0 : index
    %86 = vector.load %arg11[%c4_85, %c0_86] : memref<26x16xf32, #tpu.memory_space<vmem>>, vector<16x16xf32>
    %cst_87 = arith.constant 0.213005543 : f32
    %87 = vector.broadcast %cst_87 : f32 to vector<16x16xf32>
    %88 = arith.mulf %87, %86 : vector<16x16xf32>
    %89 = arith.addf %85, %88 : vector<16x16xf32>
    %c5_88 = arith.constant 5 : index
    %c0_89 = arith.constant 0 : index
    %90 = vector.load %arg11[%c5_88, %c0_89] : memref<26x16xf32, #tpu.memory_space<vmem>>, vector<16x16xf32>
    %cst_90 = arith.constant 0.266011715 : f32
    %91 = vector.broadcast %cst_90 : f32 to vector<16x16xf32>
    %92 = arith.mulf %91, %90 : vector<16x16xf32>
    %93 = arith.addf %89, %92 : vector<16x16xf32>
    %c6_91 = arith.constant 6 : index
    %c0_92 = arith.constant 0 : index
    %94 = vector.load %arg11[%c6_91, %c0_92] : memref<26x16xf32, #tpu.memory_space<vmem>>, vector<16x16xf32>
    %cst_93 = arith.constant 0.213005543 : f32
    %95 = vector.broadcast %cst_93 : f32 to vector<16x16xf32>
    %96 = arith.mulf %95, %94 : vector<16x16xf32>
    %97 = arith.addf %93, %96 : vector<16x16xf32>
    %c7_94 = arith.constant 7 : index
    %c0_95 = arith.constant 0 : index
    %98 = vector.load %arg11[%c7_94, %c0_95] : memref<26x16xf32, #tpu.memory_space<vmem>>, vector<16x16xf32>
    %cst_96 = arith.constant 0.109360687 : f32
    %99 = vector.broadcast %cst_96 : f32 to vector<16x16xf32>
    %100 = arith.mulf %99, %98 : vector<16x16xf32>
    %101 = arith.addf %97, %100 : vector<16x16xf32>
    %c8_97 = arith.constant 8 : index
    %c0_98 = arith.constant 0 : index
    %102 = vector.load %arg11[%c8_97, %c0_98] : memref<26x16xf32, #tpu.memory_space<vmem>>, vector<16x16xf32>
    %cst_99 = arith.constant 0.0360007733 : f32
    %103 = vector.broadcast %cst_99 : f32 to vector<16x16xf32>
    %104 = arith.mulf %103, %102 : vector<16x16xf32>
    %105 = arith.addf %101, %104 : vector<16x16xf32>
    %c9_100 = arith.constant 9 : index
    %c0_101 = arith.constant 0 : index
    %106 = vector.load %arg11[%c9_100, %c0_101] : memref<26x16xf32, #tpu.memory_space<vmem>>, vector<16x16xf32>
    %cst_102 = arith.constant 0.00759875821 : f32
    %107 = vector.broadcast %cst_102 : f32 to vector<16x16xf32>
    %108 = arith.mulf %107, %106 : vector<16x16xf32>
    %109 = arith.addf %105, %108 : vector<16x16xf32>
    %c10_103 = arith.constant 10 : index
    %c0_104 = arith.constant 0 : index
    %110 = vector.load %arg11[%c10_103, %c0_104] : memref<26x16xf32, #tpu.memory_space<vmem>>, vector<16x16xf32>
    %cst_105 = arith.constant 0.00102838012 : f32
    %111 = vector.broadcast %cst_105 : f32 to vector<16x16xf32>
    %112 = arith.mulf %111, %110 : vector<16x16xf32>
    %113 = arith.addf %109, %112 : vector<16x16xf32>
    %cst_106 = arith.constant dense<0.000000e+00> : vector<16x16xf32>
    %114 = tpu.matmul %113, %26, %cst_106 {dimension_numbers = #tpu.dot_dimension_numbers<[1], [0], [0], [1], [0, 0, 1, 1], [], []>, precision = #tpu.contract_precision<fp32>} : vector<16x16xf32>, vector<16x16xf32>, vector<16x16xf32> -> vector<16x16xf32>
    %c0_107 = arith.constant 0 : index
    %c0_108 = arith.constant 0 : index
    %115 = vector.load %arg12[%c0_107, %c0_108] : memref<26x16xf32, #tpu.memory_space<vmem>>, vector<16x16xf32>
    %cst_109 = arith.constant 0.00102838012 : f32
    %116 = vector.broadcast %cst_109 : f32 to vector<16x16xf32>
    %117 = arith.mulf %116, %115 : vector<16x16xf32>
    %c1_110 = arith.constant 1 : index
    %c0_111 = arith.constant 0 : index
    %118 = vector.load %arg12[%c1_110, %c0_111] : memref<26x16xf32, #tpu.memory_space<vmem>>, vector<16x16xf32>
    %cst_112 = arith.constant 0.00759875821 : f32
    %119 = vector.broadcast %cst_112 : f32 to vector<16x16xf32>
    %120 = arith.mulf %119, %118 : vector<16x16xf32>
    %121 = arith.addf %117, %120 : vector<16x16xf32>
    %c2_113 = arith.constant 2 : index
    %c0_114 = arith.constant 0 : index
    %122 = vector.load %arg12[%c2_113, %c0_114] : memref<26x16xf32, #tpu.memory_space<vmem>>, vector<16x16xf32>
    %cst_115 = arith.constant 0.0360007733 : f32
    %123 = vector.broadcast %cst_115 : f32 to vector<16x16xf32>
    %124 = arith.mulf %123, %122 : vector<16x16xf32>
    %125 = arith.addf %121, %124 : vector<16x16xf32>
    %c3_116 = arith.constant 3 : index
    %c0_117 = arith.constant 0 : index
    %126 = vector.load %arg12[%c3_116, %c0_117] : memref<26x16xf32, #tpu.memory_space<vmem>>, vector<16x16xf32>
    %cst_118 = arith.constant 0.109360687 : f32
    %127 = vector.broadcast %cst_118 : f32 to vector<16x16xf32>
    %128 = arith.mulf %127, %126 : vector<16x16xf32>
    %129 = arith.addf %125, %128 : vector<16x16xf32>
    %c4_119 = arith.constant 4 : index
    %c0_120 = arith.constant 0 : index
    %130 = vector.load %arg12[%c4_119, %c0_120] : memref<26x16xf32, #tpu.memory_space<vmem>>, vector<16x16xf32>
    %cst_121 = arith.constant 0.213005543 : f32
    %131 = vector.broadcast %cst_121 : f32 to vector<16x16xf32>
    %132 = arith.mulf %131, %130 : vector<16x16xf32>
    %133 = arith.addf %129, %132 : vector<16x16xf32>
    %c5_122 = arith.constant 5 : index
    %c0_123 = arith.constant 0 : index
    %134 = vector.load %arg12[%c5_122, %c0_123] : memref<26x16xf32, #tpu.memory_space<vmem>>, vector<16x16xf32>
    %cst_124 = arith.constant 0.266011715 : f32
    %135 = vector.broadcast %cst_124 : f32 to vector<16x16xf32>
    %136 = arith.mulf %135, %134 : vector<16x16xf32>
    %137 = arith.addf %133, %136 : vector<16x16xf32>
    %c6_125 = arith.constant 6 : index
    %c0_126 = arith.constant 0 : index
    %138 = vector.load %arg12[%c6_125, %c0_126] : memref<26x16xf32, #tpu.memory_space<vmem>>, vector<16x16xf32>
    %cst_127 = arith.constant 0.213005543 : f32
    %139 = vector.broadcast %cst_127 : f32 to vector<16x16xf32>
    %140 = arith.mulf %139, %138 : vector<16x16xf32>
    %141 = arith.addf %137, %140 : vector<16x16xf32>
    %c7_128 = arith.constant 7 : index
    %c0_129 = arith.constant 0 : index
    %142 = vector.load %arg12[%c7_128, %c0_129] : memref<26x16xf32, #tpu.memory_space<vmem>>, vector<16x16xf32>
    %cst_130 = arith.constant 0.109360687 : f32
    %143 = vector.broadcast %cst_130 : f32 to vector<16x16xf32>
    %144 = arith.mulf %143, %142 : vector<16x16xf32>
    %145 = arith.addf %141, %144 : vector<16x16xf32>
    %c8_131 = arith.constant 8 : index
    %c0_132 = arith.constant 0 : index
    %146 = vector.load %arg12[%c8_131, %c0_132] : memref<26x16xf32, #tpu.memory_space<vmem>>, vector<16x16xf32>
    %cst_133 = arith.constant 0.0360007733 : f32
    %147 = vector.broadcast %cst_133 : f32 to vector<16x16xf32>
    %148 = arith.mulf %147, %146 : vector<16x16xf32>
    %149 = arith.addf %145, %148 : vector<16x16xf32>
    %c9_134 = arith.constant 9 : index
    %c0_135 = arith.constant 0 : index
    %150 = vector.load %arg12[%c9_134, %c0_135] : memref<26x16xf32, #tpu.memory_space<vmem>>, vector<16x16xf32>
    %cst_136 = arith.constant 0.00759875821 : f32
    %151 = vector.broadcast %cst_136 : f32 to vector<16x16xf32>
    %152 = arith.mulf %151, %150 : vector<16x16xf32>
    %153 = arith.addf %149, %152 : vector<16x16xf32>
    %c10_137 = arith.constant 10 : index
    %c0_138 = arith.constant 0 : index
    %154 = vector.load %arg12[%c10_137, %c0_138] : memref<26x16xf32, #tpu.memory_space<vmem>>, vector<16x16xf32>
    %cst_139 = arith.constant 0.00102838012 : f32
    %155 = vector.broadcast %cst_139 : f32 to vector<16x16xf32>
    %156 = arith.mulf %155, %154 : vector<16x16xf32>
    %157 = arith.addf %153, %156 : vector<16x16xf32>
    %cst_140 = arith.constant dense<0.000000e+00> : vector<16x16xf32>
    %158 = tpu.matmul %157, %26, %cst_140 {dimension_numbers = #tpu.dot_dimension_numbers<[1], [0], [0], [1], [0, 0, 1, 1], [], []>, precision = #tpu.contract_precision<fp32>} : vector<16x16xf32>, vector<16x16xf32>, vector<16x16xf32> -> vector<16x16xf32>
    %c0_141 = arith.constant 0 : index
    %c0_142 = arith.constant 0 : index
    %159 = vector.load %arg13[%c0_141, %c0_142] : memref<26x16xf32, #tpu.memory_space<vmem>>, vector<16x16xf32>
    %cst_143 = arith.constant 0.00102838012 : f32
    %160 = vector.broadcast %cst_143 : f32 to vector<16x16xf32>
    %161 = arith.mulf %160, %159 : vector<16x16xf32>
    %c1_144 = arith.constant 1 : index
    %c0_145 = arith.constant 0 : index
    %162 = vector.load %arg13[%c1_144, %c0_145] : memref<26x16xf32, #tpu.memory_space<vmem>>, vector<16x16xf32>
    %cst_146 = arith.constant 0.00759875821 : f32
    %163 = vector.broadcast %cst_146 : f32 to vector<16x16xf32>
    %164 = arith.mulf %163, %162 : vector<16x16xf32>
    %165 = arith.addf %161, %164 : vector<16x16xf32>
    %c2_147 = arith.constant 2 : index
    %c0_148 = arith.constant 0 : index
    %166 = vector.load %arg13[%c2_147, %c0_148] : memref<26x16xf32, #tpu.memory_space<vmem>>, vector<16x16xf32>
    %cst_149 = arith.constant 0.0360007733 : f32
    %167 = vector.broadcast %cst_149 : f32 to vector<16x16xf32>
    %168 = arith.mulf %167, %166 : vector<16x16xf32>
    %169 = arith.addf %165, %168 : vector<16x16xf32>
    %c3_150 = arith.constant 3 : index
    %c0_151 = arith.constant 0 : index
    %170 = vector.load %arg13[%c3_150, %c0_151] : memref<26x16xf32, #tpu.memory_space<vmem>>, vector<16x16xf32>
    %cst_152 = arith.constant 0.109360687 : f32
    %171 = vector.broadcast %cst_152 : f32 to vector<16x16xf32>
    %172 = arith.mulf %171, %170 : vector<16x16xf32>
    %173 = arith.addf %169, %172 : vector<16x16xf32>
    %c4_153 = arith.constant 4 : index
    %c0_154 = arith.constant 0 : index
    %174 = vector.load %arg13[%c4_153, %c0_154] : memref<26x16xf32, #tpu.memory_space<vmem>>, vector<16x16xf32>
    %cst_155 = arith.constant 0.213005543 : f32
    %175 = vector.broadcast %cst_155 : f32 to vector<16x16xf32>
    %176 = arith.mulf %175, %174 : vector<16x16xf32>
    %177 = arith.addf %173, %176 : vector<16x16xf32>
    %c5_156 = arith.constant 5 : index
    %c0_157 = arith.constant 0 : index
    %178 = vector.load %arg13[%c5_156, %c0_157] : memref<26x16xf32, #tpu.memory_space<vmem>>, vector<16x16xf32>
    %cst_158 = arith.constant 0.266011715 : f32
    %179 = vector.broadcast %cst_158 : f32 to vector<16x16xf32>
    %180 = arith.mulf %179, %178 : vector<16x16xf32>
    %181 = arith.addf %177, %180 : vector<16x16xf32>
    %c6_159 = arith.constant 6 : index
    %c0_160 = arith.constant 0 : index
    %182 = vector.load %arg13[%c6_159, %c0_160] : memref<26x16xf32, #tpu.memory_space<vmem>>, vector<16x16xf32>
    %cst_161 = arith.constant 0.213005543 : f32
    %183 = vector.broadcast %cst_161 : f32 to vector<16x16xf32>
    %184 = arith.mulf %183, %182 : vector<16x16xf32>
    %185 = arith.addf %181, %184 : vector<16x16xf32>
    %c7_162 = arith.constant 7 : index
    %c0_163 = arith.constant 0 : index
    %186 = vector.load %arg13[%c7_162, %c0_163] : memref<26x16xf32, #tpu.memory_space<vmem>>, vector<16x16xf32>
    %cst_164 = arith.constant 0.109360687 : f32
    %187 = vector.broadcast %cst_164 : f32 to vector<16x16xf32>
    %188 = arith.mulf %187, %186 : vector<16x16xf32>
    %189 = arith.addf %185, %188 : vector<16x16xf32>
    %c8_165 = arith.constant 8 : index
    %c0_166 = arith.constant 0 : index
    %190 = vector.load %arg13[%c8_165, %c0_166] : memref<26x16xf32, #tpu.memory_space<vmem>>, vector<16x16xf32>
    %cst_167 = arith.constant 0.0360007733 : f32
    %191 = vector.broadcast %cst_167 : f32 to vector<16x16xf32>
    %192 = arith.mulf %191, %190 : vector<16x16xf32>
    %193 = arith.addf %189, %192 : vector<16x16xf32>
    %c9_168 = arith.constant 9 : index
    %c0_169 = arith.constant 0 : index
    %194 = vector.load %arg13[%c9_168, %c0_169] : memref<26x16xf32, #tpu.memory_space<vmem>>, vector<16x16xf32>
    %cst_170 = arith.constant 0.00759875821 : f32
    %195 = vector.broadcast %cst_170 : f32 to vector<16x16xf32>
    %196 = arith.mulf %195, %194 : vector<16x16xf32>
    %197 = arith.addf %193, %196 : vector<16x16xf32>
    %c10_171 = arith.constant 10 : index
    %c0_172 = arith.constant 0 : index
    %198 = vector.load %arg13[%c10_171, %c0_172] : memref<26x16xf32, #tpu.memory_space<vmem>>, vector<16x16xf32>
    %cst_173 = arith.constant 0.00102838012 : f32
    %199 = vector.broadcast %cst_173 : f32 to vector<16x16xf32>
    %200 = arith.mulf %199, %198 : vector<16x16xf32>
    %201 = arith.addf %197, %200 : vector<16x16xf32>
    %cst_174 = arith.constant dense<0.000000e+00> : vector<16x16xf32>
    %202 = tpu.matmul %201, %26, %cst_174 {dimension_numbers = #tpu.dot_dimension_numbers<[1], [0], [0], [1], [0, 0, 1, 1], [], []>, precision = #tpu.contract_precision<fp32>} : vector<16x16xf32>, vector<16x16xf32>, vector<16x16xf32> -> vector<16x16xf32>
    %c0_175 = arith.constant 0 : index
    %c0_176 = arith.constant 0 : index
    %203 = vector.load %arg14[%c0_175, %c0_176] : memref<26x16xf32, #tpu.memory_space<vmem>>, vector<16x16xf32>
    %cst_177 = arith.constant 0.00102838012 : f32
    %204 = vector.broadcast %cst_177 : f32 to vector<16x16xf32>
    %205 = arith.mulf %204, %203 : vector<16x16xf32>
    %c1_178 = arith.constant 1 : index
    %c0_179 = arith.constant 0 : index
    %206 = vector.load %arg14[%c1_178, %c0_179] : memref<26x16xf32, #tpu.memory_space<vmem>>, vector<16x16xf32>
    %cst_180 = arith.constant 0.00759875821 : f32
    %207 = vector.broadcast %cst_180 : f32 to vector<16x16xf32>
    %208 = arith.mulf %207, %206 : vector<16x16xf32>
    %209 = arith.addf %205, %208 : vector<16x16xf32>
    %c2_181 = arith.constant 2 : index
    %c0_182 = arith.constant 0 : index
    %210 = vector.load %arg14[%c2_181, %c0_182] : memref<26x16xf32, #tpu.memory_space<vmem>>, vector<16x16xf32>
    %cst_183 = arith.constant 0.0360007733 : f32
    %211 = vector.broadcast %cst_183 : f32 to vector<16x16xf32>
    %212 = arith.mulf %211, %210 : vector<16x16xf32>
    %213 = arith.addf %209, %212 : vector<16x16xf32>
    %c3_184 = arith.constant 3 : index
    %c0_185 = arith.constant 0 : index
    %214 = vector.load %arg14[%c3_184, %c0_185] : memref<26x16xf32, #tpu.memory_space<vmem>>, vector<16x16xf32>
    %cst_186 = arith.constant 0.109360687 : f32
    %215 = vector.broadcast %cst_186 : f32 to vector<16x16xf32>
    %216 = arith.mulf %215, %214 : vector<16x16xf32>
    %217 = arith.addf %213, %216 : vector<16x16xf32>
    %c4_187 = arith.constant 4 : index
    %c0_188 = arith.constant 0 : index
    %218 = vector.load %arg14[%c4_187, %c0_188] : memref<26x16xf32, #tpu.memory_space<vmem>>, vector<16x16xf32>
    %cst_189 = arith.constant 0.213005543 : f32
    %219 = vector.broadcast %cst_189 : f32 to vector<16x16xf32>
    %220 = arith.mulf %219, %218 : vector<16x16xf32>
    %221 = arith.addf %217, %220 : vector<16x16xf32>
    %c5_190 = arith.constant 5 : index
    %c0_191 = arith.constant 0 : index
    %222 = vector.load %arg14[%c5_190, %c0_191] : memref<26x16xf32, #tpu.memory_space<vmem>>, vector<16x16xf32>
    %cst_192 = arith.constant 0.266011715 : f32
    %223 = vector.broadcast %cst_192 : f32 to vector<16x16xf32>
    %224 = arith.mulf %223, %222 : vector<16x16xf32>
    %225 = arith.addf %221, %224 : vector<16x16xf32>
    %c6_193 = arith.constant 6 : index
    %c0_194 = arith.constant 0 : index
    %226 = vector.load %arg14[%c6_193, %c0_194] : memref<26x16xf32, #tpu.memory_space<vmem>>, vector<16x16xf32>
    %cst_195 = arith.constant 0.213005543 : f32
    %227 = vector.broadcast %cst_195 : f32 to vector<16x16xf32>
    %228 = arith.mulf %227, %226 : vector<16x16xf32>
    %229 = arith.addf %225, %228 : vector<16x16xf32>
    %c7_196 = arith.constant 7 : index
    %c0_197 = arith.constant 0 : index
    %230 = vector.load %arg14[%c7_196, %c0_197] : memref<26x16xf32, #tpu.memory_space<vmem>>, vector<16x16xf32>
    %cst_198 = arith.constant 0.109360687 : f32
    %231 = vector.broadcast %cst_198 : f32 to vector<16x16xf32>
    %232 = arith.mulf %231, %230 : vector<16x16xf32>
    %233 = arith.addf %229, %232 : vector<16x16xf32>
    %c8_199 = arith.constant 8 : index
    %c0_200 = arith.constant 0 : index
    %234 = vector.load %arg14[%c8_199, %c0_200] : memref<26x16xf32, #tpu.memory_space<vmem>>, vector<16x16xf32>
    %cst_201 = arith.constant 0.0360007733 : f32
    %235 = vector.broadcast %cst_201 : f32 to vector<16x16xf32>
    %236 = arith.mulf %235, %234 : vector<16x16xf32>
    %237 = arith.addf %233, %236 : vector<16x16xf32>
    %c9_202 = arith.constant 9 : index
    %c0_203 = arith.constant 0 : index
    %238 = vector.load %arg14[%c9_202, %c0_203] : memref<26x16xf32, #tpu.memory_space<vmem>>, vector<16x16xf32>
    %cst_204 = arith.constant 0.00759875821 : f32
    %239 = vector.broadcast %cst_204 : f32 to vector<16x16xf32>
    %240 = arith.mulf %239, %238 : vector<16x16xf32>
    %241 = arith.addf %237, %240 : vector<16x16xf32>
    %c10_205 = arith.constant 10 : index
    %c0_206 = arith.constant 0 : index
    %242 = vector.load %arg14[%c10_205, %c0_206] : memref<26x16xf32, #tpu.memory_space<vmem>>, vector<16x16xf32>
    %cst_207 = arith.constant 0.00102838012 : f32
    %243 = vector.broadcast %cst_207 : f32 to vector<16x16xf32>
    %244 = arith.mulf %243, %242 : vector<16x16xf32>
    %245 = arith.addf %241, %244 : vector<16x16xf32>
    %cst_208 = arith.constant dense<0.000000e+00> : vector<16x16xf32>
    %246 = tpu.matmul %245, %26, %cst_208 {dimension_numbers = #tpu.dot_dimension_numbers<[1], [0], [0], [1], [0, 0, 1, 1], [], []>, precision = #tpu.contract_precision<fp32>} : vector<16x16xf32>, vector<16x16xf32>, vector<16x16xf32> -> vector<16x16xf32>
    %247 = arith.mulf %70, %70 : vector<16x16xf32>
    %248 = arith.mulf %114, %114 : vector<16x16xf32>
    %249 = arith.mulf %70, %114 : vector<16x16xf32>
    %250 = arith.subf %158, %247 : vector<16x16xf32>
    %251 = arith.subf %202, %248 : vector<16x16xf32>
    %252 = arith.subf %246, %249 : vector<16x16xf32>
    %cst_209 = arith.constant 2.000000e+00 : f32
    %253 = vector.broadcast %cst_209 : f32 to vector<16x16xf32>
    %254 = arith.mulf %253, %249 : vector<16x16xf32>
    %cst_210 = arith.constant 9.99999974E-5 : f32
    %255 = vector.broadcast %cst_210 : f32 to vector<16x16xf32>
    %256 = arith.addf %254, %255 : vector<16x16xf32>
    %cst_211 = arith.constant 2.000000e+00 : f32
    %257 = vector.broadcast %cst_211 : f32 to vector<16x16xf32>
    %258 = arith.mulf %257, %252 : vector<16x16xf32>
    %cst_212 = arith.constant 8.99999984E-4 : f32
    %259 = vector.broadcast %cst_212 : f32 to vector<16x16xf32>
    %260 = arith.addf %258, %259 : vector<16x16xf32>
    %261 = arith.mulf %256, %260 : vector<16x16xf32>
    %262 = arith.addf %247, %248 : vector<16x16xf32>
    %cst_213 = arith.constant 9.99999974E-5 : f32
    %263 = vector.broadcast %cst_213 : f32 to vector<16x16xf32>
    %264 = arith.addf %262, %263 : vector<16x16xf32>
    %265 = arith.addf %250, %251 : vector<16x16xf32>
    %cst_214 = arith.constant 8.99999984E-4 : f32
    %266 = vector.broadcast %cst_214 : f32 to vector<16x16xf32>
    %267 = arith.addf %265, %266 : vector<16x16xf32>
    %268 = arith.mulf %264, %267 : vector<16x16xf32>
    %269 = tpu.reciprocal %268 {approx = true} : vector<16x16xf32> -> vector<16x16xf32>
    %270 = arith.mulf %261, %269 : vector<16x16xf32>
    %c0_215 = arith.constant 0 : index
    %c0_216 = arith.constant 0 : index
    %c0_217 = arith.constant 0 : index
    %271 = vector.load %arg7[%c0_215, %c0_216, %c0_217] : memref<1x16x16xf32, #tpu.memory_space<vmem>>, vector<1x16x16xf32>
    %272 = vector.shape_cast %271 : vector<1x16x16xf32> to vector<16x16xf32>
    %273 = arith.mulf %270, %272 : vector<16x16xf32>
    %274 = vector.shape_cast %273 : vector<16x16xf32> to vector<1x16x16xf32>
    %cst_218 = arith.constant dense<0.000000e+00> : vector<1xf32>
    %275 = vector.multi_reduction <add>, %274, %cst_218 [1, 2] : vector<1x16x16xf32> to vector<1xf32>
    %276 = vector.shape_cast %275 : vector<1xf32> to vector<1x1x1xf32>
    %277 = vector.extract %276[0, 0, 0] : f32 from vector<1x1x1xf32>
    %cst_219 = arith.constant 1.000000e+00 : f32
    %278 = vector.broadcast %cst_219 : f32 to vector<1x128xf32>
    %279 = vector.broadcast %277 : f32 to vector<1x128xf32>
    %280 = arith.mulf %279, %278 : vector<1x128xf32>
    %c0_220 = arith.constant 0 : index
    %c0_221 = arith.constant 0 : index
    %c0_222 = arith.constant 0 : index
    %c0_223 = arith.constant 0 : index
    %c0_224 = arith.constant 0 : index
    %281 = vector.load %arg9[%c0_220, %c0_221, %c0_222, %c0_223, %c0_224] : memref<1x1x1x1x128xf32, #tpu.memory_space<vmem>>, vector<1x1x1x1x128xf32>
    %282 = vector.shape_cast %281 : vector<1x1x1x1x128xf32> to vector<1x128xf32>
    %283 = vector.shape_cast %280 : vector<1x128xf32> to vector<1x1x1x1x128xf32>
    tpu.vector_store %arg9[%c0_220, %c0_221, %c0_222, %c0_223, %c0_224], %283 {strides = array<i32>} : memref<1x1x1x1x128xf32, #tpu.memory_space<vmem>>, vector<1x1x1x1x128xf32>,
    return
  }
  func.func @transform_0(%arg0: i32, %arg1: i32, %arg2: i32) -> (i32, i32, i32, i32) {
    %c0_i32 = arith.constant 0 : i32
    %c0_i32_0 = arith.constant 0 : i32
    return %arg0, %arg2, %arg1, %c0_i32 : i32, i32, i32, i32
  }
  func.func @transform_1(%arg0: i32, %arg1: i32, %arg2: i32) -> (i32, i32, i32, i32) {
    %c0_i32 = arith.constant 0 : i32
    %c0_i32_0 = arith.constant 0 : i32
    return %arg0, %arg2, %arg1, %c0_i32 : i32, i32, i32, i32
  }
  func.func @transform_2(%arg0: i32, %arg1: i32, %arg2: i32) -> (i32, i32, i32, i32, i32) {
    %c0_i32 = arith.constant 0 : i32
    %c0_i32_0 = arith.constant 0 : i32
    %c0_i32_1 = arith.constant 0 : i32
    return %arg0, %arg2, %arg1, %c0_i32, %c0_i32_0 : i32, i32, i32, i32, i32
  }
  func.func @transform_3(%arg0: i32, %arg1: i32, %arg2: i32) -> (i32, i32, i32, i32, i32) {
    %c0_i32 = arith.constant 0 : i32
    %c0_i32_0 = arith.constant 0 : i32
    %c0_i32_1 = arith.constant 0 : i32
    return %arg0, %arg2, %arg1, %c0_i32, %c0_i32_0 : i32, i32, i32, i32, i32
  }
  func.func @transform_4(%arg0: i32, %arg1: i32, %arg2: i32) -> (i32, i32, i32) {
    %c0_i32 = arith.constant 0 : i32
    %c0_i32_0 = arith.constant 0 : i32
    return %arg0, %arg1, %c0_i32 : i32, i32, i32
  }
  func.func @transform_5(%arg0: i32, %arg1: i32, %arg2: i32) -> (i32, i32) {
    %c0_i32 = arith.constant 0 : i32
    %c0_i32_0 = arith.constant 0 : i32
    %c0_i32_1 = arith.constant 0 : i32
    return %c0_i32, %c0_i32_0 : i32, i32
  }
  func.func @transform_6(%arg0: i32, %arg1: i32, %arg2: i32) -> (i32, i32, i32, i32, i32) {
    %c0_i32 = arith.constant 0 : i32
    %c0_i32_0 = arith.constant 0 : i32
    %c0_i32_1 = arith.constant 0 : i32
    return %arg0, %arg2, %arg1, %c0_i32, %c0_i32_0 : i32, i32, i32, i32, i32
  }
}

</mosaic_0001>

<llo_original>
// kernel: tpu_custom_call.1
$region0: #{tpu_custom_call.1}
  #allocation0 [shape = 'u32[]', space=smem, size = 0x4, offset = 0x4, fixed_abs, tag = 'smem constant byte address 0x4 - core index']
  #allocation1 [shape = 'u32[144,128]{1,0:T(1,128)}', space=vmem, size = 0x12000, scoped, tag = 'internal scratch']
  #allocation2 [shape = 'f32[26,16]{1,0:T(8,128)}', space=vmem, size = 0x4000, scoped, tag = 'scratch operand']
  #allocation3 [shape = 'f32[26,16]{1,0:T(8,128)}', space=vmem, size = 0x4000, scoped, tag = 'scratch operand']
  #allocation4 [shape = 'f32[26,16]{1,0:T(8,128)}', space=vmem, size = 0x4000, scoped, tag = 'scratch operand']
  #allocation5 [shape = 'f32[26,16]{1,0:T(8,128)}', space=vmem, size = 0x4000, scoped, tag = 'scratch operand']
  #allocation6 [shape = 'f32[26,16]{1,0:T(8,128)}', space=vmem, size = 0x4000, scoped, tag = 'scratch operand']
  %s0 = inlined_call_operand.vmem [shape: f32[2,3,16,16], index: 0, kind: input, shape index: {}]
  %s1 = inlined_call_operand.vmem [shape: f32[2,3,16,16], index: 1, kind: input, shape index: {}]
  %s2 = inlined_call_operand.vmem [shape: f32[2,3,1,10,16], index: 2, kind: input, shape index: {}]
  %s3 = inlined_call_operand.vmem [shape: f32[2,3,1,10,16], index: 3, kind: input, shape index: {}]
  %s4 = inlined_call_operand.vmem [shape: f32[2,16,16], index: 4, kind: input, shape index: {}]
  %s5 = inlined_call_operand.vmem [shape: f32[16,16], index: 5, kind: input, shape index: {}]
  %s6 = inlined_call_operand.hbm [shape: f32[2,3,1,1,128], index: 6, kind: output, shape index: {}]
  %s7 = sld [smem:[#allocation0]]
  $region57: #{tpu_custom_call.1} parent=0
    _
  %s9 = ssub.s32 1, %s7
  %s10 = scalar_select 0, %s9, %s7
  $region1: #{tpu_custom_call.1} parent=0
    #allocation7 [shape = 'u8[1024]{0}', space=vmem, size = 0x400, scoped, tag = 'output window, operand 0']
    #allocation8 [shape = 's32[2]{0}', space=sflag, size = 0x8, scoped, tag = 'scoped memory for tpu_custom_call.1']
    %11 = vsyncpa [#allocation8], 0
    %s12 = scalar_lea.sflag [#allocation8], 1
    %13 = vsyncpa %s12, 0
    loop: start=0, step=1, limit=8
    $region2: #{tpu_custom_call.1} parent=1 // loop_pre_header
      _
    $region3: #{tpu_custom_call.1} parent=1 // loop_header
      %s15 = sphi 0, %s19
      %p16 = scmp.ge.s32.totalorder %s15, 8
      %s22 = sphi 0, %s41
      %s23 = sphi 0, %s37
      %s24 = sphi 0, %s33
      %s25 = sphi 0, %s22
      %s26 = sphi 0, %s23
      %s27 = sphi 0, %s24
      %s28 = sphi 0, %s25
      %s29 = sphi 0, %s26
      %s30 = sphi 0, %s27
      %s48 = sphi 0, %s50
      %s51 = sphi 0, %s48
      %s52 = sphi 0, %s51
      %s68 = sphi 0, %s52
      %s78 = sphi 0, %s80
      %s81 = sphi 0, %s78
      %s82 = sphi 0, %s81
      %s98 = sphi 0, %s82
      %s108 = sphi 0, %s110
      %s111 = sphi 0, %s108
      %s112 = sphi 0, %s111
      %s128 = sphi 0, %s112
      %s138 = sphi 0, %s140
      %s141 = sphi 0, %s138
      %s142 = sphi 0, %s141
      %s158 = sphi 0, %s142
      %s166 = sphi 0, %s168
      %s169 = sphi 0, %s166
      %s170 = sphi 0, %s169
      %s186 = sphi 0, %s170
      %s190 = sphi 0, %s190
      %s192 = sphi 0, %s190
      %s193 = sphi 0, %s192
      %s207 = sphi 0, %s193
      %s217 = sphi 0, %s219
      %s220 = sphi 0, %s217
      %s221 = sphi 0, %s220
      %s237 = sphi 0, %s221
    $region4: #{tpu_custom_call.1} parent=1 // loop_header_branch
      %18 = sbr.rel (%p16) target = $region8
    $region5: #{tpu_custom_call.1} parent=1 // loop_body
      %s20 = ssub.s32 %s15, 1
      %s21 = ssub.s32 %s15, 2
      %s31 = sadd.s32 1, %s24
      %p32 = scmp.ge.s32.totalorder %s31, 3
      %s33 = scalar_select %p32, 0, %s31
      %s34 = sadd.s32 1, %s23
      %s35 = scalar_select %p32, %s34, %s23
      %p36 = scmp.ge.s32.totalorder %s35, 1
      %s37 = scalar_select %p36, 0, %s35
      %s38 = sadd.s32 1, %s22
      %s39 = scalar_select %p36, %s38, %s22
      %p40 = scmp.ge.s32.totalorder %s39, 2
      %s41 = scalar_select %p40, 0, %s39
      %s42 = ssub.s32 %s22, %s41
      %s43 = ssub.s32 %s24, %s33
      %s44 = sor.u32 %s42, %s43
      %s45 = ssub.s32 %s23, %s37
      %s46 = sor.u32 %s44, %s45
      %p47 = scmp.eq.s32.totalorder %s46, 0
      %s49 = sadd.s32 %s48, 1
      %s50 = scalar_select %p47, %s48, %s49
      %p53 = pneg %p47
      %p54 = scmp.eq.s32.totalorder %s15, 5
      %p55 = por %p53, %p54
      %p56 = scmp.ne.s32.totalorder %s48, %s51
      %p57 = scmp.eq.s32.totalorder %s15, 0
      %p58 = por %p56, %p57
      %p59 = scmp.ne.s32.totalorder %s48, %s51
      %p60 = scmp.eq.s32.totalorder %s20, 5
      %p61 = por %p59, %p60
      %p62 = scmp.ne.s32.totalorder %s51, %s52
      %p63 = scmp.eq.s32.totalorder %s20, 0
      %p64 = por %p62, %p63
      %p65 = scmp.ne.s32.totalorder %s51, %s52
      %p66 = scmp.eq.s32.totalorder %s21, 5
      %p67 = por %p65, %p66
      %p69 = scmp.ne.s32.totalorder %s52, %s68
      %p70 = scmp.eq.s32.totalorder %s21, 0
      %p71 = por %p69, %p70
      %s72 = ssub.s32 %s22, %s41
      %s73 = ssub.s32 %s24, %s33
      %s74 = sor.u32 %s72, %s73
      %s75 = ssub.s32 %s23, %s37
      %s76 = sor.u32 %s74, %s75
      %p77 = scmp.eq.s32.totalorder %s76, 0
      %s79 = sadd.s32 %s78, 1
      %s80 = scalar_select %p77, %s78, %s79
      %p83 = pneg %p77
      %p84 = scmp.eq.s32.totalorder %s15, 5
      %p85 = por %p83, %p84
      %p86 = scmp.ne.s32.totalorder %s78, %s81
      %p87 = scmp.eq.s32.totalorder %s15, 0
      %p88 = por %p86, %p87
      %p89 = scmp.ne.s32.totalorder %s78, %s81
      %p90 = scmp.eq.s32.totalorder %s20, 5
      %p91 = por %p89, %p90
      %p92 = scmp.ne.s32.totalorder %s81, %s82
      %p93 = scmp.eq.s32.totalorder %s20, 0
      %p94 = por %p92, %p93
      %p95 = scmp.ne.s32.totalorder %s81, %s82
      %p96 = scmp.eq.s32.totalorder %s21, 5
      %p97 = por %p95, %p96
      %p99 = scmp.ne.s32.totalorder %s82, %s98
      %p100 = scmp.eq.s32.totalorder %s21, 0
      %p101 = por %p99, %p100
      %s102 = ssub.s32 %s22, %s41
      %s103 = ssub.s32 %s24, %s33
      %s104 = sor.u32 %s102, %s103
      %s105 = ssub.s32 %s23, %s37
      %s106 = sor.u32 %s104, %s105
      %p107 = scmp.eq.s32.totalorder %s106, 0
      %s109 = sadd.s32 %s108, 1
      %s110 = scalar_select %p107, %s108, %s109
      %p113 = pneg %p107
      %p114 = scmp.eq.s32.totalorder %s15, 5
      %p115 = por %p113, %p114
      %p116 = scmp.ne.s32.totalorder %s108, %s111
      %p117 = scmp.eq.s32.totalorder %s15, 0
      %p118 = por %p116, %p117
      %p119 = scmp.ne.s32.totalorder %s108, %s111
      %p120 = scmp.eq.s32.totalorder %s20, 5
      %p121 = por %p119, %p120
      %p122 = scmp.ne.s32.totalorder %s111, %s112
      %p123 = scmp.eq.s32.totalorder %s20, 0
      %p124 = por %p122, %p123
      %p125 = scmp.ne.s32.totalorder %s111, %s112
      %p126 = scmp.eq.s32.totalorder %s21, 5
      %p127 = por %p125, %p126
      %p129 = scmp.ne.s32.totalorder %s112, %s128
      %p130 = scmp.eq.s32.totalorder %s21, 0
      %p131 = por %p129, %p130
      %s132 = ssub.s32 %s22, %s41
      %s133 = ssub.s32 %s24, %s33
      %s134 = sor.u32 %s132, %s133
      %s135 = ssub.s32 %s23, %s37
      %s136 = sor.u32 %s134, %s135
      %p137 = scmp.eq.s32.totalorder %s136, 0
      %s139 = sadd.s32 %s138, 1
      %s140 = scalar_select %p137, %s138, %s139
      %p143 = pneg %p137
      %p144 = scmp.eq.s32.totalorder %s15, 5
      %p145 = por %p143, %p144
      %p146 = scmp.ne.s32.totalorder %s138, %s141
      %p147 = scmp.eq.s32.totalorder %s15, 0
      %p148 = por %p146, %p147
      %p149 = scmp.ne.s32.totalorder %s138, %s141
      %p150 = scmp.eq.s32.totalorder %s20, 5
      %p151 = por %p149, %p150
      %p152 = scmp.ne.s32.totalorder %s141, %s142
      %p153 = scmp.eq.s32.totalorder %s20, 0
      %p154 = por %p152, %p153
      %p155 = scmp.ne.s32.totalorder %s141, %s142
      %p156 = scmp.eq.s32.totalorder %s21, 5
      %p157 = por %p155, %p156
      %p159 = scmp.ne.s32.totalorder %s142, %s158
      %p160 = scmp.eq.s32.totalorder %s21, 0
      %p161 = por %p159, %p160
      %s162 = ssub.s32 %s22, %s41
      %s163 = ssub.s32 %s23, %s37
      %s164 = sor.u32 %s162, %s163
      %p165 = scmp.eq.s32.totalorder %s164, 0
      %s167 = sadd.s32 %s166, 1
      %s168 = scalar_select %p165, %s166, %s167
      %p171 = pneg %p165
      %p172 = scmp.eq.s32.totalorder %s15, 5
      %p173 = por %p171, %p172
      %p174 = scmp.ne.s32.totalorder %s166, %s169
      %p175 = scmp.eq.s32.totalorder %s15, 0
      %p176 = por %p174, %p175
      %p177 = scmp.ne.s32.totalorder %s166, %s169
      %p178 = scmp.eq.s32.totalorder %s20, 5
      %p179 = por %p177, %p178
      %p180 = scmp.ne.s32.totalorder %s169, %s170
      %p181 = scmp.eq.s32.totalorder %s20, 0
      %p182 = por %p180, %p181
      %p183 = scmp.ne.s32.totalorder %s169, %s170
      %p184 = scmp.eq.s32.totalorder %s21, 5
      %p185 = por %p183, %p184
      %p187 = scmp.ne.s32.totalorder %s170, %s186
      %p188 = scmp.eq.s32.totalorder %s21, 0
      %p189 = por %p187, %p188
      %s191 = sadd.s32 %s190, 1
      %p194 = scmp.eq.s32.totalorder %s15, 5
      %p195 = scmp.ne.s32.totalorder %s190, %s192
      %p196 = scmp.eq.s32.totalorder %s15, 0
      %p197 = por %p195, %p196
      %p198 = scmp.ne.s32.totalorder %s190, %s192
      %p199 = scmp.eq.s32.totalorder %s20, 5
      %p200 = por %p198, %p199
      %p201 = scmp.ne.s32.totalorder %s192, %s193
      %p202 = scmp.eq.s32.totalorder %s20, 0
      %p203 = por %p201, %p202
      %p204 = scmp.ne.s32.totalorder %s192, %s193
      %p205 = scmp.eq.s32.totalorder %s21, 5
      %p206 = por %p204, %p205
      %p208 = scmp.ne.s32.totalorder %s193, %s207
      %p209 = scmp.eq.s32.totalorder %s21, 0
      %p210 = por %p208, %p209
      %s211 = ssub.s32 %s22, %s41
      %s212 = ssub.s32 %s24, %s33
      %s213 = sor.u32 %s211, %s212
      %s214 = ssub.s32 %s23, %s37
      %s215 = sor.u32 %s213, %s214
      %p216 = scmp.eq.s32.totalorder %s215, 0
      %s218 = sadd.s32 %s217, 1
      %s219 = scalar_select %p216, %s217, %s218
      %p222 = pneg %p216
      %p223 = scmp.eq.s32.totalorder %s15, 5
      %p224 = por %p222, %p223
      %p225 = scmp.ne.s32.totalorder %s217, %s220
      %p226 = scmp.eq.s32.totalorder %s15, 0
      %p227 = por %p225, %p226
      %p228 = scmp.ne.s32.totalorder %s217, %s220
      %p229 = scmp.eq.s32.totalorder %s20, 5
      %p230 = por %p228, %p229
      %p231 = scmp.ne.s32.totalorder %s220, %s221
      %p232 = scmp.eq.s32.totalorder %s20, 0
      %p233 = por %p231, %p232
      %p234 = scmp.ne.s32.totalorder %s220, %s221
      %p235 = scmp.eq.s32.totalorder %s21, 5
      %p236 = por %p234, %p235
      %p238 = scmp.ne.s32.totalorder %s221, %s237
      %p239 = scmp.eq.s32.totalorder %s21, 0
      %p240 = por %p238, %p239
      %p241 = scmp.le.s32.totalorder 1, %s15
      %p242 = scmp.lt.s32.totalorder %s15, 7
      %p243 = pnand %p241, %p242
      %p244 = pneg %p243
      // Predicated region
      $region9: #{tpu_custom_call.1} parent=5 // pred_check
        _
      $region10: #{tpu_custom_call.1} parent=5 // pred_check_branch
        %246 = sbr.rel (%p243) target = $region12
      $region11: #{tpu_custom_call.1} parent=5 // pred_region
        %s247 = ssub.s32 %s15, 1
        // Predicated region
        $region13: #{tpu_custom_call.1} parent=11 // pred_check
          %p248 = pneg %p203
        $region14: #{tpu_custom_call.1} parent=11 // pred_check_branch
          %250 = sbr.rel (%p248) target = $region16
        $region15: #{tpu_custom_call.1} parent=11 // pred_region
          _
        $region16: #{tpu_custom_call.1} parent=11 // pred_fallthru
          _
      $region12: #{tpu_custom_call.1} parent=5 // pred_fallthru
        _
      %p251 = scmp.lt.s32.totalorder %s15, 6
      // Predicated region
      $region17: #{tpu_custom_call.1} parent=5 // pred_check
        %p252 = pneg %p251
      $region18: #{tpu_custom_call.1} parent=5 // pred_check_branch
        %254 = sbr.rel (%p252) target = $region20
      $region19: #{tpu_custom_call.1} parent=5 // pred_region
        // Predicated region
        $region21: #{tpu_custom_call.1} parent=19 // pred_check
          %p255 = pneg %p58
        $region22: #{tpu_custom_call.1} parent=19 // pred_check_branch
          %257 = sbr.rel (%p255) target = $region24
        $region23: #{tpu_custom_call.1} parent=19 // pred_region
          %s258 = smul.u32 2, %s23
          %p259 = scmp.lt.s32.totalorder %s22, 1
          %s260 = scalar_select %p259, %s22, 1
          %p261 = scmp.lt.s32.totalorder %s24, 2
          %s262 = scalar_select %p261, %s24, 2
          %p263 = scmp.lt.s32.totalorder %s258, 1
          %s264 = scalar_select %p263, %s258, 1
          %s265 = smul.addr %s262, 2
          %s266 = sadd.s32 %s264, %s265
          %s267 = smul.addr %s260, 6
          %s268 = sadd.s32 %s266, %s267
          %s269 = smul.addr %s268, 8
          %s270 = scalar_lea.vmem %s0, %s269
          %s271 = smul.u32 2, %s23
        $region24: #{tpu_custom_call.1} parent=19 // pred_fallthru
          _
        // Predicated region
        $region25: #{tpu_custom_call.1} parent=19 // pred_check
          %p272 = pneg %p88
        $region26: #{tpu_custom_call.1} parent=19 // pred_check_branch
          %274 = sbr.rel (%p272) target = $region28
        $region27: #{tpu_custom_call.1} parent=19 // pred_region
          %s275 = smul.u32 2, %s23
          %p276 = scmp.lt.s32.totalorder %s22, 1
          %s277 = scalar_select %p276, %s22, 1
          %p278 = scmp.lt.s32.totalorder %s24, 2
          %s279 = scalar_select %p278, %s24, 2
          %p280 = scmp.lt.s32.totalorder %s275, 1
          %s281 = scalar_select %p280, %s275, 1
          %s282 = smul.addr %s279, 2
          %s283 = sadd.s32 %s281, %s282
          %s284 = smul.addr %s277, 6
          %s285 = sadd.s32 %s283, %s284
          %s286 = smul.addr %s285, 8
          %s287 = scalar_lea.vmem %s1, %s286
          %s288 = smul.u32 2, %s23
        $region28: #{tpu_custom_call.1} parent=19 // pred_fallthru
          _
        // Predicated region
        $region29: #{tpu_custom_call.1} parent=19 // pred_check
          %p289 = pneg %p118
        $region30: #{tpu_custom_call.1} parent=19 // pred_check_branch
          %291 = sbr.rel (%p289) target = $region32
        $region31: #{tpu_custom_call.1} parent=19 // pred_region
          %p292 = scmp.lt.s32.totalorder %s22, 1
          %s293 = scalar_select %p292, %s22, 1
          %p294 = scmp.lt.s32.totalorder %s24, 2
          %s295 = scalar_select %p294, %s24, 2
          %p296 = scmp.lt.s32.totalorder %s23, 0
          %s297 = scalar_select %p296, %s23, 0
          %s298 = smul.addr %s297, 2
          %s299 = smul.addr %s295, 2
          %s300 = sadd.s32 %s298, %s299
          %s301 = smul.addr %s293, 6
          %s302 = sadd.s32 %s300, %s301
          %s303 = smul.addr %s302, 8
          %s304 = scalar_lea.vmem %s2, %s303
        $region32: #{tpu_custom_call.1} parent=19 // pred_fallthru
          _
        // Predicated region
        $region33: #{tpu_custom_call.1} parent=19 // pred_check
          %p305 = pneg %p148
        $region34: #{tpu_custom_call.1} parent=19 // pred_check_branch
          %307 = sbr.rel (%p305) target = $region36
        $region35: #{tpu_custom_call.1} parent=19 // pred_region
          %p308 = scmp.lt.s32.totalorder %s22, 1
          %s309 = scalar_select %p308, %s22, 1
          %p310 = scmp.lt.s32.totalorder %s24, 2
          %s311 = scalar_select %p310, %s24, 2
          %p312 = scmp.lt.s32.totalorder %s23, 0
          %s313 = scalar_select %p312, %s23, 0
          %s314 = smul.addr %s313, 2
          %s315 = smul.addr %s311, 2
          %s316 = sadd.s32 %s314, %s315
          %s317 = smul.addr %s309, 6
          %s318 = sadd.s32 %s316, %s317
          %s319 = smul.addr %s318, 8
          %s320 = scalar_lea.vmem %s3, %s319
        $region36: #{tpu_custom_call.1} parent=19 // pred_fallthru
          _
        // Predicated region
        $region37: #{tpu_custom_call.1} parent=19 // pred_check
          %p321 = pneg %p176
        $region38: #{tpu_custom_call.1} parent=19 // pred_check_branch
          %323 = sbr.rel (%p321) target = $region40
        $region39: #{tpu_custom_call.1} parent=19 // pred_region
          %s324 = smul.u32 2, %s23
          %p325 = scmp.lt.s32.totalorder %s22, 1
          %s326 = scalar_select %p325, %s22, 1
          %p327 = scmp.lt.s32.totalorder %s324, 1
          %s328 = scalar_select %p327, %s324, 1
          %s329 = smul.addr %s326, 2
          %s330 = sadd.s32 %s328, %s329
          %s331 = smul.addr %s330, 8
          %s332 = scalar_lea.vmem %s4, %s331
          %s333 = smul.u32 2, %s23
        $region40: #{tpu_custom_call.1} parent=19 // pred_fallthru
          _
      $region20: #{tpu_custom_call.1} parent=5 // pred_fallthru
        _
      %p334 = scmp.le.s32.totalorder 1, %s15
      %p335 = scmp.lt.s32.totalorder %s15, 7
      %p336 = pnand %p334, %p335
      %p337 = pneg %p336
      // Predicated region
      $region41: #{tpu_custom_call.1} parent=5 // pred_check
        _
      $region42: #{tpu_custom_call.1} parent=5 // pred_check_branch
        %339 = sbr.rel (%p336) target = $region44
      $region43: #{tpu_custom_call.1} parent=5 // pred_region
        %s340 = ssub.s32 %s15, 1
        %s341 = smul.u32 2, %s26
        %p342 = scmp.lt.s32.totalorder %s25, 1
        %s343 = scalar_select %p342, %s25, 1
        %p344 = scmp.lt.s32.totalorder %s27, 2
        %s345 = scalar_select %p344, %s27, 2
        %p346 = scmp.lt.s32.totalorder %s341, 1
        %s347 = scalar_select %p346, %s341, 1
        %s348 = smul.addr %s345, 2
        %s349 = sadd.s32 %s347, %s348
        %s350 = smul.addr %s343, 6
        %s351 = sadd.s32 %s349, %s350
        %s352 = smul.addr %s351, 8
        %s353 = scalar_lea.vmem %s0, %s352
        %p354 = pneg %p64
        %p355 = pneg %p61
        %s356 = smul.u32 2, %s26
        %p357 = scmp.lt.s32.totalorder %s25, 1
        %s358 = scalar_select %p357, %s25, 1
        %p359 = scmp.lt.s32.totalorder %s27, 2
        %s360 = scalar_select %p359, %s27, 2
        %p361 = scmp.lt.s32.totalorder %s356, 1
        %s362 = scalar_select %p361, %s356, 1
        %s363 = smul.addr %s360, 2
        %s364 = sadd.s32 %s362, %s363
        %s365 = smul.addr %s358, 6
        %s366 = sadd.s32 %s364, %s365
        %s367 = smul.addr %s366, 8
        %s368 = scalar_lea.vmem %s1, %s367
        %p369 = pneg %p94
        %p370 = pneg %p91
        %p371 = scmp.lt.s32.totalorder %s25, 1
        %s372 = scalar_select %p371, %s25, 1
        %p373 = scmp.lt.s32.totalorder %s27, 2
        %s374 = scalar_select %p373, %s27, 2
        %p375 = scmp.lt.s32.totalorder %s26, 0
        %s376 = scalar_select %p375, %s26, 0
        %s377 = smul.addr %s376, 2
        %s378 = smul.addr %s374, 2
        %s379 = sadd.s32 %s377, %s378
        %s380 = smul.addr %s372, 6
        %s381 = sadd.s32 %s379, %s380
        %s382 = smul.addr %s381, 8
        %s383 = scalar_lea.vmem %s2, %s382
        %p384 = pneg %p124
        %p385 = pneg %p121
        %p386 = scmp.lt.s32.totalorder %s25, 1
        %s387 = scalar_select %p386, %s25, 1
        %p388 = scmp.lt.s32.totalorder %s27, 2
        %s389 = scalar_select %p388, %s27, 2
        %p390 = scmp.lt.s32.totalorder %s26, 0
        %s391 = scalar_select %p390, %s26, 0
        %s392 = smul.addr %s391, 2
        %s393 = smul.addr %s389, 2
        %s394 = sadd.s32 %s392, %s393
        %s395 = smul.addr %s387, 6
        %s396 = sadd.s32 %s394, %s395
        %s397 = smul.addr %s396, 8
        %s398 = scalar_lea.vmem %s3, %s397
        %p399 = pneg %p154
        %p400 = pneg %p151
        %s401 = smul.u32 2, %s26
        %p402 = scmp.lt.s32.totalorder %s25, 1
        %s403 = scalar_select %p402, %s25, 1
        %p404 = scmp.lt.s32.totalorder %s401, 1
        %s405 = scalar_select %p404, %s401, 1
        %s406 = smul.addr %s403, 2
        %s407 = sadd.s32 %s405, %s406
        %s408 = smul.addr %s407, 8
        %s409 = scalar_lea.vmem %s4, %s408
        %p410 = pneg %p182
        %p411 = pneg %p179
        %p412 = pneg %p203
        %p413 = pneg %p200
        %p414 = pneg %p233
        %p415 = pneg %p230
        %s416 = sand.u32 %s220, 1
        %s417 = scalar_lea.sflag [#allocation8], %s416
        %s418 = sand.u32 %s220, 1
        %s419 = scalar_lea.vmem [#allocation7], %s418
        %s420 = smul.u32 2, %s26
        %p421 = scmp.lt.s32.totalorder %s25, 1
        %s422 = scalar_select %p421, %s25, 1
        %p423 = scmp.lt.s32.totalorder %s27, 2
        %s424 = scalar_select %p423, %s27, 2
        %p425 = scmp.lt.s32.totalorder %s420, 1
        %s426 = scalar_select %p425, %s420, 1
        %s427 = smul.addr %s424, 2
        %s428 = sadd.s32 %s426, %s427
        %s429 = smul.addr %s422, 6
        %s430 = sadd.s32 %s428, %s429
        %s431 = smul.addr %s430, 8
        %s432 = scalar_lea.vmem %s0, %s431
        %s433 = smul.u32 2, %s26
        %s434 = smul.u32 2, %s26
        %p435 = scmp.lt.s32.totalorder %s25, 1
        %s436 = scalar_select %p435, %s25, 1
        %p437 = scmp.lt.s32.totalorder %s27, 2
        %s438 = scalar_select %p437, %s27, 2
        %p439 = scmp.lt.s32.totalorder %s434, 1
        %s440 = scalar_select %p439, %s434, 1
        %s441 = smul.addr %s438, 2
        %s442 = sadd.s32 %s440, %s441
        %s443 = smul.addr %s436, 6
        %s444 = sadd.s32 %s442, %s443
        %s445 = smul.addr %s444, 8
        %s446 = scalar_lea.vmem %s1, %s445
        %s447 = smul.u32 2, %s26
        %p448 = scmp.lt.s32.totalorder %s25, 1
        %s449 = scalar_select %p448, %s25, 1
        %p450 = scmp.lt.s32.totalorder %s27, 2
        %s451 = scalar_select %p450, %s27, 2
        %p452 = scmp.lt.s32.totalorder %s26, 0
        %s453 = scalar_select %p452, %s26, 0
        %s454 = smul.addr %s453, 2
        %s455 = smul.addr %s451, 2
        %s456 = sadd.s32 %s454, %s455
        %s457 = smul.addr %s449, 6
        %s458 = sadd.s32 %s456, %s457
        %s459 = smul.addr %s458, 8
        %s460 = scalar_lea.vmem %s2, %s459
        %p461 = scmp.lt.s32.totalorder %s25, 1
        %s462 = scalar_select %p461, %s25, 1
        %p463 = scmp.lt.s32.totalorder %s27, 2
        %s464 = scalar_select %p463, %s27, 2
        %p465 = scmp.lt.s32.totalorder %s26, 0
        %s466 = scalar_select %p465, %s26, 0
        %s467 = smul.addr %s466, 2
        %s468 = smul.addr %s464, 2
        %s469 = sadd.s32 %s467, %s468
        %s470 = smul.addr %s462, 6
        %s471 = sadd.s32 %s469, %s470
        %s472 = smul.addr %s471, 8
        %s473 = scalar_lea.vmem %s3, %s472
        %s474 = smul.u32 2, %s26
        %p475 = scmp.lt.s32.totalorder %s25, 1
        %s476 = scalar_select %p475, %s25, 1
        %p477 = scmp.lt.s32.totalorder %s474, 1
        %s478 = scalar_select %p477, %s474, 1
        %s479 = smul.addr %s476, 2
        %s480 = sadd.s32 %s478, %s479
        %s481 = smul.addr %s480, 8
        %s482 = scalar_lea.vmem %s4, %s481
        %s483 = smul.u32 2, %s26
        %v484 = vld [vmem:[%s460] sm:$0x1f]
        %vm485 = vcmask 126976
        %486 = vst.msk [vmem:[#allocation2] sm:$0x1f] %vm485, %v484
        %v487 = vld [vmem:[%s432] sm:$0xff]
        %v488 = vld [vmem:[%s432 + $0x8] sm:$0xff]
        %vm489 = vcmask 130048
        %490 = vst.msk [vmem:[#allocation2 + $0x5] sm:$0xff] %vm489, %v487
        %491 = vst.msk [vmem:[#allocation2 + $0xd] sm:$0xff] %vm489, %v488
        %v492 = vld [vmem:[%s460 + $0x5] sm:$0x1f]
        %493 = vst.msk [vmem:[#allocation2 + $0x15] sm:$0x1f] %vm485, %v492
        %v494 = vld [vmem:[%s473] sm:$0x1f]
        %495 = vst.msk [vmem:[#allocation3] sm:$0x1f] %vm485, %v494
        %v496 = vld [vmem:[%s446] sm:$0xff]
        %v497 = vld [vmem:[%s446 + $0x8] sm:$0xff]
        %498 = vst.msk [vmem:[#allocation3 + $0x5] sm:$0xff] %vm489, %v496
        %499 = vst.msk [vmem:[#allocation3 + $0xd] sm:$0xff] %vm489, %v497
        %v500 = vld [vmem:[%s473 + $0x5] sm:$0x1f]
        %501 = vst.msk [vmem:[#allocation3 + $0x15] sm:$0x1f] %vm485, %v500
        %v502 = vld [vmem:[#allocation2] sm:$0xff]
        %v503 = vld [vmem:[#allocation2 + $0x8] sm:$0xff]
        %v504 = vld [vmem:[#allocation2 + $0x10] sm:$0xff]
        %v505 = vld [vmem:[#allocation2 + $0x18] sm:$0x3]
        %v506 = vld [vmem:[#allocation3] sm:$0xff]
        %v507 = vld [vmem:[#allocation3 + $0x8] sm:$0xff]
        %v508 = vld [vmem:[#allocation3 + $0x10] sm:$0xff]
        %v509 = vld [vmem:[#allocation3 + $0x18] sm:$0x3]
        %v510 = vmul.f32 %v502, %v502
        %v511 = vmul.f32 %v503, %v503
        %v512 = vmul.f32 %v504, %v504
        %v513 = vmul.f32 %v505, %v505
        %514 = vst.msk [vmem:[#allocation4] sm:$0xff] %vm489, %v510
        %515 = vst.msk [vmem:[#allocation4 + $0x8] sm:$0xff] %vm489, %v511
        %516 = vst.msk [vmem:[#allocation4 + $0x10] sm:$0xff] %vm489, %v512
        %vm517 = vcmask 123904
        %518 = vst.msk [vmem:[#allocation4 + $0x18] sm:$0x3] %vm517, %v513
        %v519 = vmul.f32 %v506, %v506
        %v520 = vmul.f32 %v507, %v507
        %v521 = vmul.f32 %v508, %v508
        %v522 = vmul.f32 %v509, %v509
        %523 = vst.msk [vmem:[#allocation5] sm:$0xff] %vm489, %v519
        %524 = vst.msk [vmem:[#allocation5 + $0x8] sm:$0xff] %vm489, %v520
        %525 = vst.msk [vmem:[#allocation5 + $0x10] sm:$0xff] %vm489, %v521
        %526 = vst.msk [vmem:[#allocation5 + $0x18] sm:$0x3] %vm517, %v522
        %v527 = vmul.f32 %v502, %v506
        %v528 = vmul.f32 %v503, %v507
        %v529 = vmul.f32 %v504, %v508
        %v530 = vmul.f32 %v505, %v509
        %531 = vst.msk [vmem:[#allocation6] sm:$0xff] %vm489, %v527
        %532 = vst.msk [vmem:[#allocation6 + $0x8] sm:$0xff] %vm489, %v528
        %533 = vst.msk [vmem:[#allocation6 + $0x10] sm:$0xff] %vm489, %v529
        %534 = vst.msk [vmem:[#allocation6 + $0x18] sm:$0x3] %vm517, %v530
        %v535 = vld [vmem:[%s5] sm:$0xff]
        %v536 = vld [vmem:[%s5 + $0x8] sm:$0xff]
        %v537 = vld [vmem:[#allocation2] sm:$0xff]
        %v538 = vld [vmem:[#allocation2 + $0x8] sm:$0xff]
        %v539 = vmul.f32 %v537, 0.0010283801
        %v540 = vmul.f32 %v538, 0.0010283801
        %v541 = vld [vmem:[#allocation2 + $0x1] sm:$0xff]
        %v542 = vld [vmem:[#allocation2 + $0x9] sm:$0xff]
        %v543 = vmul.f32 %v541, 0.007598758
        %v544 = vmul.f32 %v542, 0.007598758
        %v545 = vadd.f32 %v539, %v543
        %v546 = vadd.f32 %v540, %v544
        %v547 = vld [vmem:[#allocation2 + $0x2] sm:$0xff]
        %v548 = vld [vmem:[#allocation2 + $0xa] sm:$0xff]
        %v549 = vmul.f32 %v547, 0.036000773
        %v550 = vmul.f32 %v548, 0.036000773
        %v551 = vadd.f32 %v545, %v549
        %v552 = vadd.f32 %v546, %v550
        %v553 = vld [vmem:[#allocation2 + $0x3] sm:$0xff]
        %v554 = vld [vmem:[#allocation2 + $0xb] sm:$0xff]
        %v555 = vmul.f32 %v553, 0.10936069
        %v556 = vmul.f32 %v554, 0.10936069
        %v557 = vadd.f32 %v551, %v555
        %v558 = vadd.f32 %v552, %v556
        %v559 = vld [vmem:[#allocation2 + $0x4] sm:$0xff]
        %v560 = vld [vmem:[#allocation2 + $0xc] sm:$0xff]
        %v561 = vmul.f32 %v559, 0.21300554
        %v562 = vmul.f32 %v560, 0.21300554
        %v563 = vadd.f32 %v557, %v561
        %v564 = vadd.f32 %v558, %v562
        %v565 = vld [vmem:[#allocation2 + $0x5] sm:$0xff]
        %v566 = vld [vmem:[#allocation2 + $0xd] sm:$0xff]
        %v567 = vmul.f32 %v565, 0.26601171
        %v568 = vmul.f32 %v566, 0.26601171
        %v569 = vadd.f32 %v563, %v567
        %v570 = vadd.f32 %v564, %v568
        %v571 = vld [vmem:[#allocation2 + $0x6] sm:$0xff]
        %v572 = vld [vmem:[#allocation2 + $0xe] sm:$0xff]
        %v573 = vmul.f32 %v571, 0.21300554
        %v574 = vmul.f32 %v572, 0.21300554
        %v575 = vadd.f32 %v569, %v573
        %v576 = vadd.f32 %v570, %v574
        %v577 = vld [vmem:[#allocation2 + $0x7] sm:$0xff]
        %v578 = vld [vmem:[#allocation2 + $0xf] sm:$0xff]
        %v579 = vmul.f32 %v577, 0.10936069
        %v580 = vmul.f32 %v578, 0.10936069
        %v581 = vadd.f32 %v575, %v579
        %v582 = vadd.f32 %v576, %v580
        %v583 = vld [vmem:[#allocation2 + $0x10] sm:$0xff]
        %v584 = vmul.f32 %v538, 0.036000773
        %v585 = vmul.f32 %v583, 0.036000773
        %v586 = vadd.f32 %v581, %v584
        %v587 = vadd.f32 %v582, %v585
        %v588 = vld [vmem:[#allocation2 + $0x11] sm:$0xff]
        %v589 = vmul.f32 %v588, 0.007598758
        %v590 = vadd.f32 %v586, %v544
        %v591 = vadd.f32 %v587, %v589
        %v592 = vld [vmem:[#allocation2 + $0x12] sm:$0xff]
        %v593 = vmul.f32 %v548, 0.0010283801
        %v594 = vmul.f32 %v592, 0.0010283801
        %v595 = vadd.f32 %v590, %v593
        %v596 = vadd.f32 %v591, %v594
        %v598 = vsel %vm489, %v595, 0
        %v601 = vsel %vm489, %v596, 0
        %603 = vmatprep.subr.mxu0 0.0
        %v604 = vand.u32 %v535, 4294901760
        %605 = vmatpush1.msra.mxu0 %v604
        %606 = vmatprep.subr.mxu0 0.0
        %v607 = vand.u32 %v536, 4294901760
        %608 = vmatpush1.msra.mxu0 %v607
        %609 = vmatprep.subr.mxu0 0.0
        %610 = vmatpush1.msra.mxu0 0.0
        %611 = vmatprep.subr.mxu0 0.0
        %612 = vmatpush1.msra.mxu0 0.0
        %613 = vmatprep.subr.mxu0 0.0
        %614 = vmatpush1.msra.mxu0 0.0
        %615 = vmatprep.subr.mxu0 0.0
        %616 = vmatpush1.msra.mxu0 0.0
        %617 = vmatprep.subr.mxu0 0.0
        %618 = vmatpush1.msra.mxu0 0.0
        %619 = vmatprep.subr.mxu0 0.0
        %620 = vmatpush1.msra.mxu0 0.0
        %621 = vmatprep.subr.mxu0 0.0
        %622 = vmatpush1.msra.mxu0 0.0
        %623 = vmatprep.subr.mxu0 0.0
        %624 = vmatpush1.msra.mxu0 0.0
        %625 = vmatprep.subr.mxu0 0.0
        %626 = vmatpush1.msra.mxu0 0.0
        %627 = vmatprep.subr.mxu0 0.0
        %628 = vmatpush1.msra.mxu0 0.0
        %629 = vmatprep.subr.mxu0 0.0
        %630 = vmatpush1.msra.mxu0 0.0
        %631 = vmatprep.subr.mxu0 0.0
        %632 = vmatpush1.msra.mxu0 0.0
        %633 = vmatprep.subr.mxu0 0.0
        %634 = vmatpush1.msra.mxu0 0.0
        %635 = vmatprep.subr.mxu0 0.0
        %636 = vmatpush1.msra.mxu0 0.0
        %637 = vmatprep.subr.mxu0 0.0
        %638 = vmatpush1.msra.mxu0 0.0
        %639 = vmatprep.subr.mxu0 0.0
        %640 = vmatpush1.msra.mxu0 0.0
        %641 = vmatprep.subr.mxu0 0.0
        %642 = vmatpush1.msra.mxu0 0.0
        %643 = vmatprep.subr.mxu0 0.0
        %644 = vmatpush1.msra.mxu0 0.0
        %645 = vmatprep.subr.mxu0 0.0
        %646 = vmatpush1.msra.mxu0 0.0
        %647 = vmatprep.subr.mxu0 0.0
        %648 = vmatpush1.msra.mxu0 0.0
        %649 = vmatprep.subr.mxu0 0.0
        %650 = vmatpush1.msra.mxu0 0.0
        %651 = vmatprep.subr.mxu0 0.0
        %652 = vmatpush1.msra.mxu0 0.0
        %653 = vmatprep.subr.mxu0 0.0
        %654 = vmatpush1.msra.mxu0 0.0
        %655 = vmatprep.subr.mxu0 0.0
        %656 = vmatpush1.msra.mxu0 0.0
        %657 = vmatprep.subr.mxu0 0.0
        %658 = vmatpush1.msra.mxu0 0.0
        %659 = vmatprep.subr.mxu0 0.0
        %660 = vmatpush1.msra.mxu0 0.0
        %661 = vmatprep.subr.mxu0 0.0
        %662 = vmatpush1.msra.mxu0 0.0
        %663 = vmatprep.subr.mxu0 0.0
        %664 = vmatpush1.msra.mxu0 0.0
        %665 = vmatprep.subr.mxu0 0.0
        %666 = vmatpush1.msra.mxu0 0.0
        %667 = vmatprep.subr.mxu0 0.0
        %668 = vmatpush1.msra.mxu0 0.0
        %669 = vmatprep.mubr.f32.mxu0 0.0
        %v670 = vand.u32 %v598, 4294901760
        %v671 = vsub.f32 %v598, %v670
        %v672 = vand.u32 %v671, 4294901760
        %v673 = vsub.f32 %v671, %v672
        %v674 = vand.u32 %v673, 4294901760
        %675 = vmatmul.mubr.f32.gmra.mrb[0].mxu0 %v674
        %v676 = vpop.f32.mrb[0].mxu0
        %v677 = vadd.f32 0.0, %v676
        %v678 = vpop.f32.mrb[0].mxu0
        %679 = vmatprep.mubr.f32.mxu0 0.0
        %v680 = vand.u32 %v601, 4294901760
        %v681 = vsub.f32 %v601, %v680
        %v682 = vand.u32 %v681, 4294901760
        %v683 = vsub.f32 %v681, %v682
        %v684 = vand.u32 %v683, 4294901760
        %685 = vmatmul.mubr.f32.gmra.mrb[0].mxu0 %v684
        %v686 = vpop.f32.mrb[0].mxu0
        %v687 = vadd.f32 0.0, %v686
        %v688 = vpop.f32.mrb[0].mxu0
        %689 = vdwg.mxu0
        %690 = vmatprep.subr.mxu0 0.0
        %v691 = vand.u32 %v535, 4294901760
        %v692 = vsub.f32 %v535, %v691
        %v693 = vand.u32 %v692, 4294901760
        %v694 = vsub.f32 %v692, %v693
        %v695 = vand.u32 %v694, 4294901760
        %696 = vmatpush1.msra.mxu0 %v695
        %697 = vmatprep.subr.mxu0 0.0
        %v698 = vand.u32 %v536, 4294901760
        %v699 = vsub.f32 %v536, %v698
        %v700 = vand.u32 %v699, 4294901760
        %v701 = vsub.f32 %v699, %v700
        %v702 = vand.u32 %v701, 4294901760
        %703 = vmatpush1.msra.mxu0 %v702
        %704 = vmatprep.subr.mxu0 0.0
        %705 = vmatpush1.msra.mxu0 0.0
        %706 = vmatprep.subr.mxu0 0.0
        %707 = vmatpush1.msra.mxu0 0.0
        %708 = vmatprep.subr.mxu0 0.0
        %709 = vmatpush1.msra.mxu0 0.0
        %710 = vmatprep.subr.mxu0 0.0
        %711 = vmatpush1.msra.mxu0 0.0
        %712 = vmatprep.subr.mxu0 0.0
        %713 = vmatpush1.msra.mxu0 0.0
        %714 = vmatprep.subr.mxu0 0.0
        %715 = vmatpush1.msra.mxu0 0.0
        %716 = vmatprep.subr.mxu0 0.0
        %717 = vmatpush1.msra.mxu0 0.0
        %718 = vmatprep.subr.mxu0 0.0
        %719 = vmatpush1.msra.mxu0 0.0
        %720 = vmatprep.subr.mxu0 0.0
        %721 = vmatpush1.msra.mxu0 0.0
        %722 = vmatprep.subr.mxu0 0.0
        %723 = vmatpush1.msra.mxu0 0.0
        %724 = vmatprep.subr.mxu0 0.0
        %725 = vmatpush1.msra.mxu0 0.0
        %726 = vmatprep.subr.mxu0 0.0
        %727 = vmatpush1.msra.mxu0 0.0
        %728 = vmatprep.subr.mxu0 0.0
        %729 = vmatpush1.msra.mxu0 0.0
        %730 = vmatprep.subr.mxu0 0.0
        %731 = vmatpush1.msra.mxu0 0.0
        %732 = vmatprep.subr.mxu0 0.0
        %733 = vmatpush1.msra.mxu0 0.0
        %734 = vmatprep.subr.mxu0 0.0
        %735 = vmatpush1.msra.mxu0 0.0
        %736 = vmatprep.subr.mxu0 0.0
        %737 = vmatpush1.msra.mxu0 0.0
        %738 = vmatprep.subr.mxu0 0.0
        %739 = vmatpush1.msra.mxu0 0.0
        %740 = vmatprep.subr.mxu0 0.0
        %741 = vmatpush1.msra.mxu0 0.0
        %742 = vmatprep.subr.mxu0 0.0
        %743 = vmatpush1.msra.mxu0 0.0
        %744 = vmatprep.subr.mxu0 0.0
        %745 = vmatpush1.msra.mxu0 0.0
        %746 = vmatprep.subr.mxu0 0.0
        %747 = vmatpush1.msra.mxu0 0.0
        %748 = vmatprep.subr.mxu0 0.0
        %749 = vmatpush1.msra.mxu0 0.0
        %750 = vmatprep.subr.mxu0 0.0
        %751 = vmatpush1.msra.mxu0 0.0
        %752 = vmatprep.subr.mxu0 0.0
        %753 = vmatpush1.msra.mxu0 0.0
        %754 = vmatprep.subr.mxu0 0.0
        %755 = vmatpush1.msra.mxu0 0.0
        %756 = vmatprep.subr.mxu0 0.0
        %757 = vmatpush1.msra.mxu0 0.0
        %758 = vmatprep.subr.mxu0 0.0
        %759 = vmatpush1.msra.mxu0 0.0
        %760 = vmatprep.subr.mxu0 0.0
        %761 = vmatpush1.msra.mxu0 0.0
        %762 = vmatprep.subr.mxu0 0.0
        %763 = vmatpush1.msra.mxu0 0.0
        %764 = vmatprep.mubr.f32.mxu0 0.0
        %v765 = vand.u32 %v598, 4294901760
        %766 = vmatmul.mubr.f32.gmra.mrb[0].mxu0 %v765
        %v767 = vpop.f32.mrb[0].mxu0
        %v768 = vadd.f32 %v677, %v767
        %v769 = vpop.f32.mrb[0].mxu0
        %770 = vmatprep.mubr.f32.mxu0 0.0
        %v771 = vand.u32 %v601, 4294901760
        %772 = vmatmul.mubr.f32.gmra.mrb[0].mxu0 %v771
        %v773 = vpop.f32.mrb[0].mxu0
        %v774 = vadd.f32 %v687, %v773
        %v775 = vpop.f32.mrb[0].mxu0
        %776 = vdwg.mxu0
        %777 = vmatprep.subr.mxu0 0.0
        %v778 = vand.u32 %v535, 4294901760
        %v779 = vsub.f32 %v535, %v778
        %780 = vmatpush1.msra.mxu0 %v779
        %781 = vmatprep.subr.mxu0 0.0
        %v782 = vand.u32 %v536, 4294901760
        %v783 = vsub.f32 %v536, %v782
        %784 = vmatpush1.msra.mxu0 %v783
        %785 = vmatprep.subr.mxu0 0.0
        %786 = vmatpush1.msra.mxu0 0.0
        %787 = vmatprep.subr.mxu0 0.0
        %788 = vmatpush1.msra.mxu0 0.0
        %789 = vmatprep.subr.mxu0 0.0
        %790 = vmatpush1.msra.mxu0 0.0
        %791 = vmatprep.subr.mxu0 0.0
        %792 = vmatpush1.msra.mxu0 0.0
        %793 = vmatprep.subr.mxu0 0.0
        %794 = vmatpush1.msra.mxu0 0.0
        %795 = vmatprep.subr.mxu0 0.0
        %796 = vmatpush1.msra.mxu0 0.0
        %797 = vmatprep.subr.mxu0 0.0
        %798 = vmatpush1.msra.mxu0 0.0
        %799 = vmatprep.subr.mxu0 0.0
        %800 = vmatpush1.msra.mxu0 0.0
        %801 = vmatprep.subr.mxu0 0.0
        %802 = vmatpush1.msra.mxu0 0.0
        %803 = vmatprep.subr.mxu0 0.0
        %804 = vmatpush1.msra.mxu0 0.0
        %805 = vmatprep.subr.mxu0 0.0
        %806 = vmatpush1.msra.mxu0 0.0
        %807 = vmatprep.subr.mxu0 0.0
        %808 = vmatpush1.msra.mxu0 0.0
        %809 = vmatprep.subr.mxu0 0.0
        %810 = vmatpush1.msra.mxu0 0.0
        %811 = vmatprep.subr.mxu0 0.0
        %812 = vmatpush1.msra.mxu0 0.0
        %813 = vmatprep.subr.mxu0 0.0
        %814 = vmatpush1.msra.mxu0 0.0
        %815 = vmatprep.subr.mxu0 0.0
        %816 = vmatpush1.msra.mxu0 0.0
        %817 = vmatprep.subr.mxu0 0.0
        %818 = vmatpush1.msra.mxu0 0.0
        %819 = vmatprep.subr.mxu0 0.0
        %820 = vmatpush1.msra.mxu0 0.0
        %821 = vmatprep.subr.mxu0 0.0
        %822 = vmatpush1.msra.mxu0 0.0
        %823 = vmatprep.subr.mxu0 0.0
        %824 = vmatpush1.msra.mxu0 0.0
        %825 = vmatprep.subr.mxu0 0.0
        %826 = vmatpush1.msra.mxu0 0.0
        %827 = vmatprep.subr.mxu0 0.0
        %828 = vmatpush1.msra.mxu0 0.0
        %829 = vmatprep.subr.mxu0 0.0
        %830 = vmatpush1.msra.mxu0 0.0
        %831 = vmatprep.subr.mxu0 0.0
        %832 = vmatpush1.msra.mxu0 0.0
        %833 = vmatprep.subr.mxu0 0.0
        %834 = vmatpush1.msra.mxu0 0.0
        %835 = vmatprep.subr.mxu0 0.0
        %836 = vmatpush1.msra.mxu0 0.0
        %837 = vmatprep.subr.mxu0 0.0
        %838 = vmatpush1.msra.mxu0 0.0
        %839 = vmatprep.subr.mxu0 0.0
        %840 = vmatpush1.msra.mxu0 0.0
        %841 = vmatprep.subr.mxu0 0.0
        %842 = vmatpush1.msra.mxu0 0.0
        %843 = vmatprep.subr.mxu0 0.0
        %844 = vmatpush1.msra.mxu0 0.0
        %845 = vmatprep.mubr.f32.mxu0 0.0
        %v846 = vand.u32 %v598, 4294901760
        %v847 = vsub.f32 %v598, %v846
        %848 = vmatmul.mubr.f32.gmra.mrb[0].mxu0 %v847
        %v849 = vpop.f32.mrb[0].mxu0
        %v850 = vadd.f32 %v768, %v849
        %v851 = vpop.f32.mrb[0].mxu0
        %852 = vmatprep.mubr.f32.mxu0 0.0
        %v853 = vand.u32 %v601, 4294901760
        %v854 = vsub.f32 %v601, %v853
        %855 = vmatmul.mubr.f32.gmra.mrb[0].mxu0 %v854
        %v856 = vpop.f32.mrb[0].mxu0
        %v857 = vadd.f32 %v774, %v856
        %v858 = vpop.f32.mrb[0].mxu0
        %859 = vdwg.mxu0
        %860 = vmatprep.subr.mxu0 0.0
        %v861 = vand.u32 %v535, 4294901760
        %862 = vmatpush1.msra.mxu0 %v861
        %863 = vmatprep.subr.mxu0 0.0
        %v864 = vand.u32 %v536, 4294901760
        %865 = vmatpush1.msra.mxu0 %v864
        %866 = vmatprep.subr.mxu0 0.0
        %867 = vmatpush1.msra.mxu0 0.0
        %868 = vmatprep.subr.mxu0 0.0
        %869 = vmatpush1.msra.mxu0 0.0
        %870 = vmatprep.subr.mxu0 0.0
        %871 = vmatpush1.msra.mxu0 0.0
        %872 = vmatprep.subr.mxu0 0.0
        %873 = vmatpush1.msra.mxu0 0.0
        %874 = vmatprep.subr.mxu0 0.0
        %875 = vmatpush1.msra.mxu0 0.0
        %876 = vmatprep.subr.mxu0 0.0
        %877 = vmatpush1.msra.mxu0 0.0
        %878 = vmatprep.subr.mxu0 0.0
        %879 = vmatpush1.msra.mxu0 0.0
        %880 = vmatprep.subr.mxu0 0.0
        %881 = vmatpush1.msra.mxu0 0.0
        %882 = vmatprep.subr.mxu0 0.0
        %883 = vmatpush1.msra.mxu0 0.0
        %884 = vmatprep.subr.mxu0 0.0
        %885 = vmatpush1.msra.mxu0 0.0
        %886 = vmatprep.subr.mxu0 0.0
        %887 = vmatpush1.msra.mxu0 0.0
        %888 = vmatprep.subr.mxu0 0.0
        %889 = vmatpush1.msra.mxu0 0.0
        %890 = vmatprep.subr.mxu0 0.0
        %891 = vmatpush1.msra.mxu0 0.0
        %892 = vmatprep.subr.mxu0 0.0
        %893 = vmatpush1.msra.mxu0 0.0
        %894 = vmatprep.subr.mxu0 0.0
        %895 = vmatpush1.msra.mxu0 0.0
        %896 = vmatprep.subr.mxu0 0.0
        %897 = vmatpush1.msra.mxu0 0.0
        %898 = vmatprep.subr.mxu0 0.0
        %899 = vmatpush1.msra.mxu0 0.0
        %900 = vmatprep.subr.mxu0 0.0
        %901 = vmatpush1.msra.mxu0 0.0
        %902 = vmatprep.subr.mxu0 0.0
        %903 = vmatpush1.msra.mxu0 0.0
        %904 = vmatprep.subr.mxu0 0.0
        %905 = vmatpush1.msra.mxu0 0.0
        %906 = vmatprep.subr.mxu0 0.0
        %907 = vmatpush1.msra.mxu0 0.0
        %908 = vmatprep.subr.mxu0 0.0
        %909 = vmatpush1.msra.mxu0 0.0
        %910 = vmatprep.subr.mxu0 0.0
        %911 = vmatpush1.msra.mxu0 0.0
        %912 = vmatprep.subr.mxu0 0.0
        %913 = vmatpush1.msra.mxu0 0.0
        %914 = vmatprep.subr.mxu0 0.0
        %915 = vmatpush1.msra.mxu0 0.0
        %916 = vmatprep.subr.mxu0 0.0
        %917 = vmatpush1.msra.mxu0 0.0
        %918 = vmatprep.subr.mxu0 0.0
        %919 = vmatpush1.msra.mxu0 0.0
        %920 = vmatprep.subr.mxu0 0.0
        %921 = vmatpush1.msra.mxu0 0.0
        %922 = vmatprep.subr.mxu0 0.0
        %923 = vmatpush1.msra.mxu0 0.0
        %924 = vmatprep.subr.mxu0 0.0
        %925 = vmatpush1.msra.mxu0 0.0
        %926 = vmatprep.mubr.f32.mxu0 0.0
        %v927 = vand.u32 %v598, 4294901760
        %v928 = vsub.f32 %v598, %v927
        %v929 = vand.u32 %v928, 4294901760
        %930 = vmatmul.mubr.f32.gmra.mrb[0].mxu0 %v929
        %v931 = vpop.f32.mrb[0].mxu0
        %v932 = vadd.f32 %v850, %v931
        %v933 = vpop.f32.mrb[0].mxu0
        %934 = vmatprep.mubr.f32.mxu0 0.0
        %v935 = vand.u32 %v601, 4294901760
        %v936 = vsub.f32 %v601, %v935
        %v937 = vand.u32 %v936, 4294901760
        %938 = vmatmul.mubr.f32.gmra.mrb[0].mxu0 %v937
        %v939 = vpop.f32.mrb[0].mxu0
        %v940 = vadd.f32 %v857, %v939
        %v941 = vpop.f32.mrb[0].mxu0
        %942 = vdwg.mxu0
        %943 = vmatprep.subr.mxu0 0.0
        %v944 = vand.u32 %v535, 4294901760
        %v945 = vsub.f32 %v535, %v944
        %v946 = vand.u32 %v945, 4294901760
        %947 = vmatpush1.msra.mxu0 %v946
        %948 = vmatprep.subr.mxu0 0.0
        %v949 = vand.u32 %v536, 4294901760
        %v950 = vsub.f32 %v536, %v949
        %v951 = vand.u32 %v950, 4294901760
        %952 = vmatpush1.msra.mxu0 %v951
        %953 = vmatprep.subr.mxu0 0.0
        %954 = vmatpush1.msra.mxu0 0.0
        %955 = vmatprep.subr.mxu0 0.0
        %956 = vmatpush1.msra.mxu0 0.0
        %957 = vmatprep.subr.mxu0 0.0
        %958 = vmatpush1.msra.mxu0 0.0
        %959 = vmatprep.subr.mxu0 0.0
        %960 = vmatpush1.msra.mxu0 0.0
        %961 = vmatprep.subr.mxu0 0.0
        %962 = vmatpush1.msra.mxu0 0.0
        %963 = vmatprep.subr.mxu0 0.0
        %964 = vmatpush1.msra.mxu0 0.0
        %965 = vmatprep.subr.mxu0 0.0
        %966 = vmatpush1.msra.mxu0 0.0
        %967 = vmatprep.subr.mxu0 0.0
        %968 = vmatpush1.msra.mxu0 0.0
        %969 = vmatprep.subr.mxu0 0.0
        %970 = vmatpush1.msra.mxu0 0.0
        %971 = vmatprep.subr.mxu0 0.0
        %972 = vmatpush1.msra.mxu0 0.0
        %973 = vmatprep.subr.mxu0 0.0
        %974 = vmatpush1.msra.mxu0 0.0
        %975 = vmatprep.subr.mxu0 0.0
        %976 = vmatpush1.msra.mxu0 0.0
        %977 = vmatprep.subr.mxu0 0.0
        %978 = vmatpush1.msra.mxu0 0.0
        %979 = vmatprep.subr.mxu0 0.0
        %980 = vmatpush1.msra.mxu0 0.0
        %981 = vmatprep.subr.mxu0 0.0
        %982 = vmatpush1.msra.mxu0 0.0
        %983 = vmatprep.subr.mxu0 0.0
        %984 = vmatpush1.msra.mxu0 0.0
        %985 = vmatprep.subr.mxu0 0.0
        %986 = vmatpush1.msra.mxu0 0.0
        %987 = vmatprep.subr.mxu0 0.0
        %988 = vmatpush1.msra.mxu0 0.0
        %989 = vmatprep.subr.mxu0 0.0
        %990 = vmatpush1.msra.mxu0 0.0
        %991 = vmatprep.subr.mxu0 0.0
        %992 = vmatpush1.msra.mxu0 0.0
        %993 = vmatprep.subr.mxu0 0.0
        %994 = vmatpush1.msra.mxu0 0.0
        %995 = vmatprep.subr.mxu0 0.0
        %996 = vmatpush1.msra.mxu0 0.0
        %997 = vmatprep.subr.mxu0 0.0
        %998 = vmatpush1.msra.mxu0 0.0
        %999 = vmatprep.subr.mxu0 0.0
        %1000 = vmatpush1.msra.mxu0 0.0
        %1001 = vmatprep.subr.mxu0 0.0
        %1002 = vmatpush1.msra.mxu0 0.0
        %1003 = vmatprep.subr.mxu0 0.0
        %1004 = vmatpush1.msra.mxu0 0.0
        %1005 = vmatprep.subr.mxu0 0.0
        %1006 = vmatpush1.msra.mxu0 0.0
        %1007 = vmatprep.subr.mxu0 0.0
        %1008 = vmatpush1.msra.mxu0 0.0
        %1009 = vmatprep.subr.mxu0 0.0
        %1010 = vmatpush1.msra.mxu0 0.0
        %1011 = vmatprep.subr.mxu0 0.0
        %1012 = vmatpush1.msra.mxu0 0.0
        %1013 = vmatprep.mubr.f32.mxu0 0.0
        %v1014 = vand.u32 %v598, 4294901760
        %1015 = vmatmul.mubr.f32.gmra.mrb[0].mxu0 %v1014
        %v1016 = vpop.f32.mrb[0].mxu0
        %v1017 = vadd.f32 %v932, %v1016
        %v1018 = vpop.f32.mrb[0].mxu0
        %1019 = vmatprep.mubr.f32.mxu0 0.0
        %v1020 = vand.u32 %v601, 4294901760
        %1021 = vmatmul.mubr.f32.gmra.mrb[0].mxu0 %v1020
        %v1022 = vpop.f32.mrb[0].mxu0
        %v1023 = vadd.f32 %v940, %v1022
        %v1024 = vpop.f32.mrb[0].mxu0
        %1025 = vdwg.mxu0
        %1026 = vmatprep.subr.mxu0 0.0
        %v1027 = vand.u32 %v535, 4294901760
        %1028 = vmatpush1.msra.mxu0 %v1027
        %1029 = vmatprep.subr.mxu0 0.0
        %v1030 = vand.u32 %v536, 4294901760
        %1031 = vmatpush1.msra.mxu0 %v1030
        %1032 = vmatprep.subr.mxu0 0.0
        %1033 = vmatpush1.msra.mxu0 0.0
        %1034 = vmatprep.subr.mxu0 0.0
        %1035 = vmatpush1.msra.mxu0 0.0
        %1036 = vmatprep.subr.mxu0 0.0
        %1037 = vmatpush1.msra.mxu0 0.0
        %1038 = vmatprep.subr.mxu0 0.0
        %1039 = vmatpush1.msra.mxu0 0.0
        %1040 = vmatprep.subr.mxu0 0.0
        %1041 = vmatpush1.msra.mxu0 0.0
        %1042 = vmatprep.subr.mxu0 0.0
        %1043 = vmatpush1.msra.mxu0 0.0
        %1044 = vmatprep.subr.mxu0 0.0
        %1045 = vmatpush1.msra.mxu0 0.0
        %1046 = vmatprep.subr.mxu0 0.0
        %1047 = vmatpush1.msra.mxu0 0.0
        %1048 = vmatprep.subr.mxu0 0.0
        %1049 = vmatpush1.msra.mxu0 0.0
        %1050 = vmatprep.subr.mxu0 0.0
        %1051 = vmatpush1.msra.mxu0 0.0
        %1052 = vmatprep.subr.mxu0 0.0
        %1053 = vmatpush1.msra.mxu0 0.0
        %1054 = vmatprep.subr.mxu0 0.0
        %1055 = vmatpush1.msra.mxu0 0.0
        %1056 = vmatprep.subr.mxu0 0.0
        %1057 = vmatpush1.msra.mxu0 0.0
        %1058 = vmatprep.subr.mxu0 0.0
        %1059 = vmatpush1.msra.mxu0 0.0
        %1060 = vmatprep.subr.mxu0 0.0
        %1061 = vmatpush1.msra.mxu0 0.0
        %1062 = vmatprep.subr.mxu0 0.0
        %1063 = vmatpush1.msra.mxu0 0.0
        %1064 = vmatprep.subr.mxu0 0.0
        %1065 = vmatpush1.msra.mxu0 0.0
        %1066 = vmatprep.subr.mxu0 0.0
        %1067 = vmatpush1.msra.mxu0 0.0
        %1068 = vmatprep.subr.mxu0 0.0
        %1069 = vmatpush1.msra.mxu0 0.0
        %1070 = vmatprep.subr.mxu0 0.0
        %1071 = vmatpush1.msra.mxu0 0.0
        %1072 = vmatprep.subr.mxu0 0.0
        %1073 = vmatpush1.msra.mxu0 0.0
        %1074 = vmatprep.subr.mxu0 0.0
        %1075 = vmatpush1.msra.mxu0 0.0
        %1076 = vmatprep.subr.mxu0 0.0
        %1077 = vmatpush1.msra.mxu0 0.0
        %1078 = vmatprep.subr.mxu0 0.0
        %1079 = vmatpush1.msra.mxu0 0.0
        %1080 = vmatprep.subr.mxu0 0.0
        %1081 = vmatpush1.msra.mxu0 0.0
        %1082 = vmatprep.subr.mxu0 0.0
        %1083 = vmatpush1.msra.mxu0 0.0
        %1084 = vmatprep.subr.mxu0 0.0
        %1085 = vmatpush1.msra.mxu0 0.0
        %1086 = vmatprep.subr.mxu0 0.0
        %1087 = vmatpush1.msra.mxu0 0.0
        %1088 = vmatprep.subr.mxu0 0.0
        %1089 = vmatpush1.msra.mxu0 0.0
        %1090 = vmatprep.subr.mxu0 0.0
        %1091 = vmatpush1.msra.mxu0 0.0
        %1092 = vmatprep.mubr.f32.mxu0 0.0
        %v1093 = vand.u32 %v598, 4294901760
        %1094 = vmatmul.mubr.f32.gmra.mrb[0].mxu0 %v1093
        %v1095 = vpop.f32.mrb[0].mxu0
        %v1096 = vadd.f32 %v1017, %v1095
        %v1097 = vpop.f32.mrb[0].mxu0
        %1098 = vmatprep.mubr.f32.mxu0 0.0
        %v1099 = vand.u32 %v601, 4294901760
        %1100 = vmatmul.mubr.f32.gmra.mrb[0].mxu0 %v1099
        %v1101 = vpop.f32.mrb[0].mxu0
        %v1102 = vadd.f32 %v1023, %v1101
        %v1103 = vpop.f32.mrb[0].mxu0
        %1104 = vdwg.mxu0
        %v1105 = vld [vmem:[#allocation3] sm:$0xff]
        %v1106 = vld [vmem:[#allocation3 + $0x8] sm:$0xff]
        %v1107 = vmul.f32 %v1105, 0.0010283801
        %v1108 = vmul.f32 %v1106, 0.0010283801
        %v1109 = vld [vmem:[#allocation3 + $0x1] sm:$0xff]
        %v1110 = vld [vmem:[#allocation3 + $0x9] sm:$0xff]
        %v1111 = vmul.f32 %v1109, 0.007598758
        %v1112 = vmul.f32 %v1110, 0.007598758
        %v1113 = vadd.f32 %v1107, %v1111
        %v1114 = vadd.f32 %v1108, %v1112
        %v1115 = vld [vmem:[#allocation3 + $0x2] sm:$0xff]
        %v1116 = vld [vmem:[#allocation3 + $0xa] sm:$0xff]
        %v1117 = vmul.f32 %v1115, 0.036000773
        %v1118 = vmul.f32 %v1116, 0.036000773
        %v1119 = vadd.f32 %v1113, %v1117
        %v1120 = vadd.f32 %v1114, %v1118
        %v1121 = vld [vmem:[#allocation3 + $0x3] sm:$0xff]
        %v1122 = vld [vmem:[#allocation3 + $0xb] sm:$0xff]
        %v1123 = vmul.f32 %v1121, 0.10936069
        %v1124 = vmul.f32 %v1122, 0.10936069
        %v1125 = vadd.f32 %v1119, %v1123
        %v1126 = vadd.f32 %v1120, %v1124
        %v1127 = vld [vmem:[#allocation3 + $0x4] sm:$0xff]
        %v1128 = vld [vmem:[#allocation3 + $0xc] sm:$0xff]
        %v1129 = vmul.f32 %v1127, 0.21300554
        %v1130 = vmul.f32 %v1128, 0.21300554
        %v1131 = vadd.f32 %v1125, %v1129
        %v1132 = vadd.f32 %v1126, %v1130
        %v1133 = vld [vmem:[#allocation3 + $0x5] sm:$0xff]
        %v1134 = vld [vmem:[#allocation3 + $0xd] sm:$0xff]
        %v1135 = vmul.f32 %v1133, 0.26601171
        %v1136 = vmul.f32 %v1134, 0.26601171
        %v1137 = vadd.f32 %v1131, %v1135
        %v1138 = vadd.f32 %v1132, %v1136
        %v1139 = vld [vmem:[#allocation3 + $0x6] sm:$0xff]
        %v1140 = vld [vmem:[#allocation3 + $0xe] sm:$0xff]
        %v1141 = vmul.f32 %v1139, 0.21300554
        %v1142 = vmul.f32 %v1140, 0.21300554
        %v1143 = vadd.f32 %v1137, %v1141
        %v1144 = vadd.f32 %v1138, %v1142
        %v1145 = vld [vmem:[#allocation3 + $0x7] sm:$0xff]
        %v1146 = vld [vmem:[#allocation3 + $0xf] sm:$0xff]
        %v1147 = vmul.f32 %v1145, 0.10936069
        %v1148 = vmul.f32 %v1146, 0.10936069
        %v1149 = vadd.f32 %v1143, %v1147
        %v1150 = vadd.f32 %v1144, %v1148
        %v1151 = vld [vmem:[#allocation3 + $0x10] sm:$0xff]
        %v1152 = vmul.f32 %v1106, 0.036000773
        %v1153 = vmul.f32 %v1151, 0.036000773
        %v1154 = vadd.f32 %v1149, %v1152
        %v1155 = vadd.f32 %v1150, %v1153
        %v1156 = vld [vmem:[#allocation3 + $0x11] sm:$0xff]
        %v1157 = vmul.f32 %v1156, 0.007598758
        %v1158 = vadd.f32 %v1154, %v1112
        %v1159 = vadd.f32 %v1155, %v1157
        %v1160 = vld [vmem:[#allocation3 + $0x12] sm:$0xff]
        %v1161 = vmul.f32 %v1116, 0.0010283801
        %v1162 = vmul.f32 %v1160, 0.0010283801
        %v1163 = vadd.f32 %v1158, %v1161
        %v1164 = vadd.f32 %v1159, %v1162
        %v1166 = vsel %vm489, %v1163, 0
        %v1169 = vsel %vm489, %v1164, 0
        %1171 = vmatprep.subr.mxu0 0.0
        %v1172 = vand.u32 %v535, 4294901760
        %1173 = vmatpush1.msra.mxu0 %v1172
        %1174 = vmatprep.subr.mxu0 0.0
        %v1175 = vand.u32 %v536, 4294901760
        %1176 = vmatpush1.msra.mxu0 %v1175
        %1177 = vmatprep.subr.mxu0 0.0
        %1178 = vmatpush1.msra.mxu0 0.0
        %1179 = vmatprep.subr.mxu0 0.0
        %1180 = vmatpush1.msra.mxu0 0.0
        %1181 = vmatprep.subr.mxu0 0.0
        %1182 = vmatpush1.msra.mxu0 0.0
        %1183 = vmatprep.subr.mxu0 0.0
        %1184 = vmatpush1.msra.mxu0 0.0
        %1185 = vmatprep.subr.mxu0 0.0
        %1186 = vmatpush1.msra.mxu0 0.0
        %1187 = vmatprep.subr.mxu0 0.0
        %1188 = vmatpush1.msra.mxu0 0.0
        %1189 = vmatprep.subr.mxu0 0.0
        %1190 = vmatpush1.msra.mxu0 0.0
        %1191 = vmatprep.subr.mxu0 0.0
        %1192 = vmatpush1.msra.mxu0 0.0
        %1193 = vmatprep.subr.mxu0 0.0
        %1194 = vmatpush1.msra.mxu0 0.0
        %1195 = vmatprep.subr.mxu0 0.0
        %1196 = vmatpush1.msra.mxu0 0.0
        %1197 = vmatprep.subr.mxu0 0.0
        %1198 = vmatpush1.msra.mxu0 0.0
        %1199 = vmatprep.subr.mxu0 0.0
        %1200 = vmatpush1.msra.mxu0 0.0
        %1201 = vmatprep.subr.mxu0 0.0
        %1202 = vmatpush1.msra.mxu0 0.0
        %1203 = vmatprep.subr.mxu0 0.0
        %1204 = vmatpush1.msra.mxu0 0.0
        %1205 = vmatprep.subr.mxu0 0.0
        %1206 = vmatpush1.msra.mxu0 0.0
        %1207 = vmatprep.subr.mxu0 0.0
        %1208 = vmatpush1.msra.mxu0 0.0
        %1209 = vmatprep.subr.mxu0 0.0
        %1210 = vmatpush1.msra.mxu0 0.0
        %1211 = vmatprep.subr.mxu0 0.0
        %1212 = vmatpush1.msra.mxu0 0.0
        %1213 = vmatprep.subr.mxu0 0.0
        %1214 = vmatpush1.msra.mxu0 0.0
        %1215 = vmatprep.subr.mxu0 0.0
        %1216 = vmatpush1.msra.mxu0 0.0
        %1217 = vmatprep.subr.mxu0 0.0
        %1218 = vmatpush1.msra.mxu0 0.0
        %1219 = vmatprep.subr.mxu0 0.0
        %1220 = vmatpush1.msra.mxu0 0.0
        %1221 = vmatprep.subr.mxu0 0.0
        %1222 = vmatpush1.msra.mxu0 0.0
        %1223 = vmatprep.subr.mxu0 0.0
        %1224 = vmatpush1.msra.mxu0 0.0
        %1225 = vmatprep.subr.mxu0 0.0
        %1226 = vmatpush1.msra.mxu0 0.0
        %1227 = vmatprep.subr.mxu0 0.0
        %1228 = vmatpush1.msra.mxu0 0.0
        %1229 = vmatprep.subr.mxu0 0.0
        %1230 = vmatpush1.msra.mxu0 0.0
        %1231 = vmatprep.subr.mxu0 0.0
        %1232 = vmatpush1.msra.mxu0 0.0
        %1233 = vmatprep.subr.mxu0 0.0
        %1234 = vmatpush1.msra.mxu0 0.0
        %1235 = vmatprep.subr.mxu0 0.0
        %1236 = vmatpush1.msra.mxu0 0.0
        %1237 = vmatprep.mubr.f32.mxu0 0.0
        %v1238 = vand.u32 %v1166, 4294901760
        %v1239 = vsub.f32 %v1166, %v1238
        %v1240 = vand.u32 %v1239, 4294901760
        %v1241 = vsub.f32 %v1239, %v1240
        %v1242 = vand.u32 %v1241, 4294901760
        %1243 = vmatmul.mubr.f32.gmra.mrb[0].mxu0 %v1242
        %v1244 = vpop.f32.mrb[0].mxu0
        %v1245 = vadd.f32 0.0, %v1244
        %v1246 = vpop.f32.mrb[0].mxu0
        %1247 = vmatprep.mubr.f32.mxu0 0.0
        %v1248 = vand.u32 %v1169, 4294901760
        %v1249 = vsub.f32 %v1169, %v1248
        %v1250 = vand.u32 %v1249, 4294901760
        %v1251 = vsub.f32 %v1249, %v1250
        %v1252 = vand.u32 %v1251, 4294901760
        %1253 = vmatmul.mubr.f32.gmra.mrb[0].mxu0 %v1252
        %v1254 = vpop.f32.mrb[0].mxu0
        %v1255 = vadd.f32 0.0, %v1254
        %v1256 = vpop.f32.mrb[0].mxu0
        %1257 = vdwg.mxu0
        %1258 = vmatprep.subr.mxu0 0.0
        %v1259 = vand.u32 %v535, 4294901760
        %v1260 = vsub.f32 %v535, %v1259
        %v1261 = vand.u32 %v1260, 4294901760
        %v1262 = vsub.f32 %v1260, %v1261
        %v1263 = vand.u32 %v1262, 4294901760
        %1264 = vmatpush1.msra.mxu0 %v1263
        %1265 = vmatprep.subr.mxu0 0.0
        %v1266 = vand.u32 %v536, 4294901760
        %v1267 = vsub.f32 %v536, %v1266
        %v1268 = vand.u32 %v1267, 4294901760
        %v1269 = vsub.f32 %v1267, %v1268
        %v1270 = vand.u32 %v1269, 4294901760
        %1271 = vmatpush1.msra.mxu0 %v1270
        %1272 = vmatprep.subr.mxu0 0.0
        %1273 = vmatpush1.msra.mxu0 0.0
        %1274 = vmatprep.subr.mxu0 0.0
        %1275 = vmatpush1.msra.mxu0 0.0
        %1276 = vmatprep.subr.mxu0 0.0
        %1277 = vmatpush1.msra.mxu0 0.0
        %1278 = vmatprep.subr.mxu0 0.0
        %1279 = vmatpush1.msra.mxu0 0.0
        %1280 = vmatprep.subr.mxu0 0.0
        %1281 = vmatpush1.msra.mxu0 0.0
        %1282 = vmatprep.subr.mxu0 0.0
        %1283 = vmatpush1.msra.mxu0 0.0
        %1284 = vmatprep.subr.mxu0 0.0
        %1285 = vmatpush1.msra.mxu0 0.0
        %1286 = vmatprep.subr.mxu0 0.0
        %1287 = vmatpush1.msra.mxu0 0.0
        %1288 = vmatprep.subr.mxu0 0.0
        %1289 = vmatpush1.msra.mxu0 0.0
        %1290 = vmatprep.subr.mxu0 0.0
        %1291 = vmatpush1.msra.mxu0 0.0
        %1292 = vmatprep.subr.mxu0 0.0
        %1293 = vmatpush1.msra.mxu0 0.0
        %1294 = vmatprep.subr.mxu0 0.0
        %1295 = vmatpush1.msra.mxu0 0.0
        %1296 = vmatprep.subr.mxu0 0.0
        %1297 = vmatpush1.msra.mxu0 0.0
        %1298 = vmatprep.subr.mxu0 0.0
        %1299 = vmatpush1.msra.mxu0 0.0
        %1300 = vmatprep.subr.mxu0 0.0
        %1301 = vmatpush1.msra.mxu0 0.0
        %1302 = vmatprep.subr.mxu0 0.0
        %1303 = vmatpush1.msra.mxu0 0.0
        %1304 = vmatprep.subr.mxu0 0.0
        %1305 = vmatpush1.msra.mxu0 0.0
        %1306 = vmatprep.subr.mxu0 0.0
        %1307 = vmatpush1.msra.mxu0 0.0
        %1308 = vmatprep.subr.mxu0 0.0
        %1309 = vmatpush1.msra.mxu0 0.0
        %1310 = vmatprep.subr.mxu0 0.0
        %1311 = vmatpush1.msra.mxu0 0.0
        %1312 = vmatprep.subr.mxu0 0.0
        %1313 = vmatpush1.msra.mxu0 0.0
        %1314 = vmatprep.subr.mxu0 0.0
        %1315 = vmatpush1.msra.mxu0 0.0
        %1316 = vmatprep.subr.mxu0 0.0
        %1317 = vmatpush1.msra.mxu0 0.0
        %1318 = vmatprep.subr.mxu0 0.0
        %1319 = vmatpush1.msra.mxu0 0.0
        %1320 = vmatprep.subr.mxu0 0.0
        %1321 = vmatpush1.msra.mxu0 0.0
        %1322 = vmatprep.subr.mxu0 0.0
        %1323 = vmatpush1.msra.mxu0 0.0
        %1324 = vmatprep.subr.mxu0 0.0
        %1325 = vmatpush1.msra.mxu0 0.0
        %1326 = vmatprep.subr.mxu0 0.0
        %1327 = vmatpush1.msra.mxu0 0.0
        %1328 = vmatprep.subr.mxu0 0.0
        %1329 = vmatpush1.msra.mxu0 0.0
        %1330 = vmatprep.subr.mxu0 0.0
        %1331 = vmatpush1.msra.mxu0 0.0
        %1332 = vmatprep.mubr.f32.mxu0 0.0
        %v1333 = vand.u32 %v1166, 4294901760
        %1334 = vmatmul.mubr.f32.gmra.mrb[0].mxu0 %v1333
        %v1335 = vpop.f32.mrb[0].mxu0
        %v1336 = vadd.f32 %v1245, %v1335
        %v1337 = vpop.f32.mrb[0].mxu0
        %1338 = vmatprep.mubr.f32.mxu0 0.0
        %v1339 = vand.u32 %v1169, 4294901760
        %1340 = vmatmul.mubr.f32.gmra.mrb[0].mxu0 %v1339
        %v1341 = vpop.f32.mrb[0].mxu0
        %v1342 = vadd.f32 %v1255, %v1341
        %v1343 = vpop.f32.mrb[0].mxu0
        %1344 = vdwg.mxu0
        %1345 = vmatprep.subr.mxu0 0.0
        %v1346 = vand.u32 %v535, 4294901760
        %v1347 = vsub.f32 %v535, %v1346
        %1348 = vmatpush1.msra.mxu0 %v1347
        %1349 = vmatprep.subr.mxu0 0.0
        %v1350 = vand.u32 %v536, 4294901760
        %v1351 = vsub.f32 %v536, %v1350
        %1352 = vmatpush1.msra.mxu0 %v1351
        %1353 = vmatprep.subr.mxu0 0.0
        %1354 = vmatpush1.msra.mxu0 0.0
        %1355 = vmatprep.subr.mxu0 0.0
        %1356 = vmatpush1.msra.mxu0 0.0
        %1357 = vmatprep.subr.mxu0 0.0
        %1358 = vmatpush1.msra.mxu0 0.0
        %1359 = vmatprep.subr.mxu0 0.0
        %1360 = vmatpush1.msra.mxu0 0.0
        %1361 = vmatprep.subr.mxu0 0.0
        %1362 = vmatpush1.msra.mxu0 0.0
        %1363 = vmatprep.subr.mxu0 0.0
        %1364 = vmatpush1.msra.mxu0 0.0
        %1365 = vmatprep.subr.mxu0 0.0
        %1366 = vmatpush1.msra.mxu0 0.0
        %1367 = vmatprep.subr.mxu0 0.0
        %1368 = vmatpush1.msra.mxu0 0.0
        %1369 = vmatprep.subr.mxu0 0.0
        %1370 = vmatpush1.msra.mxu0 0.0
        %1371 = vmatprep.subr.mxu0 0.0
        %1372 = vmatpush1.msra.mxu0 0.0
        %1373 = vmatprep.subr.mxu0 0.0
        %1374 = vmatpush1.msra.mxu0 0.0
        %1375 = vmatprep.subr.mxu0 0.0
        %1376 = vmatpush1.msra.mxu0 0.0
        %1377 = vmatprep.subr.mxu0 0.0
        %1378 = vmatpush1.msra.mxu0 0.0
        %1379 = vmatprep.subr.mxu0 0.0
        %1380 = vmatpush1.msra.mxu0 0.0
        %1381 = vmatprep.subr.mxu0 0.0
        %1382 = vmatpush1.msra.mxu0 0.0
        %1383 = vmatprep.subr.mxu0 0.0
        %1384 = vmatpush1.msra.mxu0 0.0
        %1385 = vmatprep.subr.mxu0 0.0
        %1386 = vmatpush1.msra.mxu0 0.0
        %1387 = vmatprep.subr.mxu0 0.0
        %1388 = vmatpush1.msra.mxu0 0.0
        %1389 = vmatprep.subr.mxu0 0.0
        %1390 = vmatpush1.msra.mxu0 0.0
        %1391 = vmatprep.subr.mxu0 0.0
        %1392 = vmatpush1.msra.mxu0 0.0
        %1393 = vmatprep.subr.mxu0 0.0
        %1394 = vmatpush1.msra.mxu0 0.0
        %1395 = vmatprep.subr.mxu0 0.0
        %1396 = vmatpush1.msra.mxu0 0.0
        %1397 = vmatprep.subr.mxu0 0.0
        %1398 = vmatpush1.msra.mxu0 0.0
        %1399 = vmatprep.subr.mxu0 0.0
        %1400 = vmatpush1.msra.mxu0 0.0
        %1401 = vmatprep.subr.mxu0 0.0
        %1402 = vmatpush1.msra.mxu0 0.0
        %1403 = vmatprep.subr.mxu0 0.0
        %1404 = vmatpush1.msra.mxu0 0.0
        %1405 = vmatprep.subr.mxu0 0.0
        %1406 = vmatpush1.msra.mxu0 0.0
        %1407 = vmatprep.subr.mxu0 0.0
        %1408 = vmatpush1.msra.mxu0 0.0
        %1409 = vmatprep.subr.mxu0 0.0
        %1410 = vmatpush1.msra.mxu0 0.0
        %1411 = vmatprep.subr.mxu0 0.0
        %1412 = vmatpush1.msra.mxu0 0.0
        %1413 = vmatprep.mubr.f32.mxu0 0.0
        %v1414 = vand.u32 %v1166, 4294901760
        %v1415 = vsub.f32 %v1166, %v1414
        %1416 = vmatmul.mubr.f32.gmra.mrb[0].mxu0 %v1415
        %v1417 = vpop.f32.mrb[0].mxu0
        %v1418 = vadd.f32 %v1336, %v1417
        %v1419 = vpop.f32.mrb[0].mxu0
        %1420 = vmatprep.mubr.f32.mxu0 0.0
        %v1421 = vand.u32 %v1169, 4294901760
        %v1422 = vsub.f32 %v1169, %v1421
        %1423 = vmatmul.mubr.f32.gmra.mrb[0].mxu0 %v1422
        %v1424 = vpop.f32.mrb[0].mxu0
        %v1425 = vadd.f32 %v1342, %v1424
        %v1426 = vpop.f32.mrb[0].mxu0
        %1427 = vdwg.mxu0
        %1428 = vmatprep.subr.mxu0 0.0
        %v1429 = vand.u32 %v535, 4294901760
        %1430 = vmatpush1.msra.mxu0 %v1429
        %1431 = vmatprep.subr.mxu0 0.0
        %v1432 = vand.u32 %v536, 4294901760
        %1433 = vmatpush1.msra.mxu0 %v1432
        %1434 = vmatprep.subr.mxu0 0.0
        %1435 = vmatpush1.msra.mxu0 0.0
        %1436 = vmatprep.subr.mxu0 0.0
        %1437 = vmatpush1.msra.mxu0 0.0
        %1438 = vmatprep.subr.mxu0 0.0
        %1439 = vmatpush1.msra.mxu0 0.0
        %1440 = vmatprep.subr.mxu0 0.0
        %1441 = vmatpush1.msra.mxu0 0.0
        %1442 = vmatprep.subr.mxu0 0.0
        %1443 = vmatpush1.msra.mxu0 0.0
        %1444 = vmatprep.subr.mxu0 0.0
        %1445 = vmatpush1.msra.mxu0 0.0
        %1446 = vmatprep.subr.mxu0 0.0
        %1447 = vmatpush1.msra.mxu0 0.0
        %1448 = vmatprep.subr.mxu0 0.0
        %1449 = vmatpush1.msra.mxu0 0.0
        %1450 = vmatprep.subr.mxu0 0.0
        %1451 = vmatpush1.msra.mxu0 0.0
        %1452 = vmatprep.subr.mxu0 0.0
        %1453 = vmatpush1.msra.mxu0 0.0
        %1454 = vmatprep.subr.mxu0 0.0
        %1455 = vmatpush1.msra.mxu0 0.0
        %1456 = vmatprep.subr.mxu0 0.0
        %1457 = vmatpush1.msra.mxu0 0.0
        %1458 = vmatprep.subr.mxu0 0.0
        %1459 = vmatpush1.msra.mxu0 0.0
        %1460 = vmatprep.subr.mxu0 0.0
        %1461 = vmatpush1.msra.mxu0 0.0
        %1462 = vmatprep.subr.mxu0 0.0
        %1463 = vmatpush1.msra.mxu0 0.0
        %1464 = vmatprep.subr.mxu0 0.0
        %1465 = vmatpush1.msra.mxu0 0.0
        %1466 = vmatprep.subr.mxu0 0.0
        %1467 = vmatpush1.msra.mxu0 0.0
        %1468 = vmatprep.subr.mxu0 0.0
        %1469 = vmatpush1.msra.mxu0 0.0
        %1470 = vmatprep.subr.mxu0 0.0
        %1471 = vmatpush1.msra.mxu0 0.0
        %1472 = vmatprep.subr.mxu0 0.0
        %1473 = vmatpush1.msra.mxu0 0.0
        %1474 = vmatprep.subr.mxu0 0.0
        %1475 = vmatpush1.msra.mxu0 0.0
        %1476 = vmatprep.subr.mxu0 0.0
        %1477 = vmatpush1.msra.mxu0 0.0
        %1478 = vmatprep.subr.mxu0 0.0
        %1479 = vmatpush1.msra.mxu0 0.0
        %1480 = vmatprep.subr.mxu0 0.0
        %1481 = vmatpush1.msra.mxu0 0.0
        %1482 = vmatprep.subr.mxu0 0.0
        %1483 = vmatpush1.msra.mxu0 0.0
        %1484 = vmatprep.subr.mxu0 0.0
        %1485 = vmatpush1.msra.mxu0 0.0
        %1486 = vmatprep.subr.mxu0 0.0
        %1487 = vmatpush1.msra.mxu0 0.0
        %1488 = vmatprep.subr.mxu0 0.0
        %1489 = vmatpush1.msra.mxu0 0.0
        %1490 = vmatprep.subr.mxu0 0.0
        %1491 = vmatpush1.msra.mxu0 0.0
        %1492 = vmatprep.subr.mxu0 0.0
        %1493 = vmatpush1.msra.mxu0 0.0
        %1494 = vmatprep.mubr.f32.mxu0 0.0
        %v1495 = vand.u32 %v1166, 4294901760
        %v1496 = vsub.f32 %v1166, %v1495
        %v1497 = vand.u32 %v1496, 4294901760
        %1498 = vmatmul.mubr.f32.gmra.mrb[0].mxu0 %v1497
        %v1499 = vpop.f32.mrb[0].mxu0
        %v1500 = vadd.f32 %v1418, %v1499
        %v1501 = vpop.f32.mrb[0].mxu0
        %1502 = vmatprep.mubr.f32.mxu0 0.0
        %v1503 = vand.u32 %v1169, 4294901760
        %v1504 = vsub.f32 %v1169, %v1503
        %v1505 = vand.u32 %v1504, 4294901760
        %1506 = vmatmul.mubr.f32.gmra.mrb[0].mxu0 %v1505
        %v1507 = vpop.f32.mrb[0].mxu0
        %v1508 = vadd.f32 %v1425, %v1507
        %v1509 = vpop.f32.mrb[0].mxu0
        %1510 = vdwg.mxu0
        %1511 = vmatprep.subr.mxu0 0.0
        %v1512 = vand.u32 %v535, 4294901760
        %v1513 = vsub.f32 %v535, %v1512
        %v1514 = vand.u32 %v1513, 4294901760
        %1515 = vmatpush1.msra.mxu0 %v1514
        %1516 = vmatprep.subr.mxu0 0.0
        %v1517 = vand.u32 %v536, 4294901760
        %v1518 = vsub.f32 %v536, %v1517
        %v1519 = vand.u32 %v1518, 4294901760
        %1520 = vmatpush1.msra.mxu0 %v1519
        %1521 = vmatprep.subr.mxu0 0.0
        %1522 = vmatpush1.msra.mxu0 0.0
        %1523 = vmatprep.subr.mxu0 0.0
        %1524 = vmatpush1.msra.mxu0 0.0
        %1525 = vmatprep.subr.mxu0 0.0
        %1526 = vmatpush1.msra.mxu0 0.0
        %1527 = vmatprep.subr.mxu0 0.0
        %1528 = vmatpush1.msra.mxu0 0.0
        %1529 = vmatprep.subr.mxu0 0.0
        %1530 = vmatpush1.msra.mxu0 0.0
        %1531 = vmatprep.subr.mxu0 0.0
        %1532 = vmatpush1.msra.mxu0 0.0
        %1533 = vmatprep.subr.mxu0 0.0
        %1534 = vmatpush1.msra.mxu0 0.0
        %1535 = vmatprep.subr.mxu0 0.0
        %1536 = vmatpush1.msra.mxu0 0.0
        %1537 = vmatprep.subr.mxu0 0.0
        %1538 = vmatpush1.msra.mxu0 0.0
        %1539 = vmatprep.subr.mxu0 0.0
        %1540 = vmatpush1.msra.mxu0 0.0
        %1541 = vmatprep.subr.mxu0 0.0
        %1542 = vmatpush1.msra.mxu0 0.0
        %1543 = vmatprep.subr.mxu0 0.0
        %1544 = vmatpush1.msra.mxu0 0.0
        %1545 = vmatprep.subr.mxu0 0.0
        %1546 = vmatpush1.msra.mxu0 0.0
        %1547 = vmatprep.subr.mxu0 0.0
        %1548 = vmatpush1.msra.mxu0 0.0
        %1549 = vmatprep.subr.mxu0 0.0
        %1550 = vmatpush1.msra.mxu0 0.0
        %1551 = vmatprep.subr.mxu0 0.0
        %1552 = vmatpush1.msra.mxu0 0.0
        %1553 = vmatprep.subr.mxu0 0.0
        %1554 = vmatpush1.msra.mxu0 0.0
        %1555 = vmatprep.subr.mxu0 0.0
        %1556 = vmatpush1.msra.mxu0 0.0
        %1557 = vmatprep.subr.mxu0 0.0
        %1558 = vmatpush1.msra.mxu0 0.0
        %1559 = vmatprep.subr.mxu0 0.0
        %1560 = vmatpush1.msra.mxu0 0.0
        %1561 = vmatprep.subr.mxu0 0.0
        %1562 = vmatpush1.msra.mxu0 0.0
        %1563 = vmatprep.subr.mxu0 0.0
        %1564 = vmatpush1.msra.mxu0 0.0
        %1565 = vmatprep.subr.mxu0 0.0
        %1566 = vmatpush1.msra.mxu0 0.0
        %1567 = vmatprep.subr.mxu0 0.0
        %1568 = vmatpush1.msra.mxu0 0.0
        %1569 = vmatprep.subr.mxu0 0.0
        %1570 = vmatpush1.msra.mxu0 0.0
        %1571 = vmatprep.subr.mxu0 0.0
        %1572 = vmatpush1.msra.mxu0 0.0
        %1573 = vmatprep.subr.mxu0 0.0
        %1574 = vmatpush1.msra.mxu0 0.0
        %1575 = vmatprep.subr.mxu0 0.0
        %1576 = vmatpush1.msra.mxu0 0.0
        %1577 = vmatprep.subr.mxu0 0.0
        %1578 = vmatpush1.msra.mxu0 0.0
        %1579 = vmatprep.subr.mxu0 0.0
        %1580 = vmatpush1.msra.mxu0 0.0
        %1581 = vmatprep.mubr.f32.mxu0 0.0
        %v1582 = vand.u32 %v1166, 4294901760
        %1583 = vmatmul.mubr.f32.gmra.mrb[0].mxu0 %v1582
        %v1584 = vpop.f32.mrb[0].mxu0
        %v1585 = vadd.f32 %v1500, %v1584
        %v1586 = vpop.f32.mrb[0].mxu0
        %1587 = vmatprep.mubr.f32.mxu0 0.0
        %v1588 = vand.u32 %v1169, 4294901760
        %1589 = vmatmul.mubr.f32.gmra.mrb[0].mxu0 %v1588
        %v1590 = vpop.f32.mrb[0].mxu0
        %v1591 = vadd.f32 %v1508, %v1590
        %v1592 = vpop.f32.mrb[0].mxu0
        %1593 = vdwg.mxu0
        %1594 = vmatprep.subr.mxu0 0.0
        %v1595 = vand.u32 %v535, 4294901760
        %1596 = vmatpush1.msra.mxu0 %v1595
        %1597 = vmatprep.subr.mxu0 0.0
        %v1598 = vand.u32 %v536, 4294901760
        %1599 = vmatpush1.msra.mxu0 %v1598
        %1600 = vmatprep.subr.mxu0 0.0
        %1601 = vmatpush1.msra.mxu0 0.0
        %1602 = vmatprep.subr.mxu0 0.0
        %1603 = vmatpush1.msra.mxu0 0.0
        %1604 = vmatprep.subr.mxu0 0.0
        %1605 = vmatpush1.msra.mxu0 0.0
        %1606 = vmatprep.subr.mxu0 0.0
        %1607 = vmatpush1.msra.mxu0 0.0
        %1608 = vmatprep.subr.mxu0 0.0
        %1609 = vmatpush1.msra.mxu0 0.0
        %1610 = vmatprep.subr.mxu0 0.0
        %1611 = vmatpush1.msra.mxu0 0.0
        %1612 = vmatprep.subr.mxu0 0.0
        %1613 = vmatpush1.msra.mxu0 0.0
        %1614 = vmatprep.subr.mxu0 0.0
        %1615 = vmatpush1.msra.mxu0 0.0
        %1616 = vmatprep.subr.mxu0 0.0
        %1617 = vmatpush1.msra.mxu0 0.0
        %1618 = vmatprep.subr.mxu0 0.0
        %1619 = vmatpush1.msra.mxu0 0.0
        %1620 = vmatprep.subr.mxu0 0.0
        %1621 = vmatpush1.msra.mxu0 0.0
        %1622 = vmatprep.subr.mxu0 0.0
        %1623 = vmatpush1.msra.mxu0 0.0
        %1624 = vmatprep.subr.mxu0 0.0
        %1625 = vmatpush1.msra.mxu0 0.0
        %1626 = vmatprep.subr.mxu0 0.0
        %1627 = vmatpush1.msra.mxu0 0.0
        %1628 = vmatprep.subr.mxu0 0.0
        %1629 = vmatpush1.msra.mxu0 0.0
        %1630 = vmatprep.subr.mxu0 0.0
        %1631 = vmatpush1.msra.mxu0 0.0
        %1632 = vmatprep.subr.mxu0 0.0
        %1633 = vmatpush1.msra.mxu0 0.0
        %1634 = vmatprep.subr.mxu0 0.0
        %1635 = vmatpush1.msra.mxu0 0.0
        %1636 = vmatprep.subr.mxu0 0.0
        %1637 = vmatpush1.msra.mxu0 0.0
        %1638 = vmatprep.subr.mxu0 0.0
        %1639 = vmatpush1.msra.mxu0 0.0
        %1640 = vmatprep.subr.mxu0 0.0
        %1641 = vmatpush1.msra.mxu0 0.0
        %1642 = vmatprep.subr.mxu0 0.0
        %1643 = vmatpush1.msra.mxu0 0.0
        %1644 = vmatprep.subr.mxu0 0.0
        %1645 = vmatpush1.msra.mxu0 0.0
        %1646 = vmatprep.subr.mxu0 0.0
        %1647 = vmatpush1.msra.mxu0 0.0
        %1648 = vmatprep.subr.mxu0 0.0
        %1649 = vmatpush1.msra.mxu0 0.0
        %1650 = vmatprep.subr.mxu0 0.0
        %1651 = vmatpush1.msra.mxu0 0.0
        %1652 = vmatprep.subr.mxu0 0.0
        %1653 = vmatpush1.msra.mxu0 0.0
        %1654 = vmatprep.subr.mxu0 0.0
        %1655 = vmatpush1.msra.mxu0 0.0
        %1656 = vmatprep.subr.mxu0 0.0
        %1657 = vmatpush1.msra.mxu0 0.0
        %1658 = vmatprep.subr.mxu0 0.0
        %1659 = vmatpush1.msra.mxu0 0.0
        %1660 = vmatprep.mubr.f32.mxu0 0.0
        %v1661 = vand.u32 %v1166, 4294901760
        %1662 = vmatmul.mubr.f32.gmra.mrb[0].mxu0 %v1661
        %v1663 = vpop.f32.mrb[0].mxu0
        %v1664 = vadd.f32 %v1585, %v1663
        %v1665 = vpop.f32.mrb[0].mxu0
        %1666 = vmatprep.mubr.f32.mxu0 0.0
        %v1667 = vand.u32 %v1169, 4294901760
        %1668 = vmatmul.mubr.f32.gmra.mrb[0].mxu0 %v1667
        %v1669 = vpop.f32.mrb[0].mxu0
        %v1670 = vadd.f32 %v1591, %v1669
        %v1671 = vpop.f32.mrb[0].mxu0
        %1672 = vdwg.mxu0
        %v1673 = vld [vmem:[#allocation4] sm:$0xff]
        %v1674 = vld [vmem:[#allocation4 + $0x8] sm:$0xff]
        %v1675 = vmul.f32 %v1673, 0.0010283801
        %v1676 = vmul.f32 %v1674, 0.0010283801
        %v1677 = vld [vmem:[#allocation4 + $0x1] sm:$0xff]
        %v1678 = vld [vmem:[#allocation4 + $0x9] sm:$0xff]
        %v1679 = vmul.f32 %v1677, 0.007598758
        %v1680 = vmul.f32 %v1678, 0.007598758
        %v1681 = vadd.f32 %v1675, %v1679
        %v1682 = vadd.f32 %v1676, %v1680
        %v1683 = vld [vmem:[#allocation4 + $0x2] sm:$0xff]
        %v1684 = vld [vmem:[#allocation4 + $0xa] sm:$0xff]
        %v1685 = vmul.f32 %v1683, 0.036000773
        %v1686 = vmul.f32 %v1684, 0.036000773
        %v1687 = vadd.f32 %v1681, %v1685
        %v1688 = vadd.f32 %v1682, %v1686
        %v1689 = vld [vmem:[#allocation4 + $0x3] sm:$0xff]
        %v1690 = vld [vmem:[#allocation4 + $0xb] sm:$0xff]
        %v1691 = vmul.f32 %v1689, 0.10936069
        %v1692 = vmul.f32 %v1690, 0.10936069
        %v1693 = vadd.f32 %v1687, %v1691
        %v1694 = vadd.f32 %v1688, %v1692
        %v1695 = vld [vmem:[#allocation4 + $0x4] sm:$0xff]
        %v1696 = vld [vmem:[#allocation4 + $0xc] sm:$0xff]
        %v1697 = vmul.f32 %v1695, 0.21300554
        %v1698 = vmul.f32 %v1696, 0.21300554
        %v1699 = vadd.f32 %v1693, %v1697
        %v1700 = vadd.f32 %v1694, %v1698
        %v1701 = vld [vmem:[#allocation4 + $0x5] sm:$0xff]
        %v1702 = vld [vmem:[#allocation4 + $0xd] sm:$0xff]
        %v1703 = vmul.f32 %v1701, 0.26601171
        %v1704 = vmul.f32 %v1702, 0.26601171
        %v1705 = vadd.f32 %v1699, %v1703
        %v1706 = vadd.f32 %v1700, %v1704
        %v1707 = vld [vmem:[#allocation4 + $0x6] sm:$0xff]
        %v1708 = vld [vmem:[#allocation4 + $0xe] sm:$0xff]
        %v1709 = vmul.f32 %v1707, 0.21300554
        %v1710 = vmul.f32 %v1708, 0.21300554
        %v1711 = vadd.f32 %v1705, %v1709
        %v1712 = vadd.f32 %v1706, %v1710
        %v1713 = vld [vmem:[#allocation4 + $0x7] sm:$0xff]
        %v1714 = vld [vmem:[#allocation4 + $0xf] sm:$0xff]
        %v1715 = vmul.f32 %v1713, 0.10936069
        %v1716 = vmul.f32 %v1714, 0.10936069
        %v1717 = vadd.f32 %v1711, %v1715
        %v1718 = vadd.f32 %v1712, %v1716
        %v1719 = vld [vmem:[#allocation4 + $0x10] sm:$0xff]
        %v1720 = vmul.f32 %v1674, 0.036000773
        %v1721 = vmul.f32 %v1719, 0.036000773
        %v1722 = vadd.f32 %v1717, %v1720
        %v1723 = vadd.f32 %v1718, %v1721
        %v1724 = vld [vmem:[#allocation4 + $0x11] sm:$0xff]
        %v1725 = vmul.f32 %v1724, 0.007598758
        %v1726 = vadd.f32 %v1722, %v1680
        %v1727 = vadd.f32 %v1723, %v1725
        %v1728 = vld [vmem:[#allocation4 + $0x12] sm:$0xff]
        %v1729 = vmul.f32 %v1684, 0.0010283801
        %v1730 = vmul.f32 %v1728, 0.0010283801
        %v1731 = vadd.f32 %v1726, %v1729
        %v1732 = vadd.f32 %v1727, %v1730
        %v1734 = vsel %vm489, %v1731, 0
        %v1737 = vsel %vm489, %v1732, 0
        %1739 = vmatprep.subr.mxu0 0.0
        %v1740 = vand.u32 %v535, 4294901760
        %1741 = vmatpush1.msra.mxu0 %v1740
        %1742 = vmatprep.subr.mxu0 0.0
        %v1743 = vand.u32 %v536, 4294901760
        %1744 = vmatpush1.msra.mxu0 %v1743
        %1745 = vmatprep.subr.mxu0 0.0
        %1746 = vmatpush1.msra.mxu0 0.0
        %1747 = vmatprep.subr.mxu0 0.0
        %1748 = vmatpush1.msra.mxu0 0.0
        %1749 = vmatprep.subr.mxu0 0.0
        %1750 = vmatpush1.msra.mxu0 0.0
        %1751 = vmatprep.subr.mxu0 0.0
        %1752 = vmatpush1.msra.mxu0 0.0
        %1753 = vmatprep.subr.mxu0 0.0
        %1754 = vmatpush1.msra.mxu0 0.0
        %1755 = vmatprep.subr.mxu0 0.0
        %1756 = vmatpush1.msra.mxu0 0.0
        %1757 = vmatprep.subr.mxu0 0.0
        %1758 = vmatpush1.msra.mxu0 0.0
        %1759 = vmatprep.subr.mxu0 0.0
        %1760 = vmatpush1.msra.mxu0 0.0
        %1761 = vmatprep.subr.mxu0 0.0
        %1762 = vmatpush1.msra.mxu0 0.0
        %1763 = vmatprep.subr.mxu0 0.0
        %1764 = vmatpush1.msra.mxu0 0.0
        %1765 = vmatprep.subr.mxu0 0.0
        %1766 = vmatpush1.msra.mxu0 0.0
        %1767 = vmatprep.subr.mxu0 0.0
        %1768 = vmatpush1.msra.mxu0 0.0
        %1769 = vmatprep.subr.mxu0 0.0
        %1770 = vmatpush1.msra.mxu0 0.0
        %1771 = vmatprep.subr.mxu0 0.0
        %1772 = vmatpush1.msra.mxu0 0.0
        %1773 = vmatprep.subr.mxu0 0.0
        %1774 = vmatpush1.msra.mxu0 0.0
        %1775 = vmatprep.subr.mxu0 0.0
        %1776 = vmatpush1.msra.mxu0 0.0
        %1777 = vmatprep.subr.mxu0 0.0
        %1778 = vmatpush1.msra.mxu0 0.0
        %1779 = vmatprep.subr.mxu0 0.0
        %1780 = vmatpush1.msra.mxu0 0.0
        %1781 = vmatprep.subr.mxu0 0.0
        %1782 = vmatpush1.msra.mxu0 0.0
        %1783 = vmatprep.subr.mxu0 0.0
        %1784 = vmatpush1.msra.mxu0 0.0
        %1785 = vmatprep.subr.mxu0 0.0
        %1786 = vmatpush1.msra.mxu0 0.0
        %1787 = vmatprep.subr.mxu0 0.0
        %1788 = vmatpush1.msra.mxu0 0.0
        %1789 = vmatprep.subr.mxu0 0.0
        %1790 = vmatpush1.msra.mxu0 0.0
        %1791 = vmatprep.subr.mxu0 0.0
        %1792 = vmatpush1.msra.mxu0 0.0
        %1793 = vmatprep.subr.mxu0 0.0
        %1794 = vmatpush1.msra.mxu0 0.0
        %1795 = vmatprep.subr.mxu0 0.0
        %1796 = vmatpush1.msra.mxu0 0.0
        %1797 = vmatprep.subr.mxu0 0.0
        %1798 = vmatpush1.msra.mxu0 0.0
        %1799 = vmatprep.subr.mxu0 0.0
        %1800 = vmatpush1.msra.mxu0 0.0
        %1801 = vmatprep.subr.mxu0 0.0
        %1802 = vmatpush1.msra.mxu0 0.0
        %1803 = vmatprep.subr.mxu0 0.0
        %1804 = vmatpush1.msra.mxu0 0.0
        %1805 = vmatprep.mubr.f32.mxu0 0.0
        %v1806 = vand.u32 %v1734, 4294901760
        %v1807 = vsub.f32 %v1734, %v1806
        %v1808 = vand.u32 %v1807, 4294901760
        %v1809 = vsub.f32 %v1807, %v1808
        %v1810 = vand.u32 %v1809, 4294901760
        %1811 = vmatmul.mubr.f32.gmra.mrb[0].mxu0 %v1810
        %v1812 = vpop.f32.mrb[0].mxu0
        %v1813 = vadd.f32 0.0, %v1812
        %v1814 = vpop.f32.mrb[0].mxu0
        %1815 = vmatprep.mubr.f32.mxu0 0.0
        %v1816 = vand.u32 %v1737, 4294901760
        %v1817 = vsub.f32 %v1737, %v1816
        %v1818 = vand.u32 %v1817, 4294901760
        %v1819 = vsub.f32 %v1817, %v1818
        %v1820 = vand.u32 %v1819, 4294901760
        %1821 = vmatmul.mubr.f32.gmra.mrb[0].mxu0 %v1820
        %v1822 = vpop.f32.mrb[0].mxu0
        %v1823 = vadd.f32 0.0, %v1822
        %v1824 = vpop.f32.mrb[0].mxu0
        %1825 = vdwg.mxu0
        %1826 = vmatprep.subr.mxu0 0.0
        %v1827 = vand.u32 %v535, 4294901760
        %v1828 = vsub.f32 %v535, %v1827
        %v1829 = vand.u32 %v1828, 4294901760
        %v1830 = vsub.f32 %v1828, %v1829
        %v1831 = vand.u32 %v1830, 4294901760
        %1832 = vmatpush1.msra.mxu0 %v1831
        %1833 = vmatprep.subr.mxu0 0.0
        %v1834 = vand.u32 %v536, 4294901760
        %v1835 = vsub.f32 %v536, %v1834
        %v1836 = vand.u32 %v1835, 4294901760
        %v1837 = vsub.f32 %v1835, %v1836
        %v1838 = vand.u32 %v1837, 4294901760
        %1839 = vmatpush1.msra.mxu0 %v1838
        %1840 = vmatprep.subr.mxu0 0.0
        %1841 = vmatpush1.msra.mxu0 0.0
        %1842 = vmatprep.subr.mxu0 0.0
        %1843 = vmatpush1.msra.mxu0 0.0
        %1844 = vmatprep.subr.mxu0 0.0
        %1845 = vmatpush1.msra.mxu0 0.0
        %1846 = vmatprep.subr.mxu0 0.0
        %1847 = vmatpush1.msra.mxu0 0.0
        %1848 = vmatprep.subr.mxu0 0.0
        %1849 = vmatpush1.msra.mxu0 0.0
        %1850 = vmatprep.subr.mxu0 0.0
        %1851 = vmatpush1.msra.mxu0 0.0
        %1852 = vmatprep.subr.mxu0 0.0
        %1853 = vmatpush1.msra.mxu0 0.0
        %1854 = vmatprep.subr.mxu0 0.0
        %1855 = vmatpush1.msra.mxu0 0.0
        %1856 = vmatprep.subr.mxu0 0.0
        %1857 = vmatpush1.msra.mxu0 0.0
        %1858 = vmatprep.subr.mxu0 0.0
        %1859 = vmatpush1.msra.mxu0 0.0
        %1860 = vmatprep.subr.mxu0 0.0
        %1861 = vmatpush1.msra.mxu0 0.0
        %1862 = vmatprep.subr.mxu0 0.0
        %1863 = vmatpush1.msra.mxu0 0.0
        %1864 = vmatprep.subr.mxu0 0.0
        %1865 = vmatpush1.msra.mxu0 0.0
        %1866 = vmatprep.subr.mxu0 0.0
        %1867 = vmatpush1.msra.mxu0 0.0
        %1868 = vmatprep.subr.mxu0 0.0
        %1869 = vmatpush1.msra.mxu0 0.0
        %1870 = vmatprep.subr.mxu0 0.0
        %1871 = vmatpush1.msra.mxu0 0.0
        %1872 = vmatprep.subr.mxu0 0.0
        %1873 = vmatpush1.msra.mxu0 0.0
        %1874 = vmatprep.subr.mxu0 0.0
        %1875 = vmatpush1.msra.mxu0 0.0
        %1876 = vmatprep.subr.mxu0 0.0
        %1877 = vmatpush1.msra.mxu0 0.0
        %1878 = vmatprep.subr.mxu0 0.0
        %1879 = vmatpush1.msra.mxu0 0.0
        %1880 = vmatprep.subr.mxu0 0.0
        %1881 = vmatpush1.msra.mxu0 0.0
        %1882 = vmatprep.subr.mxu0 0.0
        %1883 = vmatpush1.msra.mxu0 0.0
        %1884 = vmatprep.subr.mxu0 0.0
        %1885 = vmatpush1.msra.mxu0 0.0
        %1886 = vmatprep.subr.mxu0 0.0
        %1887 = vmatpush1.msra.mxu0 0.0
        %1888 = vmatprep.subr.mxu0 0.0
        %1889 = vmatpush1.msra.mxu0 0.0
        %1890 = vmatprep.subr.mxu0 0.0
        %1891 = vmatpush1.msra.mxu0 0.0
        %1892 = vmatprep.subr.mxu0 0.0
        %1893 = vmatpush1.msra.mxu0 0.0
        %1894 = vmatprep.subr.mxu0 0.0
        %1895 = vmatpush1.msra.mxu0 0.0
        %1896 = vmatprep.subr.mxu0 0.0
        %1897 = vmatpush1.msra.mxu0 0.0
        %1898 = vmatprep.subr.mxu0 0.0
        %1899 = vmatpush1.msra.mxu0 0.0
        %1900 = vmatprep.mubr.f32.mxu0 0.0
        %v1901 = vand.u32 %v1734, 4294901760
        %1902 = vmatmul.mubr.f32.gmra.mrb[0].mxu0 %v1901
        %v1903 = vpop.f32.mrb[0].mxu0
        %v1904 = vadd.f32 %v1813, %v1903
        %v1905 = vpop.f32.mrb[0].mxu0
        %1906 = vmatprep.mubr.f32.mxu0 0.0
        %v1907 = vand.u32 %v1737, 4294901760
        %1908 = vmatmul.mubr.f32.gmra.mrb[0].mxu0 %v1907
        %v1909 = vpop.f32.mrb[0].mxu0
        %v1910 = vadd.f32 %v1823, %v1909
        %v1911 = vpop.f32.mrb[0].mxu0
        %1912 = vdwg.mxu0
        %1913 = vmatprep.subr.mxu0 0.0
        %v1914 = vand.u32 %v535, 4294901760
        %v1915 = vsub.f32 %v535, %v1914
        %1916 = vmatpush1.msra.mxu0 %v1915
        %1917 = vmatprep.subr.mxu0 0.0
        %v1918 = vand.u32 %v536, 4294901760
        %v1919 = vsub.f32 %v536, %v1918
        %1920 = vmatpush1.msra.mxu0 %v1919
        %1921 = vmatprep.subr.mxu0 0.0
        %1922 = vmatpush1.msra.mxu0 0.0
        %1923 = vmatprep.subr.mxu0 0.0
        %1924 = vmatpush1.msra.mxu0 0.0
        %1925 = vmatprep.subr.mxu0 0.0
        %1926 = vmatpush1.msra.mxu0 0.0
        %1927 = vmatprep.subr.mxu0 0.0
        %1928 = vmatpush1.msra.mxu0 0.0
        %1929 = vmatprep.subr.mxu0 0.0
        %1930 = vmatpush1.msra.mxu0 0.0
        %1931 = vmatprep.subr.mxu0 0.0
        %1932 = vmatpush1.msra.mxu0 0.0
        %1933 = vmatprep.subr.mxu0 0.0
        %1934 = vmatpush1.msra.mxu0 0.0
        %1935 = vmatprep.subr.mxu0 0.0
        %1936 = vmatpush1.msra.mxu0 0.0
        %1937 = vmatprep.subr.mxu0 0.0
        %1938 = vmatpush1.msra.mxu0 0.0
        %1939 = vmatprep.subr.mxu0 0.0
        %1940 = vmatpush1.msra.mxu0 0.0
        %1941 = vmatprep.subr.mxu0 0.0
        %1942 = vmatpush1.msra.mxu0 0.0
        %1943 = vmatprep.subr.mxu0 0.0
        %1944 = vmatpush1.msra.mxu0 0.0
        %1945 = vmatprep.subr.mxu0 0.0
        %1946 = vmatpush1.msra.mxu0 0.0
        %1947 = vmatprep.subr.mxu0 0.0
        %1948 = vmatpush1.msra.mxu0 0.0
        %1949 = vmatprep.subr.mxu0 0.0
        %1950 = vmatpush1.msra.mxu0 0.0
        %1951 = vmatprep.subr.mxu0 0.0
        %1952 = vmatpush1.msra.mxu0 0.0
        %1953 = vmatprep.subr.mxu0 0.0
        %1954 = vmatpush1.msra.mxu0 0.0
        %1955 = vmatprep.subr.mxu0 0.0
        %1956 = vmatpush1.msra.mxu0 0.0
        %1957 = vmatprep.subr.mxu0 0.0
        %1958 = vmatpush1.msra.mxu0 0.0
        %1959 = vmatprep.subr.mxu0 0.0
        %1960 = vmatpush1.msra.mxu0 0.0
        %1961 = vmatprep.subr.mxu0 0.0
        %1962 = vmatpush1.msra.mxu0 0.0
        %1963 = vmatprep.subr.mxu0 0.0
        %1964 = vmatpush1.msra.mxu0 0.0
        %1965 = vmatprep.subr.mxu0 0.0
        %1966 = vmatpush1.msra.mxu0 0.0
        %1967 = vmatprep.subr.mxu0 0.0
        %1968 = vmatpush1.msra.mxu0 0.0
        %1969 = vmatprep.subr.mxu0 0.0
        %1970 = vmatpush1.msra.mxu0 0.0
        %1971 = vmatprep.subr.mxu0 0.0
        %1972 = vmatpush1.msra.mxu0 0.0
        %1973 = vmatprep.subr.mxu0 0.0
        %1974 = vmatpush1.msra.mxu0 0.0
        %1975 = vmatprep.subr.mxu0 0.0
        %1976 = vmatpush1.msra.mxu0 0.0
        %1977 = vmatprep.subr.mxu0 0.0
        %1978 = vmatpush1.msra.mxu0 0.0
        %1979 = vmatprep.subr.mxu0 0.0
        %1980 = vmatpush1.msra.mxu0 0.0
        %1981 = vmatprep.mubr.f32.mxu0 0.0
        %v1982 = vand.u32 %v1734, 4294901760
        %v1983 = vsub.f32 %v1734, %v1982
        %1984 = vmatmul.mubr.f32.gmra.mrb[0].mxu0 %v1983
        %v1985 = vpop.f32.mrb[0].mxu0
        %v1986 = vadd.f32 %v1904, %v1985
        %v1987 = vpop.f32.mrb[0].mxu0
        %1988 = vmatprep.mubr.f32.mxu0 0.0
        %v1989 = vand.u32 %v1737, 4294901760
        %v1990 = vsub.f32 %v1737, %v1989
        %1991 = vmatmul.mubr.f32.gmra.mrb[0].mxu0 %v1990
        %v1992 = vpop.f32.mrb[0].mxu0
        %v1993 = vadd.f32 %v1910, %v1992
        %v1994 = vpop.f32.mrb[0].mxu0
        %1995 = vdwg.mxu0
        %1996 = vmatprep.subr.mxu0 0.0
        %v1997 = vand.u32 %v535, 4294901760
        %1998 = vmatpush1.msra.mxu0 %v1997
        %1999 = vmatprep.subr.mxu0 0.0
        %v2000 = vand.u32 %v536, 4294901760
        %2001 = vmatpush1.msra.mxu0 %v2000
        %2002 = vmatprep.subr.mxu0 0.0
        %2003 = vmatpush1.msra.mxu0 0.0
        %2004 = vmatprep.subr.mxu0 0.0
        %2005 = vmatpush1.msra.mxu0 0.0
        %2006 = vmatprep.subr.mxu0 0.0
        %2007 = vmatpush1.msra.mxu0 0.0
        %2008 = vmatprep.subr.mxu0 0.0
        %2009 = vmatpush1.msra.mxu0 0.0
        %2010 = vmatprep.subr.mxu0 0.0
        %2011 = vmatpush1.msra.mxu0 0.0
        %2012 = vmatprep.subr.mxu0 0.0
        %2013 = vmatpush1.msra.mxu0 0.0
        %2014 = vmatprep.subr.mxu0 0.0
        %2015 = vmatpush1.msra.mxu0 0.0
        %2016 = vmatprep.subr.mxu0 0.0
        %2017 = vmatpush1.msra.mxu0 0.0
        %2018 = vmatprep.subr.mxu0 0.0
        %2019 = vmatpush1.msra.mxu0 0.0
        %2020 = vmatprep.subr.mxu0 0.0
        %2021 = vmatpush1.msra.mxu0 0.0
        %2022 = vmatprep.subr.mxu0 0.0
        %2023 = vmatpush1.msra.mxu0 0.0
        %2024 = vmatprep.subr.mxu0 0.0
        %2025 = vmatpush1.msra.mxu0 0.0
        %2026 = vmatprep.subr.mxu0 0.0
        %2027 = vmatpush1.msra.mxu0 0.0
        %2028 = vmatprep.subr.mxu0 0.0
        %2029 = vmatpush1.msra.mxu0 0.0
        %2030 = vmatprep.subr.mxu0 0.0
        %2031 = vmatpush1.msra.mxu0 0.0
        %2032 = vmatprep.subr.mxu0 0.0
        %2033 = vmatpush1.msra.mxu0 0.0
        %2034 = vmatprep.subr.mxu0 0.0
        %2035 = vmatpush1.msra.mxu0 0.0
        %2036 = vmatprep.subr.mxu0 0.0
        %2037 = vmatpush1.msra.mxu0 0.0
        %2038 = vmatprep.subr.mxu0 0.0
        %2039 = vmatpush1.msra.mxu0 0.0
        %2040 = vmatprep.subr.mxu0 0.0
        %2041 = vmatpush1.msra.mxu0 0.0
        %2042 = vmatprep.subr.mxu0 0.0
        %2043 = vmatpush1.msra.mxu0 0.0
        %2044 = vmatprep.subr.mxu0 0.0
        %2045 = vmatpush1.msra.mxu0 0.0
        %2046 = vmatprep.subr.mxu0 0.0
        %2047 = vmatpush1.msra.mxu0 0.0
        %2048 = vmatprep.subr.mxu0 0.0
        %2049 = vmatpush1.msra.mxu0 0.0
        %2050 = vmatprep.subr.mxu0 0.0
        %2051 = vmatpush1.msra.mxu0 0.0
        %2052 = vmatprep.subr.mxu0 0.0
        %2053 = vmatpush1.msra.mxu0 0.0
        %2054 = vmatprep.subr.mxu0 0.0
        %2055 = vmatpush1.msra.mxu0 0.0
        %2056 = vmatprep.subr.mxu0 0.0
        %2057 = vmatpush1.msra.mxu0 0.0
        %2058 = vmatprep.subr.mxu0 0.0
        %2059 = vmatpush1.msra.mxu0 0.0
        %2060 = vmatprep.subr.mxu0 0.0
        %2061 = vmatpush1.msra.mxu0 0.0
        %2062 = vmatprep.mubr.f32.mxu0 0.0
        %v2063 = vand.u32 %v1734, 4294901760
        %v2064 = vsub.f32 %v1734, %v2063
        %v2065 = vand.u32 %v2064, 4294901760
        %2066 = vmatmul.mubr.f32.gmra.mrb[0].mxu0 %v2065
        %v2067 = vpop.f32.mrb[0].mxu0
        %v2068 = vadd.f32 %v1986, %v2067
        %v2069 = vpop.f32.mrb[0].mxu0
        %2070 = vmatprep.mubr.f32.mxu0 0.0
        %v2071 = vand.u32 %v1737, 4294901760
        %v2072 = vsub.f32 %v1737, %v2071
        %v2073 = vand.u32 %v2072, 4294901760
        %2074 = vmatmul.mubr.f32.gmra.mrb[0].mxu0 %v2073
        %v2075 = vpop.f32.mrb[0].mxu0
        %v2076 = vadd.f32 %v1993, %v2075
        %v2077 = vpop.f32.mrb[0].mxu0
        %2078 = vdwg.mxu0
        %2079 = vmatprep.subr.mxu0 0.0
        %v2080 = vand.u32 %v535, 4294901760
        %v2081 = vsub.f32 %v535, %v2080
        %v2082 = vand.u32 %v2081, 4294901760
        %2083 = vmatpush1.msra.mxu0 %v2082
        %2084 = vmatprep.subr.mxu0 0.0
        %v2085 = vand.u32 %v536, 4294901760
        %v2086 = vsub.f32 %v536, %v2085
        %v2087 = vand.u32 %v2086, 4294901760
        %2088 = vmatpush1.msra.mxu0 %v2087
        %2089 = vmatprep.subr.mxu0 0.0
        %2090 = vmatpush1.msra.mxu0 0.0
        %2091 = vmatprep.subr.mxu0 0.0
        %2092 = vmatpush1.msra.mxu0 0.0
        %2093 = vmatprep.subr.mxu0 0.0
        %2094 = vmatpush1.msra.mxu0 0.0
        %2095 = vmatprep.subr.mxu0 0.0
        %2096 = vmatpush1.msra.mxu0 0.0
        %2097 = vmatprep.subr.mxu0 0.0
        %2098 = vmatpush1.msra.mxu0 0.0
        %2099 = vmatprep.subr.mxu0 0.0
        %2100 = vmatpush1.msra.mxu0 0.0
        %2101 = vmatprep.subr.mxu0 0.0
        %2102 = vmatpush1.msra.mxu0 0.0
        %2103 = vmatprep.subr.mxu0 0.0
        %2104 = vmatpush1.msra.mxu0 0.0
        %2105 = vmatprep.subr.mxu0 0.0
        %2106 = vmatpush1.msra.mxu0 0.0
        %2107 = vmatprep.subr.mxu0 0.0
        %2108 = vmatpush1.msra.mxu0 0.0
        %2109 = vmatprep.subr.mxu0 0.0
        %2110 = vmatpush1.msra.mxu0 0.0
        %2111 = vmatprep.subr.mxu0 0.0
        %2112 = vmatpush1.msra.mxu0 0.0
        %2113 = vmatprep.subr.mxu0 0.0
        %2114 = vmatpush1.msra.mxu0 0.0
        %2115 = vmatprep.subr.mxu0 0.0
        %2116 = vmatpush1.msra.mxu0 0.0
        %2117 = vmatprep.subr.mxu0 0.0
        %2118 = vmatpush1.msra.mxu0 0.0
        %2119 = vmatprep.subr.mxu0 0.0
        %2120 = vmatpush1.msra.mxu0 0.0
        %2121 = vmatprep.subr.mxu0 0.0
        %2122 = vmatpush1.msra.mxu0 0.0
        %2123 = vmatprep.subr.mxu0 0.0
        %2124 = vmatpush1.msra.mxu0 0.0
        %2125 = vmatprep.subr.mxu0 0.0
        %2126 = vmatpush1.msra.mxu0 0.0
        %2127 = vmatprep.subr.mxu0 0.0
        %2128 = vmatpush1.msra.mxu0 0.0
        %2129 = vmatprep.subr.mxu0 0.0
        %2130 = vmatpush1.msra.mxu0 0.0
        %2131 = vmatprep.subr.mxu0 0.0
        %2132 = vmatpush1.msra.mxu0 0.0
        %2133 = vmatprep.subr.mxu0 0.0
        %2134 = vmatpush1.msra.mxu0 0.0
        %2135 = vmatprep.subr.mxu0 0.0
        %2136 = vmatpush1.msra.mxu0 0.0
        %2137 = vmatprep.subr.mxu0 0.0
        %2138 = vmatpush1.msra.mxu0 0.0
        %2139 = vmatprep.subr.mxu0 0.0
        %2140 = vmatpush1.msra.mxu0 0.0
        %2141 = vmatprep.subr.mxu0 0.0
        %2142 = vmatpush1.msra.mxu0 0.0
        %2143 = vmatprep.subr.mxu0 0.0
        %2144 = vmatpush1.msra.mxu0 0.0
        %2145 = vmatprep.subr.mxu0 0.0
        %2146 = vmatpush1.msra.mxu0 0.0
        %2147 = vmatprep.subr.mxu0 0.0
        %2148 = vmatpush1.msra.mxu0 0.0
        %2149 = vmatprep.mubr.f32.mxu0 0.0
        %v2150 = vand.u32 %v1734, 4294901760
        %2151 = vmatmul.mubr.f32.gmra.mrb[0].mxu0 %v2150
        %v2152 = vpop.f32.mrb[0].mxu0
        %v2153 = vadd.f32 %v2068, %v2152
        %v2154 = vpop.f32.mrb[0].mxu0
        %2155 = vmatprep.mubr.f32.mxu0 0.0
        %v2156 = vand.u32 %v1737, 4294901760
        %2157 = vmatmul.mubr.f32.gmra.mrb[0].mxu0 %v2156
        %v2158 = vpop.f32.mrb[0].mxu0
        %v2159 = vadd.f32 %v2076, %v2158
        %v2160 = vpop.f32.mrb[0].mxu0
        %2161 = vdwg.mxu0
        %2162 = vmatprep.subr.mxu0 0.0
        %v2163 = vand.u32 %v535, 4294901760
        %2164 = vmatpush1.msra.mxu0 %v2163
        %2165 = vmatprep.subr.mxu0 0.0
        %v2166 = vand.u32 %v536, 4294901760
        %2167 = vmatpush1.msra.mxu0 %v2166
        %2168 = vmatprep.subr.mxu0 0.0
        %2169 = vmatpush1.msra.mxu0 0.0
        %2170 = vmatprep.subr.mxu0 0.0
        %2171 = vmatpush1.msra.mxu0 0.0
        %2172 = vmatprep.subr.mxu0 0.0
        %2173 = vmatpush1.msra.mxu0 0.0
        %2174 = vmatprep.subr.mxu0 0.0
        %2175 = vmatpush1.msra.mxu0 0.0
        %2176 = vmatprep.subr.mxu0 0.0
        %2177 = vmatpush1.msra.mxu0 0.0
        %2178 = vmatprep.subr.mxu0 0.0
        %2179 = vmatpush1.msra.mxu0 0.0
        %2180 = vmatprep.subr.mxu0 0.0
        %2181 = vmatpush1.msra.mxu0 0.0
        %2182 = vmatprep.subr.mxu0 0.0
        %2183 = vmatpush1.msra.mxu0 0.0
        %2184 = vmatprep.subr.mxu0 0.0
        %2185 = vmatpush1.msra.mxu0 0.0
        %2186 = vmatprep.subr.mxu0 0.0
        %2187 = vmatpush1.msra.mxu0 0.0
        %2188 = vmatprep.subr.mxu0 0.0
        %2189 = vmatpush1.msra.mxu0 0.0
        %2190 = vmatprep.subr.mxu0 0.0
        %2191 = vmatpush1.msra.mxu0 0.0
        %2192 = vmatprep.subr.mxu0 0.0
        %2193 = vmatpush1.msra.mxu0 0.0
        %2194 = vmatprep.subr.mxu0 0.0
        %2195 = vmatpush1.msra.mxu0 0.0
        %2196 = vmatprep.subr.mxu0 0.0
        %2197 = vmatpush1.msra.mxu0 0.0
        %2198 = vmatprep.subr.mxu0 0.0
        %2199 = vmatpush1.msra.mxu0 0.0
        %2200 = vmatprep.subr.mxu0 0.0
        %2201 = vmatpush1.msra.mxu0 0.0
        %2202 = vmatprep.subr.mxu0 0.0
        %2203 = vmatpush1.msra.mxu0 0.0
        %2204 = vmatprep.subr.mxu0 0.0
        %2205 = vmatpush1.msra.mxu0 0.0
        %2206 = vmatprep.subr.mxu0 0.0
        %2207 = vmatpush1.msra.mxu0 0.0
        %2208 = vmatprep.subr.mxu0 0.0
        %2209 = vmatpush1.msra.mxu0 0.0
        %2210 = vmatprep.subr.mxu0 0.0
        %2211 = vmatpush1.msra.mxu0 0.0
        %2212 = vmatprep.subr.mxu0 0.0
        %2213 = vmatpush1.msra.mxu0 0.0
        %2214 = vmatprep.subr.mxu0 0.0
        %2215 = vmatpush1.msra.mxu0 0.0
        %2216 = vmatprep.subr.mxu0 0.0
        %2217 = vmatpush1.msra.mxu0 0.0
        %2218 = vmatprep.subr.mxu0 0.0
        %2219 = vmatpush1.msra.mxu0 0.0
        %2220 = vmatprep.subr.mxu0 0.0
        %2221 = vmatpush1.msra.mxu0 0.0
        %2222 = vmatprep.subr.mxu0 0.0
        %2223 = vmatpush1.msra.mxu0 0.0
        %2224 = vmatprep.subr.mxu0 0.0
        %2225 = vmatpush1.msra.mxu0 0.0
        %2226 = vmatprep.subr.mxu0 0.0
        %2227 = vmatpush1.msra.mxu0 0.0
        %2228 = vmatprep.mubr.f32.mxu0 0.0
        %v2229 = vand.u32 %v1734, 4294901760
        %2230 = vmatmul.mubr.f32.gmra.mrb[0].mxu0 %v2229
        %v2231 = vpop.f32.mrb[0].mxu0
        %v2232 = vadd.f32 %v2153, %v2231
        %v2233 = vpop.f32.mrb[0].mxu0
        %2234 = vmatprep.mubr.f32.mxu0 0.0
        %v2235 = vand.u32 %v1737, 4294901760
        %2236 = vmatmul.mubr.f32.gmra.mrb[0].mxu0 %v2235
        %v2237 = vpop.f32.mrb[0].mxu0
        %v2238 = vadd.f32 %v2159, %v2237
        %v2239 = vpop.f32.mrb[0].mxu0
        %2240 = vdwg.mxu0
        %v2241 = vld [vmem:[#allocation5] sm:$0xff]
        %v2242 = vld [vmem:[#allocation5 + $0x8] sm:$0xff]
        %v2243 = vmul.f32 %v2241, 0.0010283801
        %v2244 = vmul.f32 %v2242, 0.0010283801
        %v2245 = vld [vmem:[#allocation5 + $0x1] sm:$0xff]
        %v2246 = vld [vmem:[#allocation5 + $0x9] sm:$0xff]
        %v2247 = vmul.f32 %v2245, 0.007598758
        %v2248 = vmul.f32 %v2246, 0.007598758
        %v2249 = vadd.f32 %v2243, %v2247
        %v2250 = vadd.f32 %v2244, %v2248
        %v2251 = vld [vmem:[#allocation5 + $0x2] sm:$0xff]
        %v2252 = vld [vmem:[#allocation5 + $0xa] sm:$0xff]
        %v2253 = vmul.f32 %v2251, 0.036000773
        %v2254 = vmul.f32 %v2252, 0.036000773
        %v2255 = vadd.f32 %v2249, %v2253
        %v2256 = vadd.f32 %v2250, %v2254
        %v2257 = vld [vmem:[#allocation5 + $0x3] sm:$0xff]
        %v2258 = vld [vmem:[#allocation5 + $0xb] sm:$0xff]
        %v2259 = vmul.f32 %v2257, 0.10936069
        %v2260 = vmul.f32 %v2258, 0.10936069
        %v2261 = vadd.f32 %v2255, %v2259
        %v2262 = vadd.f32 %v2256, %v2260
        %v2263 = vld [vmem:[#allocation5 + $0x4] sm:$0xff]
        %v2264 = vld [vmem:[#allocation5 + $0xc] sm:$0xff]
        %v2265 = vmul.f32 %v2263, 0.21300554
        %v2266 = vmul.f32 %v2264, 0.21300554
        %v2267 = vadd.f32 %v2261, %v2265
        %v2268 = vadd.f32 %v2262, %v2266
        %v2269 = vld [vmem:[#allocation5 + $0x5] sm:$0xff]
        %v2270 = vld [vmem:[#allocation5 + $0xd] sm:$0xff]
        %v2271 = vmul.f32 %v2269, 0.26601171
        %v2272 = vmul.f32 %v2270, 0.26601171
        %v2273 = vadd.f32 %v2267, %v2271
        %v2274 = vadd.f32 %v2268, %v2272
        %v2275 = vld [vmem:[#allocation5 + $0x6] sm:$0xff]
        %v2276 = vld [vmem:[#allocation5 + $0xe] sm:$0xff]
        %v2277 = vmul.f32 %v2275, 0.21300554
        %v2278 = vmul.f32 %v2276, 0.21300554
        %v2279 = vadd.f32 %v2273, %v2277
        %v2280 = vadd.f32 %v2274, %v2278
        %v2281 = vld [vmem:[#allocation5 + $0x7] sm:$0xff]
        %v2282 = vld [vmem:[#allocation5 + $0xf] sm:$0xff]
        %v2283 = vmul.f32 %v2281, 0.10936069
        %v2284 = vmul.f32 %v2282, 0.10936069
        %v2285 = vadd.f32 %v2279, %v2283
        %v2286 = vadd.f32 %v2280, %v2284
        %v2287 = vld [vmem:[#allocation5 + $0x10] sm:$0xff]
        %v2288 = vmul.f32 %v2242, 0.036000773
        %v2289 = vmul.f32 %v2287, 0.036000773
        %v2290 = vadd.f32 %v2285, %v2288
        %v2291 = vadd.f32 %v2286, %v2289
        %v2292 = vld [vmem:[#allocation5 + $0x11] sm:$0xff]
        %v2293 = vmul.f32 %v2292, 0.007598758
        %v2294 = vadd.f32 %v2290, %v2248
        %v2295 = vadd.f32 %v2291, %v2293
        %v2296 = vld [vmem:[#allocation5 + $0x12] sm:$0xff]
        %v2297 = vmul.f32 %v2252, 0.0010283801
        %v2298 = vmul.f32 %v2296, 0.0010283801
        %v2299 = vadd.f32 %v2294, %v2297
        %v2300 = vadd.f32 %v2295, %v2298
        %v2302 = vsel %vm489, %v2299, 0
        %v2305 = vsel %vm489, %v2300, 0
        %2307 = vmatprep.subr.mxu0 0.0
        %v2308 = vand.u32 %v535, 4294901760
        %2309 = vmatpush1.msra.mxu0 %v2308
        %2310 = vmatprep.subr.mxu0 0.0
        %v2311 = vand.u32 %v536, 4294901760
        %2312 = vmatpush1.msra.mxu0 %v2311
        %2313 = vmatprep.subr.mxu0 0.0
        %2314 = vmatpush1.msra.mxu0 0.0
        %2315 = vmatprep.subr.mxu0 0.0
        %2316 = vmatpush1.msra.mxu0 0.0
        %2317 = vmatprep.subr.mxu0 0.0
        %2318 = vmatpush1.msra.mxu0 0.0
        %2319 = vmatprep.subr.mxu0 0.0
        %2320 = vmatpush1.msra.mxu0 0.0
        %2321 = vmatprep.subr.mxu0 0.0
        %2322 = vmatpush1.msra.mxu0 0.0
        %2323 = vmatprep.subr.mxu0 0.0
        %2324 = vmatpush1.msra.mxu0 0.0
        %2325 = vmatprep.subr.mxu0 0.0
        %2326 = vmatpush1.msra.mxu0 0.0
        %2327 = vmatprep.subr.mxu0 0.0
        %2328 = vmatpush1.msra.mxu0 0.0
        %2329 = vmatprep.subr.mxu0 0.0
        %2330 = vmatpush1.msra.mxu0 0.0
        %2331 = vmatprep.subr.mxu0 0.0
        %2332 = vmatpush1.msra.mxu0 0.0
        %2333 = vmatprep.subr.mxu0 0.0
        %2334 = vmatpush1.msra.mxu0 0.0
        %2335 = vmatprep.subr.mxu0 0.0
        %2336 = vmatpush1.msra.mxu0 0.0
        %2337 = vmatprep.subr.mxu0 0.0
        %2338 = vmatpush1.msra.mxu0 0.0
        %2339 = vmatprep.subr.mxu0 0.0
        %2340 = vmatpush1.msra.mxu0 0.0
        %2341 = vmatprep.subr.mxu0 0.0
        %2342 = vmatpush1.msra.mxu0 0.0
        %2343 = vmatprep.subr.mxu0 0.0
        %2344 = vmatpush1.msra.mxu0 0.0
        %2345 = vmatprep.subr.mxu0 0.0
        %2346 = vmatpush1.msra.mxu0 0.0
        %2347 = vmatprep.subr.mxu0 0.0
        %2348 = vmatpush1.msra.mxu0 0.0
        %2349 = vmatprep.subr.mxu0 0.0
        %2350 = vmatpush1.msra.mxu0 0.0
        %2351 = vmatprep.subr.mxu0 0.0
        %2352 = vmatpush1.msra.mxu0 0.0
        %2353 = vmatprep.subr.mxu0 0.0
        %2354 = vmatpush1.msra.mxu0 0.0
        %2355 = vmatprep.subr.mxu0 0.0
        %2356 = vmatpush1.msra.mxu0 0.0
        %2357 = vmatprep.subr.mxu0 0.0
        %2358 = vmatpush1.msra.mxu0 0.0
        %2359 = vmatprep.subr.mxu0 0.0
        %2360 = vmatpush1.msra.mxu0 0.0
        %2361 = vmatprep.subr.mxu0 0.0
        %2362 = vmatpush1.msra.mxu0 0.0
        %2363 = vmatprep.subr.mxu0 0.0
        %2364 = vmatpush1.msra.mxu0 0.0
        %2365 = vmatprep.subr.mxu0 0.0
        %2366 = vmatpush1.msra.mxu0 0.0
        %2367 = vmatprep.subr.mxu0 0.0
        %2368 = vmatpush1.msra.mxu0 0.0
        %2369 = vmatprep.subr.mxu0 0.0
        %2370 = vmatpush1.msra.mxu0 0.0
        %2371 = vmatprep.subr.mxu0 0.0
        %2372 = vmatpush1.msra.mxu0 0.0
        %2373 = vmatprep.mubr.f32.mxu0 0.0
        %v2374 = vand.u32 %v2302, 4294901760
        %v2375 = vsub.f32 %v2302, %v2374
        %v2376 = vand.u32 %v2375, 4294901760
        %v2377 = vsub.f32 %v2375, %v2376
        %v2378 = vand.u32 %v2377, 4294901760
        %2379 = vmatmul.mubr.f32.gmra.mrb[0].mxu0 %v2378
        %v2380 = vpop.f32.mrb[0].mxu0
        %v2381 = vadd.f32 0.0, %v2380
        %v2382 = vpop.f32.mrb[0].mxu0
        %2383 = vmatprep.mubr.f32.mxu0 0.0
        %v2384 = vand.u32 %v2305, 4294901760
        %v2385 = vsub.f32 %v2305, %v2384
        %v2386 = vand.u32 %v2385, 4294901760
        %v2387 = vsub.f32 %v2385, %v2386
        %v2388 = vand.u32 %v2387, 4294901760
        %2389 = vmatmul.mubr.f32.gmra.mrb[0].mxu0 %v2388
        %v2390 = vpop.f32.mrb[0].mxu0
        %v2391 = vadd.f32 0.0, %v2390
        %v2392 = vpop.f32.mrb[0].mxu0
        %2393 = vdwg.mxu0
        %2394 = vmatprep.subr.mxu0 0.0
        %v2395 = vand.u32 %v535, 4294901760
        %v2396 = vsub.f32 %v535, %v2395
        %v2397 = vand.u32 %v2396, 4294901760
        %v2398 = vsub.f32 %v2396, %v2397
        %v2399 = vand.u32 %v2398, 4294901760
        %2400 = vmatpush1.msra.mxu0 %v2399
        %2401 = vmatprep.subr.mxu0 0.0
        %v2402 = vand.u32 %v536, 4294901760
        %v2403 = vsub.f32 %v536, %v2402
        %v2404 = vand.u32 %v2403, 4294901760
        %v2405 = vsub.f32 %v2403, %v2404
        %v2406 = vand.u32 %v2405, 4294901760
        %2407 = vmatpush1.msra.mxu0 %v2406
        %2408 = vmatprep.subr.mxu0 0.0
        %2409 = vmatpush1.msra.mxu0 0.0
        %2410 = vmatprep.subr.mxu0 0.0
        %2411 = vmatpush1.msra.mxu0 0.0
        %2412 = vmatprep.subr.mxu0 0.0
        %2413 = vmatpush1.msra.mxu0 0.0
        %2414 = vmatprep.subr.mxu0 0.0
        %2415 = vmatpush1.msra.mxu0 0.0
        %2416 = vmatprep.subr.mxu0 0.0
        %2417 = vmatpush1.msra.mxu0 0.0
        %2418 = vmatprep.subr.mxu0 0.0
        %2419 = vmatpush1.msra.mxu0 0.0
        %2420 = vmatprep.subr.mxu0 0.0
        %2421 = vmatpush1.msra.mxu0 0.0
        %2422 = vmatprep.subr.mxu0 0.0
        %2423 = vmatpush1.msra.mxu0 0.0
        %2424 = vmatprep.subr.mxu0 0.0
        %2425 = vmatpush1.msra.mxu0 0.0
        %2426 = vmatprep.subr.mxu0 0.0
        %2427 = vmatpush1.msra.mxu0 0.0
        %2428 = vmatprep.subr.mxu0 0.0
        %2429 = vmatpush1.msra.mxu0 0.0
        %2430 = vmatprep.subr.mxu0 0.0
        %2431 = vmatpush1.msra.mxu0 0.0
        %2432 = vmatprep.subr.mxu0 0.0
        %2433 = vmatpush1.msra.mxu0 0.0
        %2434 = vmatprep.subr.mxu0 0.0
        %2435 = vmatpush1.msra.mxu0 0.0
        %2436 = vmatprep.subr.mxu0 0.0
        %2437 = vmatpush1.msra.mxu0 0.0
        %2438 = vmatprep.subr.mxu0 0.0
        %2439 = vmatpush1.msra.mxu0 0.0
        %2440 = vmatprep.subr.mxu0 0.0
        %2441 = vmatpush1.msra.mxu0 0.0
        %2442 = vmatprep.subr.mxu0 0.0
        %2443 = vmatpush1.msra.mxu0 0.0
        %2444 = vmatprep.subr.mxu0 0.0
        %2445 = vmatpush1.msra.mxu0 0.0
        %2446 = vmatprep.subr.mxu0 0.0
        %2447 = vmatpush1.msra.mxu0 0.0
        %2448 = vmatprep.subr.mxu0 0.0
        %2449 = vmatpush1.msra.mxu0 0.0
        %2450 = vmatprep.subr.mxu0 0.0
        %2451 = vmatpush1.msra.mxu0 0.0
        %2452 = vmatprep.subr.mxu0 0.0
        %2453 = vmatpush1.msra.mxu0 0.0
        %2454 = vmatprep.subr.mxu0 0.0
        %2455 = vmatpush1.msra.mxu0 0.0
        %2456 = vmatprep.subr.mxu0 0.0
        %2457 = vmatpush1.msra.mxu0 0.0
        %2458 = vmatprep.subr.mxu0 0.0
        %2459 = vmatpush1.msra.mxu0 0.0
        %2460 = vmatprep.subr.mxu0 0.0
        %2461 = vmatpush1.msra.mxu0 0.0
        %2462 = vmatprep.subr.mxu0 0.0
        %2463 = vmatpush1.msra.mxu0 0.0
        %2464 = vmatprep.subr.mxu0 0.0
        %2465 = vmatpush1.msra.mxu0 0.0
        %2466 = vmatprep.subr.mxu0 0.0
        %2467 = vmatpush1.msra.mxu0 0.0
        %2468 = vmatprep.mubr.f32.mxu0 0.0
        %v2469 = vand.u32 %v2302, 4294901760
        %2470 = vmatmul.mubr.f32.gmra.mrb[0].mxu0 %v2469
        %v2471 = vpop.f32.mrb[0].mxu0
        %v2472 = vadd.f32 %v2381, %v2471
        %v2473 = vpop.f32.mrb[0].mxu0
        %2474 = vmatprep.mubr.f32.mxu0 0.0
        %v2475 = vand.u32 %v2305, 4294901760
        %2476 = vmatmul.mubr.f32.gmra.mrb[0].mxu0 %v2475
        %v2477 = vpop.f32.mrb[0].mxu0
        %v2478 = vadd.f32 %v2391, %v2477
        %v2479 = vpop.f32.mrb[0].mxu0
        %2480 = vdwg.mxu0
        %2481 = vmatprep.subr.mxu0 0.0
        %v2482 = vand.u32 %v535, 4294901760
        %v2483 = vsub.f32 %v535, %v2482
        %2484 = vmatpush1.msra.mxu0 %v2483
        %2485 = vmatprep.subr.mxu0 0.0
        %v2486 = vand.u32 %v536, 4294901760
        %v2487 = vsub.f32 %v536, %v2486
        %2488 = vmatpush1.msra.mxu0 %v2487
        %2489 = vmatprep.subr.mxu0 0.0
        %2490 = vmatpush1.msra.mxu0 0.0
        %2491 = vmatprep.subr.mxu0 0.0
        %2492 = vmatpush1.msra.mxu0 0.0
        %2493 = vmatprep.subr.mxu0 0.0
        %2494 = vmatpush1.msra.mxu0 0.0
        %2495 = vmatprep.subr.mxu0 0.0
        %2496 = vmatpush1.msra.mxu0 0.0
        %2497 = vmatprep.subr.mxu0 0.0
        %2498 = vmatpush1.msra.mxu0 0.0
        %2499 = vmatprep.subr.mxu0 0.0
        %2500 = vmatpush1.msra.mxu0 0.0
        %2501 = vmatprep.subr.mxu0 0.0
        %2502 = vmatpush1.msra.mxu0 0.0
        %2503 = vmatprep.subr.mxu0 0.0
        %2504 = vmatpush1.msra.mxu0 0.0
        %2505 = vmatprep.subr.mxu0 0.0
        %2506 = vmatpush1.msra.mxu0 0.0
        %2507 = vmatprep.subr.mxu0 0.0
        %2508 = vmatpush1.msra.mxu0 0.0
        %2509 = vmatprep.subr.mxu0 0.0
        %2510 = vmatpush1.msra.mxu0 0.0
        %2511 = vmatprep.subr.mxu0 0.0
        %2512 = vmatpush1.msra.mxu0 0.0
        %2513 = vmatprep.subr.mxu0 0.0
        %2514 = vmatpush1.msra.mxu0 0.0
        %2515 = vmatprep.subr.mxu0 0.0
        %2516 = vmatpush1.msra.mxu0 0.0
        %2517 = vmatprep.subr.mxu0 0.0
        %2518 = vmatpush1.msra.mxu0 0.0
        %2519 = vmatprep.subr.mxu0 0.0
        %2520 = vmatpush1.msra.mxu0 0.0
        %2521 = vmatprep.subr.mxu0 0.0
        %2522 = vmatpush1.msra.mxu0 0.0
        %2523 = vmatprep.subr.mxu0 0.0
        %2524 = vmatpush1.msra.mxu0 0.0
        %2525 = vmatprep.subr.mxu0 0.0
        %2526 = vmatpush1.msra.mxu0 0.0
        %2527 = vmatprep.subr.mxu0 0.0
        %2528 = vmatpush1.msra.mxu0 0.0
        %2529 = vmatprep.subr.mxu0 0.0
        %2530 = vmatpush1.msra.mxu0 0.0
        %2531 = vmatprep.subr.mxu0 0.0
        %2532 = vmatpush1.msra.mxu0 0.0
        %2533 = vmatprep.subr.mxu0 0.0
        %2534 = vmatpush1.msra.mxu0 0.0
        %2535 = vmatprep.subr.mxu0 0.0
        %2536 = vmatpush1.msra.mxu0 0.0
        %2537 = vmatprep.subr.mxu0 0.0
        %2538 = vmatpush1.msra.mxu0 0.0
        %2539 = vmatprep.subr.mxu0 0.0
        %2540 = vmatpush1.msra.mxu0 0.0
        %2541 = vmatprep.subr.mxu0 0.0
        %2542 = vmatpush1.msra.mxu0 0.0
        %2543 = vmatprep.subr.mxu0 0.0
        %2544 = vmatpush1.msra.mxu0 0.0
        %2545 = vmatprep.subr.mxu0 0.0
        %2546 = vmatpush1.msra.mxu0 0.0
        %2547 = vmatprep.subr.mxu0 0.0
        %2548 = vmatpush1.msra.mxu0 0.0
        %2549 = vmatprep.mubr.f32.mxu0 0.0
        %v2550 = vand.u32 %v2302, 4294901760
        %v2551 = vsub.f32 %v2302, %v2550
        %2552 = vmatmul.mubr.f32.gmra.mrb[0].mxu0 %v2551
        %v2553 = vpop.f32.mrb[0].mxu0
        %v2554 = vadd.f32 %v2472, %v2553
        %v2555 = vpop.f32.mrb[0].mxu0
        %2556 = vmatprep.mubr.f32.mxu0 0.0
        %v2557 = vand.u32 %v2305, 4294901760
        %v2558 = vsub.f32 %v2305, %v2557
        %2559 = vmatmul.mubr.f32.gmra.mrb[0].mxu0 %v2558
        %v2560 = vpop.f32.mrb[0].mxu0
        %v2561 = vadd.f32 %v2478, %v2560
        %v2562 = vpop.f32.mrb[0].mxu0
        %2563 = vdwg.mxu0
        %2564 = vmatprep.subr.mxu0 0.0
        %v2565 = vand.u32 %v535, 4294901760
        %2566 = vmatpush1.msra.mxu0 %v2565
        %2567 = vmatprep.subr.mxu0 0.0
        %v2568 = vand.u32 %v536, 4294901760
        %2569 = vmatpush1.msra.mxu0 %v2568
        %2570 = vmatprep.subr.mxu0 0.0
        %2571 = vmatpush1.msra.mxu0 0.0
        %2572 = vmatprep.subr.mxu0 0.0
        %2573 = vmatpush1.msra.mxu0 0.0
        %2574 = vmatprep.subr.mxu0 0.0
        %2575 = vmatpush1.msra.mxu0 0.0
        %2576 = vmatprep.subr.mxu0 0.0
        %2577 = vmatpush1.msra.mxu0 0.0
        %2578 = vmatprep.subr.mxu0 0.0
        %2579 = vmatpush1.msra.mxu0 0.0
        %2580 = vmatprep.subr.mxu0 0.0
        %2581 = vmatpush1.msra.mxu0 0.0
        %2582 = vmatprep.subr.mxu0 0.0
        %2583 = vmatpush1.msra.mxu0 0.0
        %2584 = vmatprep.subr.mxu0 0.0
        %2585 = vmatpush1.msra.mxu0 0.0
        %2586 = vmatprep.subr.mxu0 0.0
        %2587 = vmatpush1.msra.mxu0 0.0
        %2588 = vmatprep.subr.mxu0 0.0
        %2589 = vmatpush1.msra.mxu0 0.0
        %2590 = vmatprep.subr.mxu0 0.0
        %2591 = vmatpush1.msra.mxu0 0.0
        %2592 = vmatprep.subr.mxu0 0.0
        %2593 = vmatpush1.msra.mxu0 0.0
        %2594 = vmatprep.subr.mxu0 0.0
        %2595 = vmatpush1.msra.mxu0 0.0
        %2596 = vmatprep.subr.mxu0 0.0
        %2597 = vmatpush1.msra.mxu0 0.0
        %2598 = vmatprep.subr.mxu0 0.0
        %2599 = vmatpush1.msra.mxu0 0.0
        %2600 = vmatprep.subr.mxu0 0.0
        %2601 = vmatpush1.msra.mxu0 0.0
        %2602 = vmatprep.subr.mxu0 0.0
        %2603 = vmatpush1.msra.mxu0 0.0
        %2604 = vmatprep.subr.mxu0 0.0
        %2605 = vmatpush1.msra.mxu0 0.0
        %2606 = vmatprep.subr.mxu0 0.0
        %2607 = vmatpush1.msra.mxu0 0.0
        %2608 = vmatprep.subr.mxu0 0.0
        %2609 = vmatpush1.msra.mxu0 0.0
        %2610 = vmatprep.subr.mxu0 0.0
        %2611 = vmatpush1.msra.mxu0 0.0
        %2612 = vmatprep.subr.mxu0 0.0
        %2613 = vmatpush1.msra.mxu0 0.0
        %2614 = vmatprep.subr.mxu0 0.0
        %2615 = vmatpush1.msra.mxu0 0.0
        %2616 = vmatprep.subr.mxu0 0.0
        %2617 = vmatpush1.msra.mxu0 0.0
        %2618 = vmatprep.subr.mxu0 0.0
        %2619 = vmatpush1.msra.mxu0 0.0
        %2620 = vmatprep.subr.mxu0 0.0
        %2621 = vmatpush1.msra.mxu0 0.0
        %2622 = vmatprep.subr.mxu0 0.0
        %2623 = vmatpush1.msra.mxu0 0.0
        %2624 = vmatprep.subr.mxu0 0.0
        %2625 = vmatpush1.msra.mxu0 0.0
        %2626 = vmatprep.subr.mxu0 0.0
        %2627 = vmatpush1.msra.mxu0 0.0
        %2628 = vmatprep.subr.mxu0 0.0
        %2629 = vmatpush1.msra.mxu0 0.0
        %2630 = vmatprep.mubr.f32.mxu0 0.0
        %v2631 = vand.u32 %v2302, 4294901760
        %v2632 = vsub.f32 %v2302, %v2631
        %v2633 = vand.u32 %v2632, 4294901760
        %2634 = vmatmul.mubr.f32.gmra.mrb[0].mxu0 %v2633
        %v2635 = vpop.f32.mrb[0].mxu0
        %v2636 = vadd.f32 %v2554, %v2635
        %v2637 = vpop.f32.mrb[0].mxu0
        %2638 = vmatprep.mubr.f32.mxu0 0.0
        %v2639 = vand.u32 %v2305, 4294901760
        %v2640 = vsub.f32 %v2305, %v2639
        %v2641 = vand.u32 %v2640, 4294901760
        %2642 = vmatmul.mubr.f32.gmra.mrb[0].mxu0 %v2641
        %v2643 = vpop.f32.mrb[0].mxu0
        %v2644 = vadd.f32 %v2561, %v2643
        %v2645 = vpop.f32.mrb[0].mxu0
        %2646 = vdwg.mxu0
        %2647 = vmatprep.subr.mxu0 0.0
        %v2648 = vand.u32 %v535, 4294901760
        %v2649 = vsub.f32 %v535, %v2648
        %v2650 = vand.u32 %v2649, 4294901760
        %2651 = vmatpush1.msra.mxu0 %v2650
        %2652 = vmatprep.subr.mxu0 0.0
        %v2653 = vand.u32 %v536, 4294901760
        %v2654 = vsub.f32 %v536, %v2653
        %v2655 = vand.u32 %v2654, 4294901760
        %2656 = vmatpush1.msra.mxu0 %v2655
        %2657 = vmatprep.subr.mxu0 0.0
        %2658 = vmatpush1.msra.mxu0 0.0
        %2659 = vmatprep.subr.mxu0 0.0
        %2660 = vmatpush1.msra.mxu0 0.0
        %2661 = vmatprep.subr.mxu0 0.0
        %2662 = vmatpush1.msra.mxu0 0.0
        %2663 = vmatprep.subr.mxu0 0.0
        %2664 = vmatpush1.msra.mxu0 0.0
        %2665 = vmatprep.subr.mxu0 0.0
        %2666 = vmatpush1.msra.mxu0 0.0
        %2667 = vmatprep.subr.mxu0 0.0
        %2668 = vmatpush1.msra.mxu0 0.0
        %2669 = vmatprep.subr.mxu0 0.0
        %2670 = vmatpush1.msra.mxu0 0.0
        %2671 = vmatprep.subr.mxu0 0.0
        %2672 = vmatpush1.msra.mxu0 0.0
        %2673 = vmatprep.subr.mxu0 0.0
        %2674 = vmatpush1.msra.mxu0 0.0
        %2675 = vmatprep.subr.mxu0 0.0
        %2676 = vmatpush1.msra.mxu0 0.0
        %2677 = vmatprep.subr.mxu0 0.0
        %2678 = vmatpush1.msra.mxu0 0.0
        %2679 = vmatprep.subr.mxu0 0.0
        %2680 = vmatpush1.msra.mxu0 0.0
        %2681 = vmatprep.subr.mxu0 0.0
        %2682 = vmatpush1.msra.mxu0 0.0
        %2683 = vmatprep.subr.mxu0 0.0
        %2684 = vmatpush1.msra.mxu0 0.0
        %2685 = vmatprep.subr.mxu0 0.0
        %2686 = vmatpush1.msra.mxu0 0.0
        %2687 = vmatprep.subr.mxu0 0.0
        %2688 = vmatpush1.msra.mxu0 0.0
        %2689 = vmatprep.subr.mxu0 0.0
        %2690 = vmatpush1.msra.mxu0 0.0
        %2691 = vmatprep.subr.mxu0 0.0
        %2692 = vmatpush1.msra.mxu0 0.0
        %2693 = vmatprep.subr.mxu0 0.0
        %2694 = vmatpush1.msra.mxu0 0.0
        %2695 = vmatprep.subr.mxu0 0.0
        %2696 = vmatpush1.msra.mxu0 0.0
        %2697 = vmatprep.subr.mxu0 0.0
        %2698 = vmatpush1.msra.mxu0 0.0
        %2699 = vmatprep.subr.mxu0 0.0
        %2700 = vmatpush1.msra.mxu0 0.0
        %2701 = vmatprep.subr.mxu0 0.0
        %2702 = vmatpush1.msra.mxu0 0.0
        %2703 = vmatprep.subr.mxu0 0.0
        %2704 = vmatpush1.msra.mxu0 0.0
        %2705 = vmatprep.subr.mxu0 0.0
        %2706 = vmatpush1.msra.mxu0 0.0
        %2707 = vmatprep.subr.mxu0 0.0
        %2708 = vmatpush1.msra.mxu0 0.0
        %2709 = vmatprep.subr.mxu0 0.0
        %2710 = vmatpush1.msra.mxu0 0.0
        %2711 = vmatprep.subr.mxu0 0.0
        %2712 = vmatpush1.msra.mxu0 0.0
        %2713 = vmatprep.subr.mxu0 0.0
        %2714 = vmatpush1.msra.mxu0 0.0
        %2715 = vmatprep.subr.mxu0 0.0
        %2716 = vmatpush1.msra.mxu0 0.0
        %2717 = vmatprep.mubr.f32.mxu0 0.0
        %v2718 = vand.u32 %v2302, 4294901760
        %2719 = vmatmul.mubr.f32.gmra.mrb[0].mxu0 %v2718
        %v2720 = vpop.f32.mrb[0].mxu0
        %v2721 = vadd.f32 %v2636, %v2720
        %v2722 = vpop.f32.mrb[0].mxu0
        %2723 = vmatprep.mubr.f32.mxu0 0.0
        %v2724 = vand.u32 %v2305, 4294901760
        %2725 = vmatmul.mubr.f32.gmra.mrb[0].mxu0 %v2724
        %v2726 = vpop.f32.mrb[0].mxu0
        %v2727 = vadd.f32 %v2644, %v2726
        %v2728 = vpop.f32.mrb[0].mxu0
        %2729 = vdwg.mxu0
        %2730 = vmatprep.subr.mxu0 0.0
        %v2731 = vand.u32 %v535, 4294901760
        %2732 = vmatpush1.msra.mxu0 %v2731
        %2733 = vmatprep.subr.mxu0 0.0
        %v2734 = vand.u32 %v536, 4294901760
        %2735 = vmatpush1.msra.mxu0 %v2734
        %2736 = vmatprep.subr.mxu0 0.0
        %2737 = vmatpush1.msra.mxu0 0.0
        %2738 = vmatprep.subr.mxu0 0.0
        %2739 = vmatpush1.msra.mxu0 0.0
        %2740 = vmatprep.subr.mxu0 0.0
        %2741 = vmatpush1.msra.mxu0 0.0
        %2742 = vmatprep.subr.mxu0 0.0
        %2743 = vmatpush1.msra.mxu0 0.0
        %2744 = vmatprep.subr.mxu0 0.0
        %2745 = vmatpush1.msra.mxu0 0.0
        %2746 = vmatprep.subr.mxu0 0.0
        %2747 = vmatpush1.msra.mxu0 0.0
        %2748 = vmatprep.subr.mxu0 0.0
        %2749 = vmatpush1.msra.mxu0 0.0
        %2750 = vmatprep.subr.mxu0 0.0
        %2751 = vmatpush1.msra.mxu0 0.0
        %2752 = vmatprep.subr.mxu0 0.0
        %2753 = vmatpush1.msra.mxu0 0.0
        %2754 = vmatprep.subr.mxu0 0.0
        %2755 = vmatpush1.msra.mxu0 0.0
        %2756 = vmatprep.subr.mxu0 0.0
        %2757 = vmatpush1.msra.mxu0 0.0
        %2758 = vmatprep.subr.mxu0 0.0
        %2759 = vmatpush1.msra.mxu0 0.0
        %2760 = vmatprep.subr.mxu0 0.0
        %2761 = vmatpush1.msra.mxu0 0.0
        %2762 = vmatprep.subr.mxu0 0.0
        %2763 = vmatpush1.msra.mxu0 0.0
        %2764 = vmatprep.subr.mxu0 0.0
        %2765 = vmatpush1.msra.mxu0 0.0
        %2766 = vmatprep.subr.mxu0 0.0
        %2767 = vmatpush1.msra.mxu0 0.0
        %2768 = vmatprep.subr.mxu0 0.0
        %2769 = vmatpush1.msra.mxu0 0.0
        %2770 = vmatprep.subr.mxu0 0.0
        %2771 = vmatpush1.msra.mxu0 0.0
        %2772 = vmatprep.subr.mxu0 0.0
        %2773 = vmatpush1.msra.mxu0 0.0
        %2774 = vmatprep.subr.mxu0 0.0
        %2775 = vmatpush1.msra.mxu0 0.0
        %2776 = vmatprep.subr.mxu0 0.0
        %2777 = vmatpush1.msra.mxu0 0.0
        %2778 = vmatprep.subr.mxu0 0.0
        %2779 = vmatpush1.msra.mxu0 0.0
        %2780 = vmatprep.subr.mxu0 0.0
        %2781 = vmatpush1.msra.mxu0 0.0
        %2782 = vmatprep.subr.mxu0 0.0
        %2783 = vmatpush1.msra.mxu0 0.0
        %2784 = vmatprep.subr.mxu0 0.0
        %2785 = vmatpush1.msra.mxu0 0.0
        %2786 = vmatprep.subr.mxu0 0.0
        %2787 = vmatpush1.msra.mxu0 0.0
        %2788 = vmatprep.subr.mxu0 0.0
        %2789 = vmatpush1.msra.mxu0 0.0
        %2790 = vmatprep.subr.mxu0 0.0
        %2791 = vmatpush1.msra.mxu0 0.0
        %2792 = vmatprep.subr.mxu0 0.0
        %2793 = vmatpush1.msra.mxu0 0.0
        %2794 = vmatprep.subr.mxu0 0.0
        %2795 = vmatpush1.msra.mxu0 0.0
        %2796 = vmatprep.mubr.f32.mxu0 0.0
        %v2797 = vand.u32 %v2302, 4294901760
        %2798 = vmatmul.mubr.f32.gmra.mrb[0].mxu0 %v2797
        %v2799 = vpop.f32.mrb[0].mxu0
        %v2800 = vadd.f32 %v2721, %v2799
        %v2801 = vpop.f32.mrb[0].mxu0
        %2802 = vmatprep.mubr.f32.mxu0 0.0
        %v2803 = vand.u32 %v2305, 4294901760
        %2804 = vmatmul.mubr.f32.gmra.mrb[0].mxu0 %v2803
        %v2805 = vpop.f32.mrb[0].mxu0
        %v2806 = vadd.f32 %v2727, %v2805
        %v2807 = vpop.f32.mrb[0].mxu0
        %2808 = vdwg.mxu0
        %v2809 = vld [vmem:[#allocation6] sm:$0xff]
        %v2810 = vld [vmem:[#allocation6 + $0x8] sm:$0xff]
        %v2811 = vmul.f32 %v2809, 0.0010283801
        %v2812 = vmul.f32 %v2810, 0.0010283801
        %v2813 = vld [vmem:[#allocation6 + $0x1] sm:$0xff]
        %v2814 = vld [vmem:[#allocation6 + $0x9] sm:$0xff]
        %v2815 = vmul.f32 %v2813, 0.007598758
        %v2816 = vmul.f32 %v2814, 0.007598758
        %v2817 = vadd.f32 %v2811, %v2815
        %v2818 = vadd.f32 %v2812, %v2816
        %v2819 = vld [vmem:[#allocation6 + $0x2] sm:$0xff]
        %v2820 = vld [vmem:[#allocation6 + $0xa] sm:$0xff]
        %v2821 = vmul.f32 %v2819, 0.036000773
        %v2822 = vmul.f32 %v2820, 0.036000773
        %v2823 = vadd.f32 %v2817, %v2821
        %v2824 = vadd.f32 %v2818, %v2822
        %v2825 = vld [vmem:[#allocation6 + $0x3] sm:$0xff]
        %v2826 = vld [vmem:[#allocation6 + $0xb] sm:$0xff]
        %v2827 = vmul.f32 %v2825, 0.10936069
        %v2828 = vmul.f32 %v2826, 0.10936069
        %v2829 = vadd.f32 %v2823, %v2827
        %v2830 = vadd.f32 %v2824, %v2828
        %v2831 = vld [vmem:[#allocation6 + $0x4] sm:$0xff]
        %v2832 = vld [vmem:[#allocation6 + $0xc] sm:$0xff]
        %v2833 = vmul.f32 %v2831, 0.21300554
        %v2834 = vmul.f32 %v2832, 0.21300554
        %v2835 = vadd.f32 %v2829, %v2833
        %v2836 = vadd.f32 %v2830, %v2834
        %v2837 = vld [vmem:[#allocation6 + $0x5] sm:$0xff]
        %v2838 = vld [vmem:[#allocation6 + $0xd] sm:$0xff]
        %v2839 = vmul.f32 %v2837, 0.26601171
        %v2840 = vmul.f32 %v2838, 0.26601171
        %v2841 = vadd.f32 %v2835, %v2839
        %v2842 = vadd.f32 %v2836, %v2840
        %v2843 = vld [vmem:[#allocation6 + $0x6] sm:$0xff]
        %v2844 = vld [vmem:[#allocation6 + $0xe] sm:$0xff]
        %v2845 = vmul.f32 %v2843, 0.21300554
        %v2846 = vmul.f32 %v2844, 0.21300554
        %v2847 = vadd.f32 %v2841, %v2845
        %v2848 = vadd.f32 %v2842, %v2846
        %v2849 = vld [vmem:[#allocation6 + $0x7] sm:$0xff]
        %v2850 = vld [vmem:[#allocation6 + $0xf] sm:$0xff]
        %v2851 = vmul.f32 %v2849, 0.10936069
        %v2852 = vmul.f32 %v2850, 0.10936069
        %v2853 = vadd.f32 %v2847, %v2851
        %v2854 = vadd.f32 %v2848, %v2852
        %v2855 = vld [vmem:[#allocation6 + $0x10] sm:$0xff]
        %v2856 = vmul.f32 %v2810, 0.036000773
        %v2857 = vmul.f32 %v2855, 0.036000773
        %v2858 = vadd.f32 %v2853, %v2856
        %v2859 = vadd.f32 %v2854, %v2857
        %v2860 = vld [vmem:[#allocation6 + $0x11] sm:$0xff]
        %v2861 = vmul.f32 %v2860, 0.007598758
        %v2862 = vadd.f32 %v2858, %v2816
        %v2863 = vadd.f32 %v2859, %v2861
        %v2864 = vld [vmem:[#allocation6 + $0x12] sm:$0xff]
        %v2865 = vmul.f32 %v2820, 0.0010283801
        %v2866 = vmul.f32 %v2864, 0.0010283801
        %v2867 = vadd.f32 %v2862, %v2865
        %v2868 = vadd.f32 %v2863, %v2866
        %v2870 = vsel %vm489, %v2867, 0
        %v2873 = vsel %vm489, %v2868, 0
        %2875 = vmatprep.subr.mxu0 0.0
        %v2876 = vand.u32 %v535, 4294901760
        %2877 = vmatpush1.msra.mxu0 %v2876
        %2878 = vmatprep.subr.mxu0 0.0
        %v2879 = vand.u32 %v536, 4294901760
        %2880 = vmatpush1.msra.mxu0 %v2879
        %2881 = vmatprep.subr.mxu0 0.0
        %2882 = vmatpush1.msra.mxu0 0.0
        %2883 = vmatprep.subr.mxu0 0.0
        %2884 = vmatpush1.msra.mxu0 0.0
        %2885 = vmatprep.subr.mxu0 0.0
        %2886 = vmatpush1.msra.mxu0 0.0
        %2887 = vmatprep.subr.mxu0 0.0
        %2888 = vmatpush1.msra.mxu0 0.0
        %2889 = vmatprep.subr.mxu0 0.0
        %2890 = vmatpush1.msra.mxu0 0.0
        %2891 = vmatprep.subr.mxu0 0.0
        %2892 = vmatpush1.msra.mxu0 0.0
        %2893 = vmatprep.subr.mxu0 0.0
        %2894 = vmatpush1.msra.mxu0 0.0
        %2895 = vmatprep.subr.mxu0 0.0
        %2896 = vmatpush1.msra.mxu0 0.0
        %2897 = vmatprep.subr.mxu0 0.0
        %2898 = vmatpush1.msra.mxu0 0.0
        %2899 = vmatprep.subr.mxu0 0.0
        %2900 = vmatpush1.msra.mxu0 0.0
        %2901 = vmatprep.subr.mxu0 0.0
        %2902 = vmatpush1.msra.mxu0 0.0
        %2903 = vmatprep.subr.mxu0 0.0
        %2904 = vmatpush1.msra.mxu0 0.0
        %2905 = vmatprep.subr.mxu0 0.0
        %2906 = vmatpush1.msra.mxu0 0.0
        %2907 = vmatprep.subr.mxu0 0.0
        %2908 = vmatpush1.msra.mxu0 0.0
        %2909 = vmatprep.subr.mxu0 0.0
        %2910 = vmatpush1.msra.mxu0 0.0
        %2911 = vmatprep.subr.mxu0 0.0
        %2912 = vmatpush1.msra.mxu0 0.0
        %2913 = vmatprep.subr.mxu0 0.0
        %2914 = vmatpush1.msra.mxu0 0.0
        %2915 = vmatprep.subr.mxu0 0.0
        %2916 = vmatpush1.msra.mxu0 0.0
        %2917 = vmatprep.subr.mxu0 0.0
        %2918 = vmatpush1.msra.mxu0 0.0
        %2919 = vmatprep.subr.mxu0 0.0
        %2920 = vmatpush1.msra.mxu0 0.0
        %2921 = vmatprep.subr.mxu0 0.0
        %2922 = vmatpush1.msra.mxu0 0.0
        %2923 = vmatprep.subr.mxu0 0.0
        %2924 = vmatpush1.msra.mxu0 0.0
        %2925 = vmatprep.subr.mxu0 0.0
        %2926 = vmatpush1.msra.mxu0 0.0
        %2927 = vmatprep.subr.mxu0 0.0
        %2928 = vmatpush1.msra.mxu0 0.0
        %2929 = vmatprep.subr.mxu0 0.0
        %2930 = vmatpush1.msra.mxu0 0.0
        %2931 = vmatprep.subr.mxu0 0.0
        %2932 = vmatpush1.msra.mxu0 0.0
        %2933 = vmatprep.subr.mxu0 0.0
        %2934 = vmatpush1.msra.mxu0 0.0
        %2935 = vmatprep.subr.mxu0 0.0
        %2936 = vmatpush1.msra.mxu0 0.0
        %2937 = vmatprep.subr.mxu0 0.0
        %2938 = vmatpush1.msra.mxu0 0.0
        %2939 = vmatprep.subr.mxu0 0.0
        %2940 = vmatpush1.msra.mxu0 0.0
        %2941 = vmatprep.mubr.f32.mxu0 0.0
        %v2942 = vand.u32 %v2870, 4294901760
        %v2943 = vsub.f32 %v2870, %v2942
        %v2944 = vand.u32 %v2943, 4294901760
        %v2945 = vsub.f32 %v2943, %v2944
        %v2946 = vand.u32 %v2945, 4294901760
        %2947 = vmatmul.mubr.f32.gmra.mrb[0].mxu0 %v2946
        %v2948 = vpop.f32.mrb[0].mxu0
        %v2949 = vadd.f32 0.0, %v2948
        %v2950 = vpop.f32.mrb[0].mxu0
        %2951 = vmatprep.mubr.f32.mxu0 0.0
        %v2952 = vand.u32 %v2873, 4294901760
        %v2953 = vsub.f32 %v2873, %v2952
        %v2954 = vand.u32 %v2953, 4294901760
        %v2955 = vsub.f32 %v2953, %v2954
        %v2956 = vand.u32 %v2955, 4294901760
        %2957 = vmatmul.mubr.f32.gmra.mrb[0].mxu0 %v2956
        %v2958 = vpop.f32.mrb[0].mxu0
        %v2959 = vadd.f32 0.0, %v2958
        %v2960 = vpop.f32.mrb[0].mxu0
        %2961 = vdwg.mxu0
        %2962 = vmatprep.subr.mxu0 0.0
        %v2963 = vand.u32 %v535, 4294901760
        %v2964 = vsub.f32 %v535, %v2963
        %v2965 = vand.u32 %v2964, 4294901760
        %v2966 = vsub.f32 %v2964, %v2965
        %v2967 = vand.u32 %v2966, 4294901760
        %2968 = vmatpush1.msra.mxu0 %v2967
        %2969 = vmatprep.subr.mxu0 0.0
        %v2970 = vand.u32 %v536, 4294901760
        %v2971 = vsub.f32 %v536, %v2970
        %v2972 = vand.u32 %v2971, 4294901760
        %v2973 = vsub.f32 %v2971, %v2972
        %v2974 = vand.u32 %v2973, 4294901760
        %2975 = vmatpush1.msra.mxu0 %v2974
        %2976 = vmatprep.subr.mxu0 0.0
        %2977 = vmatpush1.msra.mxu0 0.0
        %2978 = vmatprep.subr.mxu0 0.0
        %2979 = vmatpush1.msra.mxu0 0.0
        %2980 = vmatprep.subr.mxu0 0.0
        %2981 = vmatpush1.msra.mxu0 0.0
        %2982 = vmatprep.subr.mxu0 0.0
        %2983 = vmatpush1.msra.mxu0 0.0
        %2984 = vmatprep.subr.mxu0 0.0
        %2985 = vmatpush1.msra.mxu0 0.0
        %2986 = vmatprep.subr.mxu0 0.0
        %2987 = vmatpush1.msra.mxu0 0.0
        %2988 = vmatprep.subr.mxu0 0.0
        %2989 = vmatpush1.msra.mxu0 0.0
        %2990 = vmatprep.subr.mxu0 0.0
        %2991 = vmatpush1.msra.mxu0 0.0
        %2992 = vmatprep.subr.mxu0 0.0
        %2993 = vmatpush1.msra.mxu0 0.0
        %2994 = vmatprep.subr.mxu0 0.0
        %2995 = vmatpush1.msra.mxu0 0.0
        %2996 = vmatprep.subr.mxu0 0.0
        %2997 = vmatpush1.msra.mxu0 0.0
        %2998 = vmatprep.subr.mxu0 0.0
        %2999 = vmatpush1.msra.mxu0 0.0
        %3000 = vmatprep.subr.mxu0 0.0
        %3001 = vmatpush1.msra.mxu0 0.0
        %3002 = vmatprep.subr.mxu0 0.0
        %3003 = vmatpush1.msra.mxu0 0.0
        %3004 = vmatprep.subr.mxu0 0.0
        %3005 = vmatpush1.msra.mxu0 0.0
        %3006 = vmatprep.subr.mxu0 0.0
        %3007 = vmatpush1.msra.mxu0 0.0
        %3008 = vmatprep.subr.mxu0 0.0
        %3009 = vmatpush1.msra.mxu0 0.0
        %3010 = vmatprep.subr.mxu0 0.0
        %3011 = vmatpush1.msra.mxu0 0.0
        %3012 = vmatprep.subr.mxu0 0.0
        %3013 = vmatpush1.msra.mxu0 0.0
        %3014 = vmatprep.subr.mxu0 0.0
        %3015 = vmatpush1.msra.mxu0 0.0
        %3016 = vmatprep.subr.mxu0 0.0
        %3017 = vmatpush1.msra.mxu0 0.0
        %3018 = vmatprep.subr.mxu0 0.0
        %3019 = vmatpush1.msra.mxu0 0.0
        %3020 = vmatprep.subr.mxu0 0.0
        %3021 = vmatpush1.msra.mxu0 0.0
        %3022 = vmatprep.subr.mxu0 0.0
        %3023 = vmatpush1.msra.mxu0 0.0
        %3024 = vmatprep.subr.mxu0 0.0
        %3025 = vmatpush1.msra.mxu0 0.0
        %3026 = vmatprep.subr.mxu0 0.0
        %3027 = vmatpush1.msra.mxu0 0.0
        %3028 = vmatprep.subr.mxu0 0.0
        %3029 = vmatpush1.msra.mxu0 0.0
        %3030 = vmatprep.subr.mxu0 0.0
        %3031 = vmatpush1.msra.mxu0 0.0
        %3032 = vmatprep.subr.mxu0 0.0
        %3033 = vmatpush1.msra.mxu0 0.0
        %3034 = vmatprep.subr.mxu0 0.0
        %3035 = vmatpush1.msra.mxu0 0.0
        %3036 = vmatprep.mubr.f32.mxu0 0.0
        %v3037 = vand.u32 %v2870, 4294901760
        %3038 = vmatmul.mubr.f32.gmra.mrb[0].mxu0 %v3037
        %v3039 = vpop.f32.mrb[0].mxu0
        %v3040 = vadd.f32 %v2949, %v3039
        %v3041 = vpop.f32.mrb[0].mxu0
        %3042 = vmatprep.mubr.f32.mxu0 0.0
        %v3043 = vand.u32 %v2873, 4294901760
        %3044 = vmatmul.mubr.f32.gmra.mrb[0].mxu0 %v3043
        %v3045 = vpop.f32.mrb[0].mxu0
        %v3046 = vadd.f32 %v2959, %v3045
        %v3047 = vpop.f32.mrb[0].mxu0
        %3048 = vdwg.mxu0
        %3049 = vmatprep.subr.mxu0 0.0
        %v3050 = vand.u32 %v535, 4294901760
        %v3051 = vsub.f32 %v535, %v3050
        %3052 = vmatpush1.msra.mxu0 %v3051
        %3053 = vmatprep.subr.mxu0 0.0
        %v3054 = vand.u32 %v536, 4294901760
        %v3055 = vsub.f32 %v536, %v3054
        %3056 = vmatpush1.msra.mxu0 %v3055
        %3057 = vmatprep.subr.mxu0 0.0
        %3058 = vmatpush1.msra.mxu0 0.0
        %3059 = vmatprep.subr.mxu0 0.0
        %3060 = vmatpush1.msra.mxu0 0.0
        %3061 = vmatprep.subr.mxu0 0.0
        %3062 = vmatpush1.msra.mxu0 0.0
        %3063 = vmatprep.subr.mxu0 0.0
        %3064 = vmatpush1.msra.mxu0 0.0
        %3065 = vmatprep.subr.mxu0 0.0
        %3066 = vmatpush1.msra.mxu0 0.0
        %3067 = vmatprep.subr.mxu0 0.0
        %3068 = vmatpush1.msra.mxu0 0.0
        %3069 = vmatprep.subr.mxu0 0.0
        %3070 = vmatpush1.msra.mxu0 0.0
        %3071 = vmatprep.subr.mxu0 0.0
        %3072 = vmatpush1.msra.mxu0 0.0
        %3073 = vmatprep.subr.mxu0 0.0
        %3074 = vmatpush1.msra.mxu0 0.0
        %3075 = vmatprep.subr.mxu0 0.0
        %3076 = vmatpush1.msra.mxu0 0.0
        %3077 = vmatprep.subr.mxu0 0.0
        %3078 = vmatpush1.msra.mxu0 0.0
        %3079 = vmatprep.subr.mxu0 0.0
        %3080 = vmatpush1.msra.mxu0 0.0
        %3081 = vmatprep.subr.mxu0 0.0
        %3082 = vmatpush1.msra.mxu0 0.0
        %3083 = vmatprep.subr.mxu0 0.0
        %3084 = vmatpush1.msra.mxu0 0.0
        %3085 = vmatprep.subr.mxu0 0.0
        %3086 = vmatpush1.msra.mxu0 0.0
        %3087 = vmatprep.subr.mxu0 0.0
        %3088 = vmatpush1.msra.mxu0 0.0
        %3089 = vmatprep.subr.mxu0 0.0
        %3090 = vmatpush1.msra.mxu0 0.0
        %3091 = vmatprep.subr.mxu0 0.0
        %3092 = vmatpush1.msra.mxu0 0.0
        %3093 = vmatprep.subr.mxu0 0.0
        %3094 = vmatpush1.msra.mxu0 0.0
        %3095 = vmatprep.subr.mxu0 0.0
        %3096 = vmatpush1.msra.mxu0 0.0
        %3097 = vmatprep.subr.mxu0 0.0
        %3098 = vmatpush1.msra.mxu0 0.0
        %3099 = vmatprep.subr.mxu0 0.0
        %3100 = vmatpush1.msra.mxu0 0.0
        %3101 = vmatprep.subr.mxu0 0.0
        %3102 = vmatpush1.msra.mxu0 0.0
        %3103 = vmatprep.subr.mxu0 0.0
        %3104 = vmatpush1.msra.mxu0 0.0
        %3105 = vmatprep.subr.mxu0 0.0
        %3106 = vmatpush1.msra.mxu0 0.0
        %3107 = vmatprep.subr.mxu0 0.0
        %3108 = vmatpush1.msra.mxu0 0.0
        %3109 = vmatprep.subr.mxu0 0.0
        %3110 = vmatpush1.msra.mxu0 0.0
        %3111 = vmatprep.subr.mxu0 0.0
        %3112 = vmatpush1.msra.mxu0 0.0
        %3113 = vmatprep.subr.mxu0 0.0
        %3114 = vmatpush1.msra.mxu0 0.0
        %3115 = vmatprep.subr.mxu0 0.0
        %3116 = vmatpush1.msra.mxu0 0.0
        %3117 = vmatprep.mubr.f32.mxu0 0.0
        %v3118 = vand.u32 %v2870, 4294901760
        %v3119 = vsub.f32 %v2870, %v3118
        %3120 = vmatmul.mubr.f32.gmra.mrb[0].mxu0 %v3119
        %v3121 = vpop.f32.mrb[0].mxu0
        %v3122 = vadd.f32 %v3040, %v3121
        %v3123 = vpop.f32.mrb[0].mxu0
        %3124 = vmatprep.mubr.f32.mxu0 0.0
        %v3125 = vand.u32 %v2873, 4294901760
        %v3126 = vsub.f32 %v2873, %v3125
        %3127 = vmatmul.mubr.f32.gmra.mrb[0].mxu0 %v3126
        %v3128 = vpop.f32.mrb[0].mxu0
        %v3129 = vadd.f32 %v3046, %v3128
        %v3130 = vpop.f32.mrb[0].mxu0
        %3131 = vdwg.mxu0
        %3132 = vmatprep.subr.mxu0 0.0
        %v3133 = vand.u32 %v535, 4294901760
        %3134 = vmatpush1.msra.mxu0 %v3133
        %3135 = vmatprep.subr.mxu0 0.0
        %v3136 = vand.u32 %v536, 4294901760
        %3137 = vmatpush1.msra.mxu0 %v3136
        %3138 = vmatprep.subr.mxu0 0.0
        %3139 = vmatpush1.msra.mxu0 0.0
        %3140 = vmatprep.subr.mxu0 0.0
        %3141 = vmatpush1.msra.mxu0 0.0
        %3142 = vmatprep.subr.mxu0 0.0
        %3143 = vmatpush1.msra.mxu0 0.0
        %3144 = vmatprep.subr.mxu0 0.0
        %3145 = vmatpush1.msra.mxu0 0.0
        %3146 = vmatprep.subr.mxu0 0.0
        %3147 = vmatpush1.msra.mxu0 0.0
        %3148 = vmatprep.subr.mxu0 0.0
        %3149 = vmatpush1.msra.mxu0 0.0
        %3150 = vmatprep.subr.mxu0 0.0
        %3151 = vmatpush1.msra.mxu0 0.0
        %3152 = vmatprep.subr.mxu0 0.0
        %3153 = vmatpush1.msra.mxu0 0.0
        %3154 = vmatprep.subr.mxu0 0.0
        %3155 = vmatpush1.msra.mxu0 0.0
        %3156 = vmatprep.subr.mxu0 0.0
        %3157 = vmatpush1.msra.mxu0 0.0
        %3158 = vmatprep.subr.mxu0 0.0
        %3159 = vmatpush1.msra.mxu0 0.0
        %3160 = vmatprep.subr.mxu0 0.0
        %3161 = vmatpush1.msra.mxu0 0.0
        %3162 = vmatprep.subr.mxu0 0.0
        %3163 = vmatpush1.msra.mxu0 0.0
        %3164 = vmatprep.subr.mxu0 0.0
        %3165 = vmatpush1.msra.mxu0 0.0
        %3166 = vmatprep.subr.mxu0 0.0
        %3167 = vmatpush1.msra.mxu0 0.0
        %3168 = vmatprep.subr.mxu0 0.0
        %3169 = vmatpush1.msra.mxu0 0.0
        %3170 = vmatprep.subr.mxu0 0.0
        %3171 = vmatpush1.msra.mxu0 0.0
        %3172 = vmatprep.subr.mxu0 0.0
        %3173 = vmatpush1.msra.mxu0 0.0
        %3174 = vmatprep.subr.mxu0 0.0
        %3175 = vmatpush1.msra.mxu0 0.0
        %3176 = vmatprep.subr.mxu0 0.0
        %3177 = vmatpush1.msra.mxu0 0.0
        %3178 = vmatprep.subr.mxu0 0.0
        %3179 = vmatpush1.msra.mxu0 0.0
        %3180 = vmatprep.subr.mxu0 0.0
        %3181 = vmatpush1.msra.mxu0 0.0
        %3182 = vmatprep.subr.mxu0 0.0
        %3183 = vmatpush1.msra.mxu0 0.0
        %3184 = vmatprep.subr.mxu0 0.0
        %3185 = vmatpush1.msra.mxu0 0.0
        %3186 = vmatprep.subr.mxu0 0.0
        %3187 = vmatpush1.msra.mxu0 0.0
        %3188 = vmatprep.subr.mxu0 0.0
        %3189 = vmatpush1.msra.mxu0 0.0
        %3190 = vmatprep.subr.mxu0 0.0
        %3191 = vmatpush1.msra.mxu0 0.0
        %3192 = vmatprep.subr.mxu0 0.0
        %3193 = vmatpush1.msra.mxu0 0.0
        %3194 = vmatprep.subr.mxu0 0.0
        %3195 = vmatpush1.msra.mxu0 0.0
        %3196 = vmatprep.subr.mxu0 0.0
        %3197 = vmatpush1.msra.mxu0 0.0
        %3198 = vmatprep.mubr.f32.mxu0 0.0
        %v3199 = vand.u32 %v2870, 4294901760
        %v3200 = vsub.f32 %v2870, %v3199
        %v3201 = vand.u32 %v3200, 4294901760
        %3202 = vmatmul.mubr.f32.gmra.mrb[0].mxu0 %v3201
        %v3203 = vpop.f32.mrb[0].mxu0
        %v3204 = vadd.f32 %v3122, %v3203
        %v3205 = vpop.f32.mrb[0].mxu0
        %3206 = vmatprep.mubr.f32.mxu0 0.0
        %v3207 = vand.u32 %v2873, 4294901760
        %v3208 = vsub.f32 %v2873, %v3207
        %v3209 = vand.u32 %v3208, 4294901760
        %3210 = vmatmul.mubr.f32.gmra.mrb[0].mxu0 %v3209
        %v3211 = vpop.f32.mrb[0].mxu0
        %v3212 = vadd.f32 %v3129, %v3211
        %v3213 = vpop.f32.mrb[0].mxu0
        %3214 = vdwg.mxu0
        %3215 = vmatprep.subr.mxu0 0.0
        %v3216 = vand.u32 %v535, 4294901760
        %v3217 = vsub.f32 %v535, %v3216
        %v3218 = vand.u32 %v3217, 4294901760
        %3219 = vmatpush1.msra.mxu0 %v3218
        %3220 = vmatprep.subr.mxu0 0.0
        %v3221 = vand.u32 %v536, 4294901760
        %v3222 = vsub.f32 %v536, %v3221
        %v3223 = vand.u32 %v3222, 4294901760
        %3224 = vmatpush1.msra.mxu0 %v3223
        %3225 = vmatprep.subr.mxu0 0.0
        %3226 = vmatpush1.msra.mxu0 0.0
        %3227 = vmatprep.subr.mxu0 0.0
        %3228 = vmatpush1.msra.mxu0 0.0
        %3229 = vmatprep.subr.mxu0 0.0
        %3230 = vmatpush1.msra.mxu0 0.0
        %3231 = vmatprep.subr.mxu0 0.0
        %3232 = vmatpush1.msra.mxu0 0.0
        %3233 = vmatprep.subr.mxu0 0.0
        %3234 = vmatpush1.msra.mxu0 0.0
        %3235 = vmatprep.subr.mxu0 0.0
        %3236 = vmatpush1.msra.mxu0 0.0
        %3237 = vmatprep.subr.mxu0 0.0
        %3238 = vmatpush1.msra.mxu0 0.0
        %3239 = vmatprep.subr.mxu0 0.0
        %3240 = vmatpush1.msra.mxu0 0.0
        %3241 = vmatprep.subr.mxu0 0.0
        %3242 = vmatpush1.msra.mxu0 0.0
        %3243 = vmatprep.subr.mxu0 0.0
        %3244 = vmatpush1.msra.mxu0 0.0
        %3245 = vmatprep.subr.mxu0 0.0
        %3246 = vmatpush1.msra.mxu0 0.0
        %3247 = vmatprep.subr.mxu0 0.0
        %3248 = vmatpush1.msra.mxu0 0.0
        %3249 = vmatprep.subr.mxu0 0.0
        %3250 = vmatpush1.msra.mxu0 0.0
        %3251 = vmatprep.subr.mxu0 0.0
        %3252 = vmatpush1.msra.mxu0 0.0
        %3253 = vmatprep.subr.mxu0 0.0
        %3254 = vmatpush1.msra.mxu0 0.0
        %3255 = vmatprep.subr.mxu0 0.0
        %3256 = vmatpush1.msra.mxu0 0.0
        %3257 = vmatprep.subr.mxu0 0.0
        %3258 = vmatpush1.msra.mxu0 0.0
        %3259 = vmatprep.subr.mxu0 0.0
        %3260 = vmatpush1.msra.mxu0 0.0
        %3261 = vmatprep.subr.mxu0 0.0
        %3262 = vmatpush1.msra.mxu0 0.0
        %3263 = vmatprep.subr.mxu0 0.0
        %3264 = vmatpush1.msra.mxu0 0.0
        %3265 = vmatprep.subr.mxu0 0.0
        %3266 = vmatpush1.msra.mxu0 0.0
        %3267 = vmatprep.subr.mxu0 0.0
        %3268 = vmatpush1.msra.mxu0 0.0
        %3269 = vmatprep.subr.mxu0 0.0
        %3270 = vmatpush1.msra.mxu0 0.0
        %3271 = vmatprep.subr.mxu0 0.0
        %3272 = vmatpush1.msra.mxu0 0.0
        %3273 = vmatprep.subr.mxu0 0.0
        %3274 = vmatpush1.msra.mxu0 0.0
        %3275 = vmatprep.subr.mxu0 0.0
        %3276 = vmatpush1.msra.mxu0 0.0
        %3277 = vmatprep.subr.mxu0 0.0
        %3278 = vmatpush1.msra.mxu0 0.0
        %3279 = vmatprep.subr.mxu0 0.0
        %3280 = vmatpush1.msra.mxu0 0.0
        %3281 = vmatprep.subr.mxu0 0.0
        %3282 = vmatpush1.msra.mxu0 0.0
        %3283 = vmatprep.subr.mxu0 0.0
        %3284 = vmatpush1.msra.mxu0 0.0
        %3285 = vmatprep.mubr.f32.mxu0 0.0
        %v3286 = vand.u32 %v2870, 4294901760
        %3287 = vmatmul.mubr.f32.gmra.mrb[0].mxu0 %v3286
        %v3288 = vpop.f32.mrb[0].mxu0
        %v3289 = vadd.f32 %v3204, %v3288
        %v3290 = vpop.f32.mrb[0].mxu0
        %3291 = vmatprep.mubr.f32.mxu0 0.0
        %v3292 = vand.u32 %v2873, 4294901760
        %3293 = vmatmul.mubr.f32.gmra.mrb[0].mxu0 %v3292
        %v3294 = vpop.f32.mrb[0].mxu0
        %v3295 = vadd.f32 %v3212, %v3294
        %v3296 = vpop.f32.mrb[0].mxu0
        %3297 = vdwg.mxu0
        %3298 = vmatprep.subr.mxu0 0.0
        %v3299 = vand.u32 %v535, 4294901760
        %3300 = vmatpush1.msra.mxu0 %v3299
        %3301 = vmatprep.subr.mxu0 0.0
        %v3302 = vand.u32 %v536, 4294901760
        %3303 = vmatpush1.msra.mxu0 %v3302
        %3304 = vmatprep.subr.mxu0 0.0
        %3305 = vmatpush1.msra.mxu0 0.0
        %3306 = vmatprep.subr.mxu0 0.0
        %3307 = vmatpush1.msra.mxu0 0.0
        %3308 = vmatprep.subr.mxu0 0.0
        %3309 = vmatpush1.msra.mxu0 0.0
        %3310 = vmatprep.subr.mxu0 0.0
        %3311 = vmatpush1.msra.mxu0 0.0
        %3312 = vmatprep.subr.mxu0 0.0
        %3313 = vmatpush1.msra.mxu0 0.0
        %3314 = vmatprep.subr.mxu0 0.0
        %3315 = vmatpush1.msra.mxu0 0.0
        %3316 = vmatprep.subr.mxu0 0.0
        %3317 = vmatpush1.msra.mxu0 0.0
        %3318 = vmatprep.subr.mxu0 0.0
        %3319 = vmatpush1.msra.mxu0 0.0
        %3320 = vmatprep.subr.mxu0 0.0
        %3321 = vmatpush1.msra.mxu0 0.0
        %3322 = vmatprep.subr.mxu0 0.0
        %3323 = vmatpush1.msra.mxu0 0.0
        %3324 = vmatprep.subr.mxu0 0.0
        %3325 = vmatpush1.msra.mxu0 0.0
        %3326 = vmatprep.subr.mxu0 0.0
        %3327 = vmatpush1.msra.mxu0 0.0
        %3328 = vmatprep.subr.mxu0 0.0
        %3329 = vmatpush1.msra.mxu0 0.0
        %3330 = vmatprep.subr.mxu0 0.0
        %3331 = vmatpush1.msra.mxu0 0.0
        %3332 = vmatprep.subr.mxu0 0.0
        %3333 = vmatpush1.msra.mxu0 0.0
        %3334 = vmatprep.subr.mxu0 0.0
        %3335 = vmatpush1.msra.mxu0 0.0
        %3336 = vmatprep.subr.mxu0 0.0
        %3337 = vmatpush1.msra.mxu0 0.0
        %3338 = vmatprep.subr.mxu0 0.0
        %3339 = vmatpush1.msra.mxu0 0.0
        %3340 = vmatprep.subr.mxu0 0.0
        %3341 = vmatpush1.msra.mxu0 0.0
        %3342 = vmatprep.subr.mxu0 0.0
        %3343 = vmatpush1.msra.mxu0 0.0
        %3344 = vmatprep.subr.mxu0 0.0
        %3345 = vmatpush1.msra.mxu0 0.0
        %3346 = vmatprep.subr.mxu0 0.0
        %3347 = vmatpush1.msra.mxu0 0.0
        %3348 = vmatprep.subr.mxu0 0.0
        %3349 = vmatpush1.msra.mxu0 0.0
        %3350 = vmatprep.subr.mxu0 0.0
        %3351 = vmatpush1.msra.mxu0 0.0
        %3352 = vmatprep.subr.mxu0 0.0
        %3353 = vmatpush1.msra.mxu0 0.0
        %3354 = vmatprep.subr.mxu0 0.0
        %3355 = vmatpush1.msra.mxu0 0.0
        %3356 = vmatprep.subr.mxu0 0.0
        %3357 = vmatpush1.msra.mxu0 0.0
        %3358 = vmatprep.subr.mxu0 0.0
        %3359 = vmatpush1.msra.mxu0 0.0
        %3360 = vmatprep.subr.mxu0 0.0
        %3361 = vmatpush1.msra.mxu0 0.0
        %3362 = vmatprep.subr.mxu0 0.0
        %3363 = vmatpush1.msra.mxu0 0.0
        %3364 = vmatprep.mubr.f32.mxu0 0.0
        %v3365 = vand.u32 %v2870, 4294901760
        %3366 = vmatmul.mubr.f32.gmra.mrb[0].mxu0 %v3365
        %v3367 = vpop.f32.mrb[0].mxu0
        %v3368 = vadd.f32 %v3289, %v3367
        %v3369 = vpop.f32.mrb[0].mxu0
        %3370 = vmatprep.mubr.f32.mxu0 0.0
        %v3371 = vand.u32 %v2873, 4294901760
        %3372 = vmatmul.mubr.f32.gmra.mrb[0].mxu0 %v3371
        %v3373 = vpop.f32.mrb[0].mxu0
        %v3374 = vadd.f32 %v3295, %v3373
        %v3375 = vpop.f32.mrb[0].mxu0
        %3376 = vdwg.mxu0
        %v3377 = vmul.f32 %v1096, %v1096
        %v3378 = vmul.f32 %v1102, %v1102
        %v3379 = vmul.f32 %v1664, %v1664
        %v3380 = vmul.f32 %v1670, %v1670
        %v3381 = vmul.f32 %v1096, %v1664
        %v3382 = vmul.f32 %v1102, %v1670
        %v3383 = vsub.f32 %v2232, %v3377
        %v3384 = vsub.f32 %v2238, %v3378
        %v3385 = vsub.f32 %v2800, %v3379
        %v3386 = vsub.f32 %v2806, %v3380
        %v3387 = vsub.f32 %v3368, %v3381
        %v3388 = vsub.f32 %v3374, %v3382
        %v3389 = vmul.f32 %v3381, 2.0
        %v3390 = vmul.f32 %v3382, 2.0
        %v3391 = vadd.f32 %v3389, 0.0001
        %v3392 = vadd.f32 %v3390, 0.0001
        %v3393 = vmul.f32 %v3387, 2.0
        %v3394 = vmul.f32 %v3388, 2.0
        %v3395 = vadd.f32 %v3393, 0.0009
        %v3396 = vadd.f32 %v3394, 0.0009
        %v3397 = vmul.f32 %v3391, %v3395
        %v3398 = vmul.f32 %v3392, %v3396
        %v3399 = vadd.f32 %v3377, %v3379
        %v3400 = vadd.f32 %v3378, %v3380
        %v3401 = vadd.f32 %v3399, 0.0001
        %v3402 = vadd.f32 %v3400, 0.0001
        %v3403 = vadd.f32 %v3383, %v3385
        %v3404 = vadd.f32 %v3384, %v3386
        %v3405 = vadd.f32 %v3403, 0.0009
        %v3406 = vadd.f32 %v3404, 0.0009
        %v3407 = vmul.f32 %v3401, %v3405
        %v3408 = vmul.f32 %v3402, %v3406
        %v3409 = vrcp.pop %v3407
        %v3410 = vrcp.pop %v3408
        %v3411 = vmul.f32 %v3397, %v3409
        %v3412 = vmul.f32 %v3398, %v3410
        %v3413 = vld [vmem:[%s482] sm:$0xff]
        %v3414 = vld [vmem:[%s482 + $0x8] sm:$0xff]
        %v3415 = vmul.f32 %v3411, %v3413
        %v3416 = vmul.f32 %v3412, %v3414
        %v3417 = vsel %vm489, %v3415, 0.0
        %v3418 = vsel %vm489, %v3416, 0.0
        %v3419 = vadd.f32 %v3417, %v3418
        %3420 = vadd.xlane.f32.xlu0 %v3419
        %v3421 = vpop.xlane.xlu0 %3420
        %v3422 = vrot.slane %v3421, 4
        %v3423 = vadd.f32 %v3421, %v3422
        %v3424 = vrot.slane %v3423, 2
        %v3425 = vadd.f32 %v3423, %v3424
        %v3426 = vrot.slane %v3425, 1
        %v3427 = vadd.f32 %v3425, %v3426
        %s3428 = vtos %v3427
        %v3429 = vstv %s3428
        %3430 = vst [vmem:[%s419] sm:$0x1] %v3429
        %s3431 = sand.u32 %s220, 1
        %s3432 = scalar_lea.sflag [#allocation8], %s3431
        %s3433 = sand.u32 %s220, 1
        %s3434 = scalar_lea.vmem [#allocation7], %s3433
        // Predicated region
        $region45: #{tpu_custom_call.1} parent=43 // pred_check
          %p3435 = pneg %p230
        $region46: #{tpu_custom_call.1} parent=43 // pred_check_branch
          %3437 = sbr.rel (%p3435) target = $region48
        $region47: #{tpu_custom_call.1} parent=43 // pred_region
          %s3439 = ssub.s32 16, 16
          %3440 = vsyncadd %s3432, %s3439
          %s3441 = sadd.s32 %s26, %s27
          %s3442 = smul.addr %s25, 3
          %s3443 = sadd.s32 %s3441, %s3442
          %s3444 = smul.addr %s3443, 16
          %s3445 = scalar_lea.hbm %s6, %s3444
          %s3447 = sshll.u32 %s3434, 4
          %s3448 = int_to_ptr.vmem [resolvable:$true] %s3447
          %3450 = dma.vmem_to_hbm [thread:$0]  %s3448, 16, %s3445, %s3432
        $region48: #{tpu_custom_call.1} parent=43 // pred_fallthru
          _
      $region44: #{tpu_custom_call.1} parent=5 // pred_fallthru
        _
      %p3451 = scmp.le.s32.totalorder 2, %s15
      // Predicated region
      $region49: #{tpu_custom_call.1} parent=5 // pred_check
        %p3452 = pneg %p3451
      $region50: #{tpu_custom_call.1} parent=5 // pred_check_branch
        %3454 = sbr.rel (%p3452) target = $region52
      $region51: #{tpu_custom_call.1} parent=5 // pred_region
        %s3455 = ssub.s32 %s15, 2
        // Predicated region
        $region53: #{tpu_custom_call.1} parent=51 // pred_check
          %p3456 = pneg %p236
        $region54: #{tpu_custom_call.1} parent=51 // pred_check_branch
          %3458 = sbr.rel (%p3456) target = $region56
        $region55: #{tpu_custom_call.1} parent=51 // pred_region
          %s3459 = sand.u32 %s221, 1
          %s3460 = scalar_lea.sflag [#allocation8], %s3459
          %s3461 = sand.u32 %s221, 1
          %s3462 = scalar_lea.vmem [#allocation7], %s3461
          %3463 = dma.done %s3460, 16
        $region56: #{tpu_custom_call.1} parent=51 // pred_fallthru
          _
      $region52: #{tpu_custom_call.1} parent=5 // pred_fallthru
        _
    $region6: #{tpu_custom_call.1} parent=1 // loop_footer
      %s19 = sadd.s32 1, %s15
    $region7: #{tpu_custom_call.1} parent=1 // loop_footer_branch
      %14 = sbr.rel target = $region3
    $region8: #{tpu_custom_call.1} parent=1 // loop_exit
      _
    %3464 = vsyncpa [#allocation8], 1
    %s3465 = scalar_lea.sflag [#allocation8], 1
    %3466 = vsyncpa %s3465, 1

</llo_original>
